<compile_context>
chip_gen: v6e
topology: v6e:2x2x1
jax: 0.10.0
libtpu: 0.0.40
codegen_flags: <defaults>
</compile_context>

<pallas_src>
import functools

import jax
import jax.numpy as jnp
from jax.experimental import pallas as pl
from jax.experimental.pallas import tpu as pltpu

FSIZE0 = 3
FSIZE1 = 2
BN_EPS = 1e-4                 # scn.BatchNormalization default eps
MXU_DTYPE = jnp.bfloat16      # MXU operand dtype; accumulation is always f32


# ----------------------------- tiling helpers -----------------------------

def _row_tile(m, target=512):
    """Largest row tile <= target that divides m (multiple of 8 when tiling)."""
    if m <= target:
        return m
    for t in (1024, 512, 256, 128, 64, 32, 16, 8):
        if t <= target and m % t == 0:
            return t
    return m


def _k_tile(k, target=512):
    """K tile: lane-aligned (multiple of 128) when tiling; otherwise keep K whole."""
    if k > target and k % 128 == 0:
        for t in (512, 384, 256, 128):
            if k % t == 0:
                return t
    return k


# ----------------------------- fused matmul kernel -----------------------------

def _make_matmul_kernel(nk, has_bias, has_residual, relu, emit_stats):
    def kernel(a_ref, w_ref, *rest):
        i = 0
        bias_ref = res_ref = s_ref = None
        if has_bias:
            bias_ref = rest[i]; i += 1
        if has_residual:
            res_ref = rest[i]; i += 1
        o_ref = rest[i]; i += 1
        if emit_stats:
            s_ref = rest[i]; i += 1
        acc_ref = rest[i]

        k = pl.program_id(1)

        @pl.when(k == 0)
        def _():
            acc_ref[...] = jnp.zeros_like(acc_ref)

        acc_ref[...] += jnp.dot(a_ref[...], w_ref[...],
                                preferred_element_type=jnp.float32)

        @pl.when(k == nk - 1)
        def _():
            y = acc_ref[...]
            if has_bias:
                y = y + bias_ref[...]
            if has_residual:
                y = y + res_ref[...]
            if relu:
                y = jnp.maximum(y, 0.0)
            o_ref[...] = y
            if emit_stats:
                su = jnp.sum(y, axis=0, keepdims=True)
                sq = jnp.sum(y * y, axis=0, keepdims=True)
                s_ref[...] = jnp.concatenate([su, sq], axis=0)[None]

    return kernel


def fused_matmul(a, w, bias=None, residual=None, relu=False, emit_stats=False,
                 tm_target=512):
    """Tiled [M,K] @ [K,C] on the MXU (bf16 in, f32 accumulate) with a fused
    epilogue: optional per-channel bias, residual add, ReLU and per-row-tile
    BatchNorm partial statistics ([num_tiles, 2, C] of sum / sum-of-squares)."""
    M, K = a.shape
    K2, C = w.shape
    assert K == K2
    tm = _row_tile(M, tm_target)
    tk = _k_tile(K)
    nm, nk = M // tm, K // tk

    args = [a.astype(MXU_DTYPE), w.astype(MXU_DTYPE)]
    in_specs = [pl.BlockSpec((tm, tk), lambda m, k: (m, k)),
                pl.BlockSpec((tk, C), lambda m, k: (k, 0))]
    if bias is not None:
        args.append(bias.reshape(1, C).astype(jnp.float32))
        in_specs.append(pl.BlockSpec((1, C), lambda m, k: (0, 0)))
    if residual is not None:
        args.append(residual.astype(jnp.float32))
        in_specs.append(pl.BlockSpec((tm, C), lambda m, k: (m, 0)))

    out_shape = [jax.ShapeDtypeStruct((M, C), jnp.float32)]
    out_specs = [pl.BlockSpec((tm, C), lambda m, k: (m, 0))]
    if emit_stats:
        out_shape.append(jax.ShapeDtypeStruct((nm, 2, C), jnp.float32))
        out_specs.append(pl.BlockSpec((1, 2, C), lambda m, k: (m, 0, 0)))

    outs = pl.pallas_call(
        _make_matmul_kernel(nk, bias is not None, residual is not None,
                            relu, emit_stats),
        grid=(nm, nk),
        in_specs=in_specs,
        out_specs=out_specs,
        out_shape=out_shape,
        scratch_shapes=[pltpu.VMEM((tm, C), jnp.float32)],
        compiler_params=pltpu.CompilerParams(
            dimension_semantics=("parallel", "arbitrary")),
    )(*args)
    if emit_stats:
        return outs[0], outs[1]
    return outs[0]


# ----------------------------- tiled affine (BN apply) kernel -----------------------------

def _make_affine_kernel(has_residual, relu, emit_stats):
    def kernel(x_ref, a_ref, c_ref, *rest):
        i = 0
        res_ref = s_ref = None
        if has_residual:
            res_ref = rest[i]; i += 1
        o_ref = rest[i]; i += 1
        if emit_stats:
            s_ref = rest[i]

        y = x_ref[...] * a_ref[...] + c_ref[...]
        if has_residual:
            y = y + res_ref[...]
        if relu:
            y = jnp.maximum(y, 0.0)
        o_ref[...] = y
        if emit_stats:
            su = jnp.sum(y, axis=0, keepdims=True)
            sq = jnp.sum(y * y, axis=0, keepdims=True)
            s_ref[...] = jnp.concatenate([su, sq], axis=0)[None]

    return kernel


def affine_apply(x, a, c, residual=None, relu=False, emit_stats=False,
                 tm_target=1024):
    """Row-tiled y = a*x + c (+ residual) (+ ReLU) in f32 on the VPU, optionally
    emitting per-tile BatchNorm partial statistics of the result."""
    M, C = x.shape
    tm = _row_tile(M, tm_target)
    nm = M // tm

    args = [x.astype(jnp.float32),
            a.reshape(1, C).astype(jnp.float32),
            c.reshape(1, C).astype(jnp.float32)]
    in_specs = [pl.BlockSpec((tm, C), lambda m: (m, 0)),
                pl.BlockSpec((1, C), lambda m: (0, 0)),
                pl.BlockSpec((1, C), lambda m: (0, 0))]
    if residual is not None:
        args.append(residual.astype(jnp.float32))
        in_specs.append(pl.BlockSpec((tm, C), lambda m: (m, 0)))

    out_shape = [jax.ShapeDtypeStruct((M, C), jnp.float32)]
    out_specs = [pl.BlockSpec((tm, C), lambda m: (m, 0))]
    if emit_stats:
        out_shape.append(jax.ShapeDtypeStruct((nm, 2, C), jnp.float32))
        out_specs.append(pl.BlockSpec((1, 2, C), lambda m: (m, 0, 0)))

    outs = pl.pallas_call(
        _make_affine_kernel(residual is not None, relu, emit_stats),
        grid=(nm,),
        in_specs=in_specs,
        out_specs=out_specs,
        out_shape=out_shape,
        compiler_params=pltpu.CompilerParams(dimension_semantics=("parallel",)),
    )(*args)
    if emit_stats:
        return outs[0], outs[1]
    return outs[0]


# ----------------------------- flash attention kernel -----------------------------

def _flash_attn_kernel(q_ref, k_ref, v_ref, o_ref, m_sc, l_sc, acc_sc):
    kv = pl.program_id(1)

    @pl.when(kv == 0)
    def _():
        m_sc[...] = jnp.full_like(m_sc, -jnp.inf)
        l_sc[...] = jnp.zeros_like(l_sc)
        acc_sc[...] = jnp.zeros_like(acc_sc)

    s = jnp.dot(q_ref[...], k_ref[...].T, preferred_element_type=jnp.float32)
    m_new = jnp.maximum(m_sc[...], jnp.max(s, axis=-1, keepdims=True))
    alpha = jnp.exp(m_sc[...] - m_new)
    p = jnp.exp(s - m_new)
    l_sc[...] = alpha * l_sc[...] + jnp.sum(p, axis=-1, keepdims=True)
    acc_sc[...] = alpha * acc_sc[...] + jnp.dot(
        p.astype(v_ref.dtype), v_ref[...], preferred_element_type=jnp.float32)
    m_sc[...] = m_new

    @pl.when(kv == pl.num_programs(1) - 1)
    def _():
        o_ref[...] = acc_sc[...] * pl.reciprocal(l_sc[...], approx=True)


def flash_attention(q, k, v, tq_target=512, tkv_target=512):
    """Global softmax(Q K^T) V (no scaling, matching the torch code), flash-tiled
    with online softmax so the full score matrix is never materialized."""
    Nq, C = q.shape
    Nk, _ = k.shape
    tq = _row_tile(Nq, tq_target)
    tkv = _row_tile(Nk, tkv_target)
    return pl.pallas_call(
        _flash_attn_kernel,
        grid=(Nq // tq, Nk // tkv),
        in_specs=[pl.BlockSpec((tq, C), lambda i, j: (i, 0)),
                  pl.BlockSpec((tkv, C), lambda i, j: (j, 0)),
                  pl.BlockSpec((tkv, C), lambda i, j: (j, 0))],
        out_specs=pl.BlockSpec((tq, C), lambda i, j: (i, 0)),
        out_shape=jax.ShapeDtypeStruct((Nq, C), jnp.float32),
        scratch_shapes=[pltpu.VMEM((tq, 1), jnp.float32),
                        pltpu.VMEM((tq, 1), jnp.float32),
                        pltpu.VMEM((tq, C), jnp.float32)],
        compiler_params=pltpu.CompilerParams(
            dimension_semantics=("parallel", "arbitrary")),
    )(q.astype(MXU_DTYPE), k.astype(MXU_DTYPE), v.astype(MXU_DTYPE))


# ----------------------------- BN stats finalize -----------------------------

def _bn_affine_from_stats(stats, n_rows, gamma, beta, eps=BN_EPS):
    """Training-mode BatchNorm (biased batch stats) folded to BN(x) = a*x + c."""
    s = jnp.sum(stats, axis=0)                    # [2, C]
    mean = s[0] / n_rows
    var = jnp.maximum(s[1] / n_rows - mean * mean, 0.0)
    a = gamma * jax.lax.rsqrt(var + eps)
    c = beta - mean * a
    return a, c


# ----------------------------- JAX glue (reshapes / im2col) -----------------------------

def _to_grid(feat, B, D, H, W):
    return feat.reshape(B, D, H, W, feat.shape[-1])


def _im2col_3x3x3(grid):
    """Zero-padded 3x3x3 patch extraction -> [N, 27*C] in bf16."""
    B, D, H, W, C = grid.shape
    g = grid.astype(MXU_DTYPE)
    p = jnp.pad(g, ((0, 0), (1, 1), (1, 1), (1, 1), (0, 0)))
    cols = [p[:, dz:dz + D, dy:dy + H, dx:dx + W, :]
            for dz in range(3) for dy in range(3) for dx in range(3)]
    return jnp.concatenate(cols, axis=-1).reshape(B * D * H * W, 27 * C)


def _blocks_2x2x2(grid):
    """Non-overlapping 2x2x2 blocks -> [N/8, 8*C] (scn.Convolution filter=2 stride=2)."""
    B, D, H, W, C = grid.shape
    g = grid.astype(MXU_DTYPE).reshape(B, D // 2, 2, H // 2, 2, W // 2, 2, C)
    g = g.transpose(0, 1, 3, 5, 2, 4, 6, 7)
    return g.reshape(B * (D // 2) * (H // 2) * (W // 2), 8 * C)


# ----------------------------- Parameters -----------------------------

def init_params(key, nf_in, nf):
    ks = jax.random.split(key, 20)

    def w(k, shape, scale=0.1):
        return scale * jax.random.normal(k, shape, jnp.float32)

    def bn(k):
        kg, kb = jax.random.split(k)
        return (1.0 + 0.05 * jax.random.normal(kg, (nf,), jnp.float32),
                0.05 * jax.random.normal(kb, (nf,), jnp.float32))

    p = {}
    p["p1_w"] = w(ks[0], (27 * nf_in, nf))          # SubmanifoldConvolution 3x3x3, no bias
    p["q_w"] = w(ks[1], (nf, nf))                   # 1x1x1 convs
    p["k_w"] = w(ks[2], (nf, nf))
    p["v_w"] = w(ks[3], (nf, nf))
    p["kv_w"] = w(ks[4], (8 * nf, nf))              # Convolution filter=2 stride=2, no bias
    p["trans_w"] = w(ks[5], (27 * nf, nf))          # trans_conv 3x3x3
    p["res1_w"] = w(ks[6], (27 * nf, nf))           # res branch conv #1
    p["res2_w"] = w(ks[7], (27 * nf, nf))           # res branch conv #2
    p["kv_bn_g"], p["kv_bn_b"] = bn(ks[8])
    p["after_g"], p["after_b"] = bn(ks[9])
    p["res_bn1_g"], p["res_bn1_b"] = bn(ks[10])
    p["res_bn2_g"], p["res_bn2_b"] = bn(ks[11])
    p["res_bn3_g"], p["res_bn3_b"] = bn(ks[12])
    return p


# ----------------------------- Forward -----------------------------

def self_transformer_layer(params, x_grid):
    B, D, H, W, _ = x_grid.shape
    N = B * D * H * W
    nf = params["q_w"].shape[0]

    # p0 + p1 (+ q fused): sparsify (identity on a dense grid); the 3x3x3
    # submanifold conv and the 1x1x1 q-conv fold into ONE matmul with a
    # [27*nf_in, 2*nf] weight (x_q = im2col @ (p1_w @ q_w)) -> 2x lane width,
    # one launch instead of two.
    w_p1q = jnp.concatenate([params["p1_w"],
                             params["p1_w"] @ params["q_w"]], axis=1)
    feat_q = fused_matmul(_im2col_3x3x3(x_grid), w_p1q)
    x_feat, x_q = feat_q[:, :nf], feat_q[:, nf:]

    # kv downsample: 2x2x2 stride-2 conv; BN batch stats accumulated per row
    # tile inside the matmul epilogue (no extra pass over the activation).
    kv_raw, kv_stats = fused_matmul(
        _blocks_2x2x2(_to_grid(x_feat, B, D, H, W)), params["kv_w"],
        emit_stats=True)
    n_kv = kv_raw.shape[0]
    a_kv, c_kv = _bn_affine_from_stats(kv_stats, n_kv,
                                       params["kv_bn_g"], params["kv_bn_b"])

    # k / v 1x1 convs fused into one [nf, 2*nf] matmul; the kv BatchNorm affine
    # folds exactly into its weight + bias: (a*kv + c) @ W = kv @ (a[:,None]*W) + c@W.
    w_kv = jnp.concatenate([params["k_w"], params["v_w"]], axis=1)
    kv_proj = fused_matmul(kv_raw, a_kv[:, None] * w_kv, bias=c_kv @ w_kv)
    x_k, x_v = kv_proj[:, :nf], kv_proj[:, nf:]

    # Attention: the torch loop slices Q per batch element but re-assigns dk/dv
    # to the FULL key/value matrices, and row-wise softmax is independent per
    # query row, so one global flash-tiled softmax(QK^T)V is equivalent.
    x_r = flash_attention(x_q, x_k, x_v)

    # trans_conv on re-sparsified x_r (+ BN stats for after_norm).
    trans_raw, t_stats = fused_matmul(
        _im2col_3x3x3(_to_grid(x_r, B, D, H, W)), params["trans_w"],
        emit_stats=True)
    a_t, c_t = _bn_affine_from_stats(t_stats, N,
                                     params["after_g"], params["after_b"])

    # x.features += after_norm(trans_conv(x_r)); also emit stats of the sum for
    # the first BNReLU of the residual branch.
    new_feat, nf_stats = affine_apply(trans_raw, a_t, c_t, residual=x_feat,
                                      emit_stats=True)
    a1, c1 = _bn_affine_from_stats(nf_stats, N,
                                   params["res_bn1_g"], params["res_bn1_b"])

    # res branch: BNReLU -> conv3 -> BNReLU -> conv3.  The BNReLU applies are
    # plain elementwise affine+relu in XLA so they fuse into the pad/slice/concat
    # (im2col) producer feeding each conv matmul — no extra HBM pass.
    h1 = jnp.maximum(new_feat * a1 + c1, 0.0)
    h1_raw, h1_stats = fused_matmul(
        _im2col_3x3x3(_to_grid(h1, B, D, H, W)), params["res1_w"],
        emit_stats=True)
    a2, c2 = _bn_affine_from_stats(h1_stats, N,
                                   params["res_bn2_g"], params["res_bn2_b"])

    h2 = jnp.maximum(h1_raw * a2 + c2, 0.0)
    # Second conv with the AddTable residual (new_feat) fused into its epilogue;
    # stats of the SUM feed the final BNReLU.
    summed, sum_stats = fused_matmul(
        _im2col_3x3x3(_to_grid(h2, B, D, H, W)), params["res2_w"],
        residual=new_feat, emit_stats=True)
    a3, c3 = _bn_affine_from_stats(sum_stats, N,
                                   params["res_bn3_g"], params["res_bn3_b"])

    # Final BNReLU; OutputLayer just returns the feature matrix [N, nf].
    return affine_apply(summed, a3, c3, relu=True)


# ----------------------------- Main -----------------------------

if __name__ == "__main__":
    B, D, H, W = 2, 4, 4, 4          # max_data_size = 4 (even -> 2x downsample works)
    nf_in, nf = 4, 16

    key = jax.random.PRNGKey(0)
    kx, kp = jax.random.split(key)
    x = jax.random.normal(kx, (B, D, H, W, nf_in), jnp.float32)
    params = init_params(kp, nf_in, nf)

    fwd = jax.jit(functools.partial(self_transformer_layer, params))
    out = fwd(x)
    out = jax.block_until_ready(out)

    assert out.shape == (B * D * H * W, nf)
    assert jnp.all(jnp.isfinite(out))
    print("KERNEL_OK")
</pallas_src>

<mosaic_0001>
module attributes {stable_mosaic.version = 11 : i64} {
  func.func @kernel(%arg0: i32, %arg1: i32, %arg2: memref<128x108xbf16, #tpu.memory_space<vmem>>, %arg3: memref<108x32xbf16, #tpu.memory_space<vmem>>, %arg4: memref<128x32xf32, #tpu.memory_space<vmem>>, %arg5: memref<128x32xf32, #tpu.memory_space<vmem>>) attributes {dimension_semantics = [#tpu.dimension_semantics<parallel>, #tpu.dimension_semantics<arbitrary>], iteration_bounds = array<i64: 1, 1>, scalar_prefetch = 0 : i64, scratch_operands = 1 : i64, tpu.core_type = #tpu.core_type<tc>, window_params = [{transform_indices = @transform_0, window_bounds = array<i64: 128, 108>}, {transform_indices = @transform_1, window_bounds = array<i64: 108, 32>}, {transform_indices = @transform_2, window_bounds = array<i64: 128, 32>}]} {
    %c0_i32 = arith.constant 0 : i32
    %0 = arith.cmpi eq, %arg1, %c0_i32 : i32
    %1 = arith.extui %0 : i1 to i32
    %c0_i32_0 = arith.constant 0 : i32
    %2 = arith.cmpi ne, %1, %c0_i32_0 : i32
    scf.if %2 {
      %cst_10 = arith.constant 0.000000e+00 : f32
      %12 = vector.broadcast %cst_10 : f32 to vector<128x32xf32>
      %c0_11 = arith.constant 0 : index
      %c0_12 = arith.constant 0 : index
      %13 = vector.load %arg5[%c0_11, %c0_12] : memref<128x32xf32, #tpu.memory_space<vmem>>, vector<128x32xf32>
      tpu.vector_store %arg5[%c0_11, %c0_12], %12 {strides = array<i32>} : memref<128x32xf32, #tpu.memory_space<vmem>>, vector<128x32xf32>,
    } else {
    }
    %c0 = arith.constant 0 : index
    %c0_1 = arith.constant 0 : index
    %3 = vector.load %arg5[%c0, %c0_1] : memref<128x32xf32, #tpu.memory_space<vmem>>, vector<128x32xf32>
    %c0_2 = arith.constant 0 : index
    %c0_3 = arith.constant 0 : index
    %4 = vector.load %arg2[%c0_2, %c0_3] : memref<128x108xbf16, #tpu.memory_space<vmem>>, vector<128x108xbf16>
    %c0_4 = arith.constant 0 : index
    %c0_5 = arith.constant 0 : index
    %5 = vector.load %arg3[%c0_4, %c0_5] : memref<108x32xbf16, #tpu.memory_space<vmem>>, vector<108x32xbf16>
    %cst = arith.constant dense<0.000000e+00> : vector<128x32xf32>
    %6 = tpu.matmul %4, %5, %cst {dimension_numbers = #tpu.dot_dimension_numbers<[1], [0], [0], [1], [0, 0, 1, 1], [], []>} : vector<128x108xbf16>, vector<108x32xbf16>, vector<128x32xf32> -> vector<128x32xf32>
    %7 = arith.addf %3, %6 : vector<128x32xf32>
    %c0_6 = arith.constant 0 : index
    %c0_7 = arith.constant 0 : index
    %8 = vector.load %arg5[%c0_6, %c0_7] : memref<128x32xf32, #tpu.memory_space<vmem>>, vector<128x32xf32>
    tpu.vector_store %arg5[%c0_6, %c0_7], %7 {strides = array<i32>} : memref<128x32xf32, #tpu.memory_space<vmem>>, vector<128x32xf32>,
    %c0_i32_8 = arith.constant 0 : i32
    %9 = arith.cmpi eq, %arg1, %c0_i32_8 : i32
    %10 = arith.extui %9 : i1 to i32
    %c0_i32_9 = arith.constant 0 : i32
    %11 = arith.cmpi ne, %10, %c0_i32_9 : i32
    scf.if %11 {
      %c0_10 = arith.constant 0 : index
      %c0_11 = arith.constant 0 : index
      %12 = vector.load %arg5[%c0_10, %c0_11] : memref<128x32xf32, #tpu.memory_space<vmem>>, vector<128x32xf32>
      %c0_12 = arith.constant 0 : index
      %c0_13 = arith.constant 0 : index
      %13 = vector.load %arg4[%c0_12, %c0_13] : memref<128x32xf32, #tpu.memory_space<vmem>>, vector<128x32xf32>
      tpu.vector_store %arg4[%c0_12, %c0_13], %12 {strides = array<i32>} : memref<128x32xf32, #tpu.memory_space<vmem>>, vector<128x32xf32>,
    } else {
    }
    return
  }
  func.func @transform_0(%arg0: i32, %arg1: i32) -> (i32, i32) {
    %c0_i32 = arith.constant 0 : i32
    return %arg0, %arg1 : i32, i32
  }
  func.func @transform_1(%arg0: i32, %arg1: i32) -> (i32, i32) {
    %c0_i32 = arith.constant 0 : i32
    %c0_i32_0 = arith.constant 0 : i32
    return %arg1, %c0_i32 : i32, i32
  }
  func.func @transform_2(%arg0: i32, %arg1: i32) -> (i32, i32) {
    %c0_i32 = arith.constant 0 : i32
    %c0_i32_0 = arith.constant 0 : i32
    return %arg0, %c0_i32 : i32, i32
  }
}

module attributes {stable_mosaic.version = 11 : i64} {
  func.func @kernel(%arg0: i32, %arg1: i32, %arg2: memref<16x128xbf16, #tpu.memory_space<vmem>>, %arg3: memref<128x16xbf16, #tpu.memory_space<vmem>>, %arg4: memref<16x16xf32, #tpu.memory_space<vmem>>, %arg5: memref<1x2x16xf32, #tpu.memory_space<vmem>>, %arg6: memref<16x16xf32, #tpu.memory_space<vmem>>) attributes {dimension_semantics = [#tpu.dimension_semantics<parallel>, #tpu.dimension_semantics<arbitrary>], iteration_bounds = array<i64: 1, 1>, scalar_prefetch = 0 : i64, scratch_operands = 1 : i64, tpu.core_type = #tpu.core_type<tc>, window_params = [{transform_indices = @transform_0, window_bounds = array<i64: 16, 128>}, {transform_indices = @transform_1, window_bounds = array<i64: 128, 16>}, {transform_indices = @transform_2, window_bounds = array<i64: 16, 16>}, {transform_indices = @transform_3, window_bounds = array<i64: 1, 2, 16>}]} {
    %c0_i32 = arith.constant 0 : i32
    %0 = arith.cmpi eq, %arg1, %c0_i32 : i32
    %1 = arith.extui %0 : i1 to i32
    %c0_i32_0 = arith.constant 0 : i32
    %2 = arith.cmpi ne, %1, %c0_i32_0 : i32
    scf.if %2 {
      %cst_10 = arith.constant 0.000000e+00 : f32
      %12 = vector.broadcast %cst_10 : f32 to vector<16x16xf32>
      %c0_11 = arith.constant 0 : index
      %c0_12 = arith.constant 0 : index
      %13 = vector.load %arg6[%c0_11, %c0_12] : memref<16x16xf32, #tpu.memory_space<vmem>>, vector<16x16xf32>
      tpu.vector_store %arg6[%c0_11, %c0_12], %12 {strides = array<i32>} : memref<16x16xf32, #tpu.memory_space<vmem>>, vector<16x16xf32>,
    } else {
    }
    %c0 = arith.constant 0 : index
    %c0_1 = arith.constant 0 : index
    %3 = vector.load %arg6[%c0, %c0_1] : memref<16x16xf32, #tpu.memory_space<vmem>>, vector<16x16xf32>
    %c0_2 = arith.constant 0 : index
    %c0_3 = arith.constant 0 : index
    %4 = vector.load %arg2[%c0_2, %c0_3] : memref<16x128xbf16, #tpu.memory_space<vmem>>, vector<16x128xbf16>
    %c0_4 = arith.constant 0 : index
    %c0_5 = arith.constant 0 : index
    %5 = vector.load %arg3[%c0_4, %c0_5] : memref<128x16xbf16, #tpu.memory_space<vmem>>, vector<128x16xbf16>
    %cst = arith.constant dense<0.000000e+00> : vector<16x16xf32>
    %6 = tpu.matmul %4, %5, %cst {dimension_numbers = #tpu.dot_dimension_numbers<[1], [0], [0], [1], [0, 0, 1, 1], [], []>} : vector<16x128xbf16>, vector<128x16xbf16>, vector<16x16xf32> -> vector<16x16xf32>
    %7 = arith.addf %3, %6 : vector<16x16xf32>
    %c0_6 = arith.constant 0 : index
    %c0_7 = arith.constant 0 : index
    %8 = vector.load %arg6[%c0_6, %c0_7] : memref<16x16xf32, #tpu.memory_space<vmem>>, vector<16x16xf32>
    tpu.vector_store %arg6[%c0_6, %c0_7], %7 {strides = array<i32>} : memref<16x16xf32, #tpu.memory_space<vmem>>, vector<16x16xf32>,
    %c0_i32_8 = arith.constant 0 : i32
    %9 = arith.cmpi eq, %arg1, %c0_i32_8 : i32
    %10 = arith.extui %9 : i1 to i32
    %c0_i32_9 = arith.constant 0 : i32
    %11 = arith.cmpi ne, %10, %c0_i32_9 : i32
    scf.if %11 {
      %c0_10 = arith.constant 0 : index
      %c0_11 = arith.constant 0 : index
      %12 = vector.load %arg6[%c0_10, %c0_11] : memref<16x16xf32, #tpu.memory_space<vmem>>, vector<16x16xf32>
      %c0_12 = arith.constant 0 : index
      %c0_13 = arith.constant 0 : index
      %13 = vector.load %arg4[%c0_12, %c0_13] : memref<16x16xf32, #tpu.memory_space<vmem>>, vector<16x16xf32>
      tpu.vector_store %arg4[%c0_12, %c0_13], %12 {strides = array<i32>} : memref<16x16xf32, #tpu.memory_space<vmem>>, vector<16x16xf32>,
      %cst_14 = arith.constant dense<0.000000e+00> : vector<16xf32>
      %14 = vector.multi_reduction <add>, %12, %cst_14 [0] : vector<16x16xf32> to vector<16xf32>
      %15 = vector.shape_cast %14 : vector<16xf32> to vector<1x16xf32>
      %16 = arith.mulf %12, %12 : vector<16x16xf32>
      %cst_15 = arith.constant dense<0.000000e+00> : vector<16xf32>
      %17 = vector.multi_reduction <add>, %16, %cst_15 [0] : vector<16x16xf32> to vector<16xf32>
      %18 = vector.shape_cast %17 : vector<16xf32> to vector<1x16xf32>
      %19 = tpu.concatenate %15, %18 in 0 : vector<1x16xf32>, vector<1x16xf32> -> vector<2x16xf32>
      %20 = vector.shape_cast %19 : vector<2x16xf32> to vector<1x2x16xf32>
      %c0_16 = arith.constant 0 : index
      %c0_17 = arith.constant 0 : index
      %c0_18 = arith.constant 0 : index
      %21 = vector.load %arg5[%c0_16, %c0_17, %c0_18] : memref<1x2x16xf32, #tpu.memory_space<vmem>>, vector<1x2x16xf32>
      tpu.vector_store %arg5[%c0_16, %c0_17, %c0_18], %20 {strides = array<i32>} : memref<1x2x16xf32, #tpu.memory_space<vmem>>, vector<1x2x16xf32>,
    } else {
    }
    return
  }
  func.func @transform_0(%arg0: i32, %arg1: i32) -> (i32, i32) {
    %c0_i32 = arith.constant 0 : i32
    return %arg0, %arg1 : i32, i32
  }
  func.func @transform_1(%arg0: i32, %arg1: i32) -> (i32, i32) {
    %c0_i32 = arith.constant 0 : i32
    %c0_i32_0 = arith.constant 0 : i32
    return %arg1, %c0_i32 : i32, i32
  }
  func.func @transform_2(%arg0: i32, %arg1: i32) -> (i32, i32) {
    %c0_i32 = arith.constant 0 : i32
    %c0_i32_0 = arith.constant 0 : i32
    return %arg0, %c0_i32 : i32, i32
  }
  func.func @transform_3(%arg0: i32, %arg1: i32) -> (i32, i32, i32) {
    %c0_i32 = arith.constant 0 : i32
    %c0_i32_0 = arith.constant 0 : i32
    %c0_i32_1 = arith.constant 0 : i32
    return %arg0, %c0_i32, %c0_i32_0 : i32, i32, i32
  }
}

module attributes {stable_mosaic.version = 11 : i64} {
  func.func @_flash_attn_kernel(%arg0: i32, %arg1: i32, %arg2: memref<128x16xbf16, #tpu.memory_space<vmem>>, %arg3: memref<16x16xbf16, #tpu.memory_space<vmem>>, %arg4: memref<16x16xbf16, #tpu.memory_space<vmem>>, %arg5: memref<128x16xf32, #tpu.memory_space<vmem>>, %arg6: memref<128x1xf32, #tpu.memory_space<vmem>>, %arg7: memref<128x1xf32, #tpu.memory_space<vmem>>, %arg8: memref<128x16xf32, #tpu.memory_space<vmem>>) attributes {dimension_semantics = [#tpu.dimension_semantics<parallel>, #tpu.dimension_semantics<arbitrary>], iteration_bounds = array<i64: 1, 1>, scalar_prefetch = 0 : i64, scratch_operands = 3 : i64, tpu.core_type = #tpu.core_type<tc>, window_params = [{transform_indices = @transform_0, window_bounds = array<i64: 128, 16>}, {transform_indices = @transform_1, window_bounds = array<i64: 16, 16>}, {transform_indices = @transform_2, window_bounds = array<i64: 16, 16>}, {transform_indices = @transform_3, window_bounds = array<i64: 128, 16>}]} {
    %c0_i32 = arith.constant 0 : i32
    %0 = arith.cmpi eq, %arg1, %c0_i32 : i32
    %1 = arith.extui %0 : i1 to i32
    %c0_i32_0 = arith.constant 0 : i32
    %2 = arith.cmpi ne, %1, %c0_i32_0 : i32
    scf.if %2 {
      %cst_25 = arith.constant 0xFF800000 : f32
      %35 = vector.broadcast %cst_25 : f32 to vector<128x1xf32>
      %c0_26 = arith.constant 0 : index
      %c0_27 = arith.constant 0 : index
      %36 = vector.load %arg6[%c0_26, %c0_27] : memref<128x1xf32, #tpu.memory_space<vmem>>, vector<128x1xf32>
      tpu.vector_store %arg6[%c0_26, %c0_27], %35 {strides = array<i32>} : memref<128x1xf32, #tpu.memory_space<vmem>>, vector<128x1xf32>,
      %cst_28 = arith.constant 0.000000e+00 : f32
      %37 = vector.broadcast %cst_28 : f32 to vector<128x1xf32>
      %c0_29 = arith.constant 0 : index
      %c0_30 = arith.constant 0 : index
      %38 = vector.load %arg7[%c0_29, %c0_30] : memref<128x1xf32, #tpu.memory_space<vmem>>, vector<128x1xf32>
      tpu.vector_store %arg7[%c0_29, %c0_30], %37 {strides = array<i32>} : memref<128x1xf32, #tpu.memory_space<vmem>>, vector<128x1xf32>,
      %cst_31 = arith.constant 0.000000e+00 : f32
      %39 = vector.broadcast %cst_31 : f32 to vector<128x16xf32>
      %c0_32 = arith.constant 0 : index
      %c0_33 = arith.constant 0 : index
      %40 = vector.load %arg8[%c0_32, %c0_33] : memref<128x16xf32, #tpu.memory_space<vmem>>, vector<128x16xf32>
      tpu.vector_store %arg8[%c0_32, %c0_33], %39 {strides = array<i32>} : memref<128x16xf32, #tpu.memory_space<vmem>>, vector<128x16xf32>,
    } else {
    }
    %c0 = arith.constant 0 : index
    %c0_1 = arith.constant 0 : index
    %3 = vector.load %arg2[%c0, %c0_1] : memref<128x16xbf16, #tpu.memory_space<vmem>>, vector<128x16xbf16>
    %c0_2 = arith.constant 0 : index
    %c0_3 = arith.constant 0 : index
    %4 = vector.load %arg3[%c0_2, %c0_3] : memref<16x16xbf16, #tpu.memory_space<vmem>>, vector<16x16xbf16>
    %5 = tpu.transpose %4, [1, 0] : vector<16x16xbf16> -> vector<16x16xbf16>
    %cst = arith.constant dense<0.000000e+00> : vector<128x16xf32>
    %6 = tpu.matmul %3, %5, %cst {dimension_numbers = #tpu.dot_dimension_numbers<[1], [0], [0], [1], [0, 0, 1, 1], [], []>} : vector<128x16xbf16>, vector<16x16xbf16>, vector<128x16xf32> -> vector<128x16xf32>
    %c0_4 = arith.constant 0 : index
    %c0_5 = arith.constant 0 : index
    %7 = vector.load %arg6[%c0_4, %c0_5] : memref<128x1xf32, #tpu.memory_space<vmem>>, vector<128x1xf32>
    %cst_6 = arith.constant dense<0xFF800000> : vector<128xf32>
    %8 = vector.multi_reduction <maximumf>, %6, %cst_6 [1] : vector<128x16xf32> to vector<128xf32>
    %9 = vector.shape_cast %8 : vector<128xf32> to vector<128x1xf32>
    %10 = arith.maximumf %7, %9 : vector<128x1xf32>
    %c0_7 = arith.constant 0 : index
    %c0_8 = arith.constant 0 : index
    %11 = vector.load %arg6[%c0_7, %c0_8] : memref<128x1xf32, #tpu.memory_space<vmem>>, vector<128x1xf32>
    %12 = arith.subf %11, %10 : vector<128x1xf32>
    %13 = math.exp %12 : vector<128x1xf32>
    %14 = vector.broadcast %10 : vector<128x1xf32> to vector<128x16xf32>
    %15 = arith.subf %6, %14 : vector<128x16xf32>
    %16 = math.exp %15 : vector<128x16xf32>
    %c0_9 = arith.constant 0 : index
    %c0_10 = arith.constant 0 : index
    %17 = vector.load %arg7[%c0_9, %c0_10] : memref<128x1xf32, #tpu.memory_space<vmem>>, vector<128x1xf32>
    %18 = arith.mulf %13, %17 : vector<128x1xf32>
    %cst_11 = arith.constant dense<0.000000e+00> : vector<128xf32>
    %19 = vector.multi_reduction <add>, %16, %cst_11 [1] : vector<128x16xf32> to vector<128xf32>
    %20 = vector.shape_cast %19 : vector<128xf32> to vector<128x1xf32>
    %21 = arith.addf %18, %20 : vector<128x1xf32>
    %c0_12 = arith.constant 0 : index
    %c0_13 = arith.constant 0 : index
    %22 = vector.load %arg7[%c0_12, %c0_13] : memref<128x1xf32, #tpu.memory_space<vmem>>, vector<128x1xf32>
    tpu.vector_store %arg7[%c0_12, %c0_13], %21 {strides = array<i32>} : memref<128x1xf32, #tpu.memory_space<vmem>>, vector<128x1xf32>,
    %c0_14 = arith.constant 0 : index
    %c0_15 = arith.constant 0 : index
    %23 = vector.load %arg8[%c0_14, %c0_15] : memref<128x16xf32, #tpu.memory_space<vmem>>, vector<128x16xf32>
    %24 = vector.broadcast %13 : vector<128x1xf32> to vector<128x16xf32>
    %25 = arith.mulf %24, %23 : vector<128x16xf32>
    %26 = arith.truncf %16 : vector<128x16xf32> to vector<128x16xbf16>
    %c0_16 = arith.constant 0 : index
    %c0_17 = arith.constant 0 : index
    %27 = vector.load %arg4[%c0_16, %c0_17] : memref<16x16xbf16, #tpu.memory_space<vmem>>, vector<16x16xbf16>
    %cst_18 = arith.constant dense<0.000000e+00> : vector<128x16xf32>
    %28 = tpu.matmul %26, %27, %cst_18 {dimension_numbers = #tpu.dot_dimension_numbers<[1], [0], [0], [1], [0, 0, 1, 1], [], []>} : vector<128x16xbf16>, vector<16x16xbf16>, vector<128x16xf32> -> vector<128x16xf32>
    %29 = arith.addf %25, %28 : vector<128x16xf32>
    %c0_19 = arith.constant 0 : index
    %c0_20 = arith.constant 0 : index
    %30 = vector.load %arg8[%c0_19, %c0_20] : memref<128x16xf32, #tpu.memory_space<vmem>>, vector<128x16xf32>
    tpu.vector_store %arg8[%c0_19, %c0_20], %29 {strides = array<i32>} : memref<128x16xf32, #tpu.memory_space<vmem>>, vector<128x16xf32>,
    %c0_21 = arith.constant 0 : index
    %c0_22 = arith.constant 0 : index
    %31 = vector.load %arg6[%c0_21, %c0_22] : memref<128x1xf32, #tpu.memory_space<vmem>>, vector<128x1xf32>
    tpu.vector_store %arg6[%c0_21, %c0_22], %10 {strides = array<i32>} : memref<128x1xf32, #tpu.memory_space<vmem>>, vector<128x1xf32>,
    %c0_i32_23 = arith.constant 0 : i32
    %32 = arith.cmpi eq, %arg1, %c0_i32_23 : i32
    %33 = arith.extui %32 : i1 to i32
    %c0_i32_24 = arith.constant 0 : i32
    %34 = arith.cmpi ne, %33, %c0_i32_24 : i32
    scf.if %34 {
      %c0_25 = arith.constant 0 : index
      %c0_26 = arith.constant 0 : index
      %35 = vector.load %arg8[%c0_25, %c0_26] : memref<128x16xf32, #tpu.memory_space<vmem>>, vector<128x16xf32>
      %c0_27 = arith.constant 0 : index
      %c0_28 = arith.constant 0 : index
      %36 = vector.load %arg7[%c0_27, %c0_28] : memref<128x1xf32, #tpu.memory_space<vmem>>, vector<128x1xf32>
      %37 = tpu.reciprocal %36 {approx = true} : vector<128x1xf32> -> vector<128x1xf32>
      %38 = vector.broadcast %37 : vector<128x1xf32> to vector<128x16xf32>
      %39 = arith.mulf %35, %38 : vector<128x16xf32>
      %c0_29 = arith.constant 0 : index
      %c0_30 = arith.constant 0 : index
      %40 = vector.load %arg5[%c0_29, %c0_30] : memref<128x16xf32, #tpu.memory_space<vmem>>, vector<128x16xf32>
      tpu.vector_store %arg5[%c0_29, %c0_30], %39 {strides = array<i32>} : memref<128x16xf32, #tpu.memory_space<vmem>>, vector<128x16xf32>,
    } else {
    }
    return
  }
  func.func @transform_0(%arg0: i32, %arg1: i32) -> (i32, i32) {
    %c0_i32 = arith.constant 0 : i32
    %c0_i32_0 = arith.constant 0 : i32
    return %arg0, %c0_i32 : i32, i32
  }
  func.func @transform_1(%arg0: i32, %arg1: i32) -> (i32, i32) {
    %c0_i32 = arith.constant 0 : i32
    %c0_i32_0 = arith.constant 0 : i32
    return %arg1, %c0_i32 : i32, i32
  }
  func.func @transform_2(%arg0: i32, %arg1: i32) -> (i32, i32) {
    %c0_i32 = arith.constant 0 : i32
    %c0_i32_0 = arith.constant 0 : i32
    return %arg1, %c0_i32 : i32, i32
  }
  func.func @transform_3(%arg0: i32, %arg1: i32) -> (i32, i32) {
    %c0_i32 = arith.constant 0 : i32
    %c0_i32_0 = arith.constant 0 : i32
    return %arg0, %c0_i32 : i32, i32
  }
}

module attributes {stable_mosaic.version = 11 : i64} {
  func.func @kernel(%arg0: i32, %arg1: i32, %arg2: memref<16x16xbf16, #tpu.memory_space<vmem>>, %arg3: memref<16x32xbf16, #tpu.memory_space<vmem>>, %arg4: memref<1x32xf32, #tpu.memory_space<vmem>>, %arg5: memref<16x32xf32, #tpu.memory_space<vmem>>, %arg6: memref<16x32xf32, #tpu.memory_space<vmem>>) attributes {dimension_semantics = [#tpu.dimension_semantics<parallel>, #tpu.dimension_semantics<arbitrary>], iteration_bounds = array<i64: 1, 1>, scalar_prefetch = 0 : i64, scratch_operands = 1 : i64, tpu.core_type = #tpu.core_type<tc>, window_params = [{transform_indices = @transform_0, window_bounds = array<i64: 16, 16>}, {transform_indices = @transform_1, window_bounds = array<i64: 16, 32>}, {pipeline_mode = #tpu.pipeline_mode<synchronous>, transform_indices = @transform_2, window_bounds = array<i64: 1, 32>}, {transform_indices = @transform_3, window_bounds = array<i64: 16, 32>}]} {
    %c0_i32 = arith.constant 0 : i32
    %0 = arith.cmpi eq, %arg1, %c0_i32 : i32
    %1 = arith.extui %0 : i1 to i32
    %c0_i32_0 = arith.constant 0 : i32
    %2 = arith.cmpi ne, %1, %c0_i32_0 : i32
    scf.if %2 {
      %cst_10 = arith.constant 0.000000e+00 : f32
      %12 = vector.broadcast %cst_10 : f32 to vector<16x32xf32>
      %c0_11 = arith.constant 0 : index
      %c0_12 = arith.constant 0 : index
      %13 = vector.load %arg6[%c0_11, %c0_12] : memref<16x32xf32, #tpu.memory_space<vmem>>, vector<16x32xf32>
      tpu.vector_store %arg6[%c0_11, %c0_12], %12 {strides = array<i32>} : memref<16x32xf32, #tpu.memory_space<vmem>>, vector<16x32xf32>,
    } else {
    }
    %c0 = arith.constant 0 : index
    %c0_1 = arith.constant 0 : index
    %3 = vector.load %arg6[%c0, %c0_1] : memref<16x32xf32, #tpu.memory_space<vmem>>, vector<16x32xf32>
    %c0_2 = arith.constant 0 : index
    %c0_3 = arith.constant 0 : index
    %4 = vector.load %arg2[%c0_2, %c0_3] : memref<16x16xbf16, #tpu.memory_space<vmem>>, vector<16x16xbf16>
    %c0_4 = arith.constant 0 : index
    %c0_5 = arith.constant 0 : index
    %5 = vector.load %arg3[%c0_4, %c0_5] : memref<16x32xbf16, #tpu.memory_space<vmem>>, vector<16x32xbf16>
    %cst = arith.constant dense<0.000000e+00> : vector<16x32xf32>
    %6 = tpu.matmul %4, %5, %cst {dimension_numbers = #tpu.dot_dimension_numbers<[1], [0], [0], [1], [0, 0, 1, 1], [], []>} : vector<16x16xbf16>, vector<16x32xbf16>, vector<16x32xf32> -> vector<16x32xf32>
    %7 = arith.addf %3, %6 : vector<16x32xf32>
    %c0_6 = arith.constant 0 : index
    %c0_7 = arith.constant 0 : index
    %8 = vector.load %arg6[%c0_6, %c0_7] : memref<16x32xf32, #tpu.memory_space<vmem>>, vector<16x32xf32>
    tpu.vector_store %arg6[%c0_6, %c0_7], %7 {strides = array<i32>} : memref<16x32xf32, #tpu.memory_space<vmem>>, vector<16x32xf32>,
    %c0_i32_8 = arith.constant 0 : i32
    %9 = arith.cmpi eq, %arg1, %c0_i32_8 : i32
    %10 = arith.extui %9 : i1 to i32
    %c0_i32_9 = arith.constant 0 : i32
    %11 = arith.cmpi ne, %10, %c0_i32_9 : i32
    scf.if %11 {
      %c0_10 = arith.constant 0 : index
      %c0_11 = arith.constant 0 : index
      %12 = vector.load %arg6[%c0_10, %c0_11] : memref<16x32xf32, #tpu.memory_space<vmem>>, vector<16x32xf32>
      %c0_12 = arith.constant 0 : index
      %c0_13 = arith.constant 0 : index
      %13 = vector.load %arg4[%c0_12, %c0_13] : memref<1x32xf32, #tpu.memory_space<vmem>>, vector<1x32xf32>
      %14 = vector.broadcast %13 : vector<1x32xf32> to vector<16x32xf32>
      %15 = arith.addf %12, %14 : vector<16x32xf32>
      %c0_14 = arith.constant 0 : index
      %c0_15 = arith.constant 0 : index
      %16 = vector.load %arg5[%c0_14, %c0_15] : memref<16x32xf32, #tpu.memory_space<vmem>>, vector<16x32xf32>
      tpu.vector_store %arg5[%c0_14, %c0_15], %15 {strides = array<i32>} : memref<16x32xf32, #tpu.memory_space<vmem>>, vector<16x32xf32>,
    } else {
    }
    return
  }
  func.func @transform_0(%arg0: i32, %arg1: i32) -> (i32, i32) {
    %c0_i32 = arith.constant 0 : i32
    return %arg0, %arg1 : i32, i32
  }
  func.func @transform_1(%arg0: i32, %arg1: i32) -> (i32, i32) {
    %c0_i32 = arith.constant 0 : i32
    %c0_i32_0 = arith.constant 0 : i32
    return %arg1, %c0_i32 : i32, i32
  }
  func.func @transform_2(%arg0: i32, %arg1: i32) -> (i32, i32) {
    %c0_i32 = arith.constant 0 : i32
    %c0_i32_0 = arith.constant 0 : i32
    %c0_i32_1 = arith.constant 0 : i32
    return %c0_i32, %c0_i32_0 : i32, i32
  }
  func.func @transform_3(%arg0: i32, %arg1: i32) -> (i32, i32) {
    %c0_i32 = arith.constant 0 : i32
    %c0_i32_0 = arith.constant 0 : i32
    return %arg0, %c0_i32 : i32, i32
  }
}

module attributes {stable_mosaic.version = 11 : i64} {
  func.func @kernel(%arg0: i32, %arg1: i32, %arg2: memref<128x432xbf16, #tpu.memory_space<vmem>>, %arg3: memref<432x16xbf16, #tpu.memory_space<vmem>>, %arg4: memref<128x16xf32, #tpu.memory_space<vmem>>, %arg5: memref<1x2x16xf32, #tpu.memory_space<vmem>>, %arg6: memref<128x16xf32, #tpu.memory_space<vmem>>) attributes {dimension_semantics = [#tpu.dimension_semantics<parallel>, #tpu.dimension_semantics<arbitrary>], iteration_bounds = array<i64: 1, 1>, scalar_prefetch = 0 : i64, scratch_operands = 1 : i64, tpu.core_type = #tpu.core_type<tc>, window_params = [{transform_indices = @transform_0, window_bounds = array<i64: 128, 432>}, {transform_indices = @transform_1, window_bounds = array<i64: 432, 16>}, {transform_indices = @transform_2, window_bounds = array<i64: 128, 16>}, {transform_indices = @transform_3, window_bounds = array<i64: 1, 2, 16>}]} {
    %c0_i32 = arith.constant 0 : i32
    %0 = arith.cmpi eq, %arg1, %c0_i32 : i32
    %1 = arith.extui %0 : i1 to i32
    %c0_i32_0 = arith.constant 0 : i32
    %2 = arith.cmpi ne, %1, %c0_i32_0 : i32
    scf.if %2 {
      %cst_10 = arith.constant 0.000000e+00 : f32
      %12 = vector.broadcast %cst_10 : f32 to vector<128x16xf32>
      %c0_11 = arith.constant 0 : index
      %c0_12 = arith.constant 0 : index
      %13 = vector.load %arg6[%c0_11, %c0_12] : memref<128x16xf32, #tpu.memory_space<vmem>>, vector<128x16xf32>
      tpu.vector_store %arg6[%c0_11, %c0_12], %12 {strides = array<i32>} : memref<128x16xf32, #tpu.memory_space<vmem>>, vector<128x16xf32>,
    } else {
    }
    %c0 = arith.constant 0 : index
    %c0_1 = arith.constant 0 : index
    %3 = vector.load %arg6[%c0, %c0_1] : memref<128x16xf32, #tpu.memory_space<vmem>>, vector<128x16xf32>
    %c0_2 = arith.constant 0 : index
    %c0_3 = arith.constant 0 : index
    %4 = vector.load %arg2[%c0_2, %c0_3] : memref<128x432xbf16, #tpu.memory_space<vmem>>, vector<128x432xbf16>
    %c0_4 = arith.constant 0 : index
    %c0_5 = arith.constant 0 : index
    %5 = vector.load %arg3[%c0_4, %c0_5] : memref<432x16xbf16, #tpu.memory_space<vmem>>, vector<432x16xbf16>
    %cst = arith.constant dense<0.000000e+00> : vector<128x16xf32>
    %6 = tpu.matmul %4, %5, %cst {dimension_numbers = #tpu.dot_dimension_numbers<[1], [0], [0], [1], [0, 0, 1, 1], [], []>} : vector<128x432xbf16>, vector<432x16xbf16>, vector<128x16xf32> -> vector<128x16xf32>
    %7 = arith.addf %3, %6 : vector<128x16xf32>
    %c0_6 = arith.constant 0 : index
    %c0_7 = arith.constant 0 : index
    %8 = vector.load %arg6[%c0_6, %c0_7] : memref<128x16xf32, #tpu.memory_space<vmem>>, vector<128x16xf32>
    tpu.vector_store %arg6[%c0_6, %c0_7], %7 {strides = array<i32>} : memref<128x16xf32, #tpu.memory_space<vmem>>, vector<128x16xf32>,
    %c0_i32_8 = arith.constant 0 : i32
    %9 = arith.cmpi eq, %arg1, %c0_i32_8 : i32
    %10 = arith.extui %9 : i1 to i32
    %c0_i32_9 = arith.constant 0 : i32
    %11 = arith.cmpi ne, %10, %c0_i32_9 : i32
    scf.if %11 {
      %c0_10 = arith.constant 0 : index
      %c0_11 = arith.constant 0 : index
      %12 = vector.load %arg6[%c0_10, %c0_11] : memref<128x16xf32, #tpu.memory_space<vmem>>, vector<128x16xf32>
      %c0_12 = arith.constant 0 : index
      %c0_13 = arith.constant 0 : index
      %13 = vector.load %arg4[%c0_12, %c0_13] : memref<128x16xf32, #tpu.memory_space<vmem>>, vector<128x16xf32>
      tpu.vector_store %arg4[%c0_12, %c0_13], %12 {strides = array<i32>} : memref<128x16xf32, #tpu.memory_space<vmem>>, vector<128x16xf32>,
      %cst_14 = arith.constant dense<0.000000e+00> : vector<16xf32>
      %14 = vector.multi_reduction <add>, %12, %cst_14 [0] : vector<128x16xf32> to vector<16xf32>
      %15 = vector.shape_cast %14 : vector<16xf32> to vector<1x16xf32>
      %16 = arith.mulf %12, %12 : vector<128x16xf32>
      %cst_15 = arith.constant dense<0.000000e+00> : vector<16xf32>
      %17 = vector.multi_reduction <add>, %16, %cst_15 [0] : vector<128x16xf32> to vector<16xf32>
      %18 = vector.shape_cast %17 : vector<16xf32> to vector<1x16xf32>
      %19 = tpu.concatenate %15, %18 in 0 : vector<1x16xf32>, vector<1x16xf32> -> vector<2x16xf32>
      %20 = vector.shape_cast %19 : vector<2x16xf32> to vector<1x2x16xf32>
      %c0_16 = arith.constant 0 : index
      %c0_17 = arith.constant 0 : index
      %c0_18 = arith.constant 0 : index
      %21 = vector.load %arg5[%c0_16, %c0_17, %c0_18] : memref<1x2x16xf32, #tpu.memory_space<vmem>>, vector<1x2x16xf32>
      tpu.vector_store %arg5[%c0_16, %c0_17, %c0_18], %20 {strides = array<i32>} : memref<1x2x16xf32, #tpu.memory_space<vmem>>, vector<1x2x16xf32>,
    } else {
    }
    return
  }
  func.func @transform_0(%arg0: i32, %arg1: i32) -> (i32, i32) {
    %c0_i32 = arith.constant 0 : i32
    return %arg0, %arg1 : i32, i32
  }
  func.func @transform_1(%arg0: i32, %arg1: i32) -> (i32, i32) {
    %c0_i32 = arith.constant 0 : i32
    %c0_i32_0 = arith.constant 0 : i32
    return %arg1, %c0_i32 : i32, i32
  }
  func.func @transform_2(%arg0: i32, %arg1: i32) -> (i32, i32) {
    %c0_i32 = arith.constant 0 : i32
    %c0_i32_0 = arith.constant 0 : i32
    return %arg0, %c0_i32 : i32, i32
  }
  func.func @transform_3(%arg0: i32, %arg1: i32) -> (i32, i32, i32) {
    %c0_i32 = arith.constant 0 : i32
    %c0_i32_0 = arith.constant 0 : i32
    %c0_i32_1 = arith.constant 0 : i32
    return %arg0, %c0_i32, %c0_i32_0 : i32, i32, i32
  }
}

module attributes {stable_mosaic.version = 11 : i64} {
  func.func @kernel(%arg0: i32, %arg1: memref<128x16xf32, #tpu.memory_space<vmem>>, %arg2: memref<1x16xf32, #tpu.memory_space<vmem>>, %arg3: memref<1x16xf32, #tpu.memory_space<vmem>>, %arg4: memref<128x16xf32, #tpu.memory_space<vmem>>, %arg5: memref<128x16xf32, #tpu.memory_space<vmem>>, %arg6: memref<1x2x16xf32, #tpu.memory_space<vmem>>) attributes {dimension_semantics = [#tpu.dimension_semantics<parallel>], iteration_bounds = array<i64: 1>, scalar_prefetch = 0 : i64, scratch_operands = 0 : i64, tpu.core_type = #tpu.core_type<tc>, window_params = [{transform_indices = @transform_0, window_bounds = array<i64: 128, 16>}, {pipeline_mode = #tpu.pipeline_mode<synchronous>, transform_indices = @transform_1, window_bounds = array<i64: 1, 16>}, {pipeline_mode = #tpu.pipeline_mode<synchronous>, transform_indices = @transform_2, window_bounds = array<i64: 1, 16>}, {transform_indices = @transform_3, window_bounds = array<i64: 128, 16>}, {transform_indices = @transform_4, window_bounds = array<i64: 128, 16>}, {transform_indices = @transform_5, window_bounds = array<i64: 1, 2, 16>}]} {
    %c0 = arith.constant 0 : index
    %c0_0 = arith.constant 0 : index
    %0 = vector.load %arg1[%c0, %c0_0] : memref<128x16xf32, #tpu.memory_space<vmem>>, vector<128x16xf32>
    %c0_1 = arith.constant 0 : index
    %c0_2 = arith.constant 0 : index
    %1 = vector.load %arg2[%c0_1, %c0_2] : memref<1x16xf32, #tpu.memory_space<vmem>>, vector<1x16xf32>
    %2 = vector.broadcast %1 : vector<1x16xf32> to vector<128x16xf32>
    %3 = arith.mulf %0, %2 : vector<128x16xf32>
    %c0_3 = arith.constant 0 : index
    %c0_4 = arith.constant 0 : index
    %4 = vector.load %arg3[%c0_3, %c0_4] : memref<1x16xf32, #tpu.memory_space<vmem>>, vector<1x16xf32>
    %5 = vector.broadcast %4 : vector<1x16xf32> to vector<128x16xf32>
    %6 = arith.addf %3, %5 : vector<128x16xf32>
    %c0_5 = arith.constant 0 : index
    %c0_6 = arith.constant 0 : index
    %7 = vector.load %arg4[%c0_5, %c0_6] : memref<128x16xf32, #tpu.memory_space<vmem>>, vector<128x16xf32>
    %8 = arith.addf %6, %7 : vector<128x16xf32>
    %c0_7 = arith.constant 0 : index
    %c0_8 = arith.constant 0 : index
    %9 = vector.load %arg5[%c0_7, %c0_8] : memref<128x16xf32, #tpu.memory_space<vmem>>, vector<128x16xf32>
    tpu.vector_store %arg5[%c0_7, %c0_8], %8 {strides = array<i32>} : memref<128x16xf32, #tpu.memory_space<vmem>>, vector<128x16xf32>,
    %cst = arith.constant dense<0.000000e+00> : vector<16xf32>
    %10 = vector.multi_reduction <add>, %8, %cst [0] : vector<128x16xf32> to vector<16xf32>
    %11 = vector.shape_cast %10 : vector<16xf32> to vector<1x16xf32>
    %12 = arith.mulf %8, %8 : vector<128x16xf32>
    %cst_9 = arith.constant dense<0.000000e+00> : vector<16xf32>
    %13 = vector.multi_reduction <add>, %12, %cst_9 [0] : vector<128x16xf32> to vector<16xf32>
    %14 = vector.shape_cast %13 : vector<16xf32> to vector<1x16xf32>
    %15 = tpu.concatenate %11, %14 in 0 : vector<1x16xf32>, vector<1x16xf32> -> vector<2x16xf32>
    %16 = vector.shape_cast %15 : vector<2x16xf32> to vector<1x2x16xf32>
    %c0_10 = arith.constant 0 : index
    %c0_11 = arith.constant 0 : index
    %c0_12 = arith.constant 0 : index
    %17 = vector.load %arg6[%c0_10, %c0_11, %c0_12] : memref<1x2x16xf32, #tpu.memory_space<vmem>>, vector<1x2x16xf32>
    tpu.vector_store %arg6[%c0_10, %c0_11, %c0_12], %16 {strides = array<i32>} : memref<1x2x16xf32, #tpu.memory_space<vmem>>, vector<1x2x16xf32>,
    return
  }
  func.func @transform_0(%arg0: i32) -> (i32, i32) {
    %c0_i32 = arith.constant 0 : i32
    %c0_i32_0 = arith.constant 0 : i32
    return %arg0, %c0_i32 : i32, i32
  }
  func.func @transform_1(%arg0: i32) -> (i32, i32) {
    %c0_i32 = arith.constant 0 : i32
    %c0_i32_0 = arith.constant 0 : i32
    %c0_i32_1 = arith.constant 0 : i32
    return %c0_i32, %c0_i32_0 : i32, i32
  }
  func.func @transform_2(%arg0: i32) -> (i32, i32) {
    %c0_i32 = arith.constant 0 : i32
    %c0_i32_0 = arith.constant 0 : i32
    %c0_i32_1 = arith.constant 0 : i32
    return %c0_i32, %c0_i32_0 : i32, i32
  }
  func.func @transform_3(%arg0: i32) -> (i32, i32) {
    %c0_i32 = arith.constant 0 : i32
    %c0_i32_0 = arith.constant 0 : i32
    return %arg0, %c0_i32 : i32, i32
  }
  func.func @transform_4(%arg0: i32) -> (i32, i32) {
    %c0_i32 = arith.constant 0 : i32
    %c0_i32_0 = arith.constant 0 : i32
    return %arg0, %c0_i32 : i32, i32
  }
  func.func @transform_5(%arg0: i32) -> (i32, i32, i32) {
    %c0_i32 = arith.constant 0 : i32
    %c0_i32_0 = arith.constant 0 : i32
    %c0_i32_1 = arith.constant 0 : i32
    return %arg0, %c0_i32, %c0_i32_0 : i32, i32, i32
  }
}

module attributes {stable_mosaic.version = 11 : i64} {
  func.func @kernel(%arg0: i32, %arg1: i32, %arg2: memref<128x432xbf16, #tpu.memory_space<vmem>>, %arg3: memref<432x16xbf16, #tpu.memory_space<vmem>>, %arg4: memref<128x16xf32, #tpu.memory_space<vmem>>, %arg5: memref<128x16xf32, #tpu.memory_space<vmem>>, %arg6: memref<1x2x16xf32, #tpu.memory_space<vmem>>, %arg7: memref<128x16xf32, #tpu.memory_space<vmem>>) attributes {dimension_semantics = [#tpu.dimension_semantics<parallel>, #tpu.dimension_semantics<arbitrary>], iteration_bounds = array<i64: 1, 1>, scalar_prefetch = 0 : i64, scratch_operands = 1 : i64, tpu.core_type = #tpu.core_type<tc>, window_params = [{transform_indices = @transform_0, window_bounds = array<i64: 128, 432>}, {transform_indices = @transform_1, window_bounds = array<i64: 432, 16>}, {transform_indices = @transform_2, window_bounds = array<i64: 128, 16>}, {transform_indices = @transform_3, window_bounds = array<i64: 128, 16>}, {transform_indices = @transform_4, window_bounds = array<i64: 1, 2, 16>}]} {
    %c0_i32 = arith.constant 0 : i32
    %0 = arith.cmpi eq, %arg1, %c0_i32 : i32
    %1 = arith.extui %0 : i1 to i32
    %c0_i32_0 = arith.constant 0 : i32
    %2 = arith.cmpi ne, %1, %c0_i32_0 : i32
    scf.if %2 {
      %cst_10 = arith.constant 0.000000e+00 : f32
      %12 = vector.broadcast %cst_10 : f32 to vector<128x16xf32>
      %c0_11 = arith.constant 0 : index
      %c0_12 = arith.constant 0 : index
      %13 = vector.load %arg7[%c0_11, %c0_12] : memref<128x16xf32, #tpu.memory_space<vmem>>, vector<128x16xf32>
      tpu.vector_store %arg7[%c0_11, %c0_12], %12 {strides = array<i32>} : memref<128x16xf32, #tpu.memory_space<vmem>>, vector<128x16xf32>,
    } else {
    }
    %c0 = arith.constant 0 : index
    %c0_1 = arith.constant 0 : index
    %3 = vector.load %arg7[%c0, %c0_1] : memref<128x16xf32, #tpu.memory_space<vmem>>, vector<128x16xf32>
    %c0_2 = arith.constant 0 : index
    %c0_3 = arith.constant 0 : index
    %4 = vector.load %arg2[%c0_2, %c0_3] : memref<128x432xbf16, #tpu.memory_space<vmem>>, vector<128x432xbf16>
    %c0_4 = arith.constant 0 : index
    %c0_5 = arith.constant 0 : index
    %5 = vector.load %arg3[%c0_4, %c0_5] : memref<432x16xbf16, #tpu.memory_space<vmem>>, vector<432x16xbf16>
    %cst = arith.constant dense<0.000000e+00> : vector<128x16xf32>
    %6 = tpu.matmul %4, %5, %cst {dimension_numbers = #tpu.dot_dimension_numbers<[1], [0], [0], [1], [0, 0, 1, 1], [], []>} : vector<128x432xbf16>, vector<432x16xbf16>, vector<128x16xf32> -> vector<128x16xf32>
    %7 = arith.addf %3, %6 : vector<128x16xf32>
    %c0_6 = arith.constant 0 : index
    %c0_7 = arith.constant 0 : index
    %8 = vector.load %arg7[%c0_6, %c0_7] : memref<128x16xf32, #tpu.memory_space<vmem>>, vector<128x16xf32>
    tpu.vector_store %arg7[%c0_6, %c0_7], %7 {strides = array<i32>} : memref<128x16xf32, #tpu.memory_space<vmem>>, vector<128x16xf32>,
    %c0_i32_8 = arith.constant 0 : i32
    %9 = arith.cmpi eq, %arg1, %c0_i32_8 : i32
    %10 = arith.extui %9 : i1 to i32
    %c0_i32_9 = arith.constant 0 : i32
    %11 = arith.cmpi ne, %10, %c0_i32_9 : i32
    scf.if %11 {
      %c0_10 = arith.constant 0 : index
      %c0_11 = arith.constant 0 : index
      %12 = vector.load %arg7[%c0_10, %c0_11] : memref<128x16xf32, #tpu.memory_space<vmem>>, vector<128x16xf32>
      %c0_12 = arith.constant 0 : index
      %c0_13 = arith.constant 0 : index
      %13 = vector.load %arg4[%c0_12, %c0_13] : memref<128x16xf32, #tpu.memory_space<vmem>>, vector<128x16xf32>
      %14 = arith.addf %12, %13 : vector<128x16xf32>
      %c0_14 = arith.constant 0 : index
      %c0_15 = arith.constant 0 : index
      %15 = vector.load %arg5[%c0_14, %c0_15] : memref<128x16xf32, #tpu.memory_space<vmem>>, vector<128x16xf32>
      tpu.vector_store %arg5[%c0_14, %c0_15], %14 {strides = array<i32>} : memref<128x16xf32, #tpu.memory_space<vmem>>, vector<128x16xf32>,
      %cst_16 = arith.constant dense<0.000000e+00> : vector<16xf32>
      %16 = vector.multi_reduction <add>, %14, %cst_16 [0] : vector<128x16xf32> to vector<16xf32>
      %17 = vector.shape_cast %16 : vector<16xf32> to vector<1x16xf32>
      %18 = arith.mulf %14, %14 : vector<128x16xf32>
      %cst_17 = arith.constant dense<0.000000e+00> : vector<16xf32>
      %19 = vector.multi_reduction <add>, %18, %cst_17 [0] : vector<128x16xf32> to vector<16xf32>
      %20 = vector.shape_cast %19 : vector<16xf32> to vector<1x16xf32>
      %21 = tpu.concatenate %17, %20 in 0 : vector<1x16xf32>, vector<1x16xf32> -> vector<2x16xf32>
      %22 = vector.shape_cast %21 : vector<2x16xf32> to vector<1x2x16xf32>
      %c0_18 = arith.constant 0 : index
      %c0_19 = arith.constant 0 : index
      %c0_20 = arith.constant 0 : index
      %23 = vector.load %arg6[%c0_18, %c0_19, %c0_20] : memref<1x2x16xf32, #tpu.memory_space<vmem>>, vector<1x2x16xf32>
      tpu.vector_store %arg6[%c0_18, %c0_19, %c0_20], %22 {strides = array<i32>} : memref<1x2x16xf32, #tpu.memory_space<vmem>>, vector<1x2x16xf32>,
    } else {
    }
    return
  }
  func.func @transform_0(%arg0: i32, %arg1: i32) -> (i32, i32) {
    %c0_i32 = arith.constant 0 : i32
    return %arg0, %arg1 : i32, i32
  }
  func.func @transform_1(%arg0: i32, %arg1: i32) -> (i32, i32) {
    %c0_i32 = arith.constant 0 : i32
    %c0_i32_0 = arith.constant 0 : i32
    return %arg1, %c0_i32 : i32, i32
  }
  func.func @transform_2(%arg0: i32, %arg1: i32) -> (i32, i32) {
    %c0_i32 = arith.constant 0 : i32
    %c0_i32_0 = arith.constant 0 : i32
    return %arg0, %c0_i32 : i32, i32
  }
  func.func @transform_3(%arg0: i32, %arg1: i32) -> (i32, i32) {
    %c0_i32 = arith.constant 0 : i32
    %c0_i32_0 = arith.constant 0 : i32
    return %arg0, %c0_i32 : i32, i32
  }
  func.func @transform_4(%arg0: i32, %arg1: i32) -> (i32, i32, i32) {
    %c0_i32 = arith.constant 0 : i32
    %c0_i32_0 = arith.constant 0 : i32
    %c0_i32_1 = arith.constant 0 : i32
    return %arg0, %c0_i32, %c0_i32_0 : i32, i32, i32
  }
}

module attributes {stable_mosaic.version = 11 : i64} {
  func.func @kernel(%arg0: i32, %arg1: memref<128x16xf32, #tpu.memory_space<vmem>>, %arg2: memref<1x16xf32, #tpu.memory_space<vmem>>, %arg3: memref<1x16xf32, #tpu.memory_space<vmem>>, %arg4: memref<128x16xf32, #tpu.memory_space<vmem>>) attributes {dimension_semantics = [#tpu.dimension_semantics<parallel>], iteration_bounds = array<i64: 1>, scalar_prefetch = 0 : i64, scratch_operands = 0 : i64, tpu.core_type = #tpu.core_type<tc>, window_params = [{transform_indices = @transform_0, window_bounds = array<i64: 128, 16>}, {pipeline_mode = #tpu.pipeline_mode<synchronous>, transform_indices = @transform_1, window_bounds = array<i64: 1, 16>}, {pipeline_mode = #tpu.pipeline_mode<synchronous>, transform_indices = @transform_2, window_bounds = array<i64: 1, 16>}, {transform_indices = @transform_3, window_bounds = array<i64: 128, 16>}]} {
    %c0 = arith.constant 0 : index
    %c0_0 = arith.constant 0 : index
    %0 = vector.load %arg1[%c0, %c0_0] : memref<128x16xf32, #tpu.memory_space<vmem>>, vector<128x16xf32>
    %c0_1 = arith.constant 0 : index
    %c0_2 = arith.constant 0 : index
    %1 = vector.load %arg2[%c0_1, %c0_2] : memref<1x16xf32, #tpu.memory_space<vmem>>, vector<1x16xf32>
    %2 = vector.broadcast %1 : vector<1x16xf32> to vector<128x16xf32>
    %3 = arith.mulf %0, %2 : vector<128x16xf32>
    %c0_3 = arith.constant 0 : index
    %c0_4 = arith.constant 0 : index
    %4 = vector.load %arg3[%c0_3, %c0_4] : memref<1x16xf32, #tpu.memory_space<vmem>>, vector<1x16xf32>
    %5 = vector.broadcast %4 : vector<1x16xf32> to vector<128x16xf32>
    %6 = arith.addf %3, %5 : vector<128x16xf32>
    %cst = arith.constant 0.000000e+00 : f32
    %7 = vector.broadcast %cst : f32 to vector<128x16xf32>
    %8 = arith.maximumf %6, %7 : vector<128x16xf32>
    %c0_5 = arith.constant 0 : index
    %c0_6 = arith.constant 0 : index
    %9 = vector.load %arg4[%c0_5, %c0_6] : memref<128x16xf32, #tpu.memory_space<vmem>>, vector<128x16xf32>
    tpu.vector_store %arg4[%c0_5, %c0_6], %8 {strides = array<i32>} : memref<128x16xf32, #tpu.memory_space<vmem>>, vector<128x16xf32>,
    return
  }
  func.func @transform_0(%arg0: i32) -> (i32, i32) {
    %c0_i32 = arith.constant 0 : i32
    %c0_i32_0 = arith.constant 0 : i32
    return %arg0, %c0_i32 : i32, i32
  }
  func.func @transform_1(%arg0: i32) -> (i32, i32) {
    %c0_i32 = arith.constant 0 : i32
    %c0_i32_0 = arith.constant 0 : i32
    %c0_i32_1 = arith.constant 0 : i32
    return %c0_i32, %c0_i32_0 : i32, i32
  }
  func.func @transform_2(%arg0: i32) -> (i32, i32) {
    %c0_i32 = arith.constant 0 : i32
    %c0_i32_0 = arith.constant 0 : i32
    %c0_i32_1 = arith.constant 0 : i32
    return %c0_i32, %c0_i32_0 : i32, i32
  }
  func.func @transform_3(%arg0: i32) -> (i32, i32) {
    %c0_i32 = arith.constant 0 : i32
    %c0_i32_0 = arith.constant 0 : i32
    return %arg0, %c0_i32 : i32, i32
  }
}

</mosaic_0001>

<llo_original>
// kernel: self_transformer_layer.9
$region0: #{self_transformer_layer.9}
  #allocation0 [shape = 'u32[]', space=smem, size = 0x4, offset = 0x4, fixed_abs, tag = 'smem constant byte address 0x4 - core index']
  #allocation1 [shape = 'u32[144,128]{1,0:T(1,128)}', space=vmem, size = 0x12000, scoped, tag = 'internal scratch']
  #allocation2 [shape = 'f32[128,32]{1,0:T(8,128)}', space=vmem, size = 0x10000, scoped, tag = 'scratch operand']
  %s0 = inlined_call_operand.vmem [shape: bf16[128,108], index: 0, kind: input, shape index: {}]
  %s1 = inlined_call_operand.vmem [shape: bf16[108,32], index: 1, kind: input, shape index: {}]
  %s2 = inlined_call_operand.vmem [shape: f32[128,32], index: 2, kind: output, shape index: {}]
  %s3 = sld [smem:[#allocation0]]
  $region26: #{self_transformer_layer.9} parent=0
    _
  %s5 = ssub.s32 1, %s3
  %s6 = scalar_select 0, %s5, %s3
  // Predicated region
  $region2: #{self_transformer_layer.9} parent=0 // pred_check
    _
  $region3: #{self_transformer_layer.9} parent=0 // pred_check_branch
    %8 = sbr.rel (0) target = $region5
  $region4: #{self_transformer_layer.9} parent=0 // pred_region
    _
  $region5: #{self_transformer_layer.9} parent=0 // pred_fallthru
    _
  // Predicated region
  $region6: #{self_transformer_layer.9} parent=0 // pred_check
    _
  $region7: #{self_transformer_layer.9} parent=0 // pred_check_branch
    %10 = sbr.rel (0) target = $region9
  $region8: #{self_transformer_layer.9} parent=0 // pred_region
    _
  $region9: #{self_transformer_layer.9} parent=0 // pred_fallthru
    _
  %p12 = scmp.eq.s32.totalorder 0, 0
  // Predicated region
  $region10: #{self_transformer_layer.9} parent=0 // pred_check
    %p13 = pneg %p12
  $region11: #{self_transformer_layer.9} parent=0 // pred_check_branch
    %15 = sbr.rel (%p13) target = $region13
  $region12: #{self_transformer_layer.9} parent=0 // pred_region
    %vm16 = vcmask 261120
    %17 = vst.msk [vmem:[#allocation2] sm:$0xff] %vm16, 0.0
    %18 = vst.msk [vmem:[#allocation2 + $0x8] sm:$0xff] %vm16, 0.0
    %19 = vst.msk [vmem:[#allocation2 + $0x10] sm:$0xff] %vm16, 0.0
    %20 = vst.msk [vmem:[#allocation2 + $0x18] sm:$0xff] %vm16, 0.0
    %21 = vst.msk [vmem:[#allocation2 + $0x20] sm:$0xff] %vm16, 0.0
    %22 = vst.msk [vmem:[#allocation2 + $0x28] sm:$0xff] %vm16, 0.0
    %23 = vst.msk [vmem:[#allocation2 + $0x30] sm:$0xff] %vm16, 0.0
    %24 = vst.msk [vmem:[#allocation2 + $0x38] sm:$0xff] %vm16, 0.0
    %25 = vst.msk [vmem:[#allocation2 + $0x40] sm:$0xff] %vm16, 0.0
    %26 = vst.msk [vmem:[#allocation2 + $0x48] sm:$0xff] %vm16, 0.0
    %27 = vst.msk [vmem:[#allocation2 + $0x50] sm:$0xff] %vm16, 0.0
    %28 = vst.msk [vmem:[#allocation2 + $0x58] sm:$0xff] %vm16, 0.0
    %29 = vst.msk [vmem:[#allocation2 + $0x60] sm:$0xff] %vm16, 0.0
    %30 = vst.msk [vmem:[#allocation2 + $0x68] sm:$0xff] %vm16, 0.0
    %31 = vst.msk [vmem:[#allocation2 + $0x70] sm:$0xff] %vm16, 0.0
    %32 = vst.msk [vmem:[#allocation2 + $0x78] sm:$0xff] %vm16, 0.0
  $region13: #{self_transformer_layer.9} parent=0 // pred_fallthru
    _
  %v33 = vld [vmem:[#allocation2] sm:$0xff]
  %v34 = vld [vmem:[#allocation2 + $0x8] sm:$0xff]
  %v35 = vld [vmem:[#allocation2 + $0x10] sm:$0xff]
  %v36 = vld [vmem:[#allocation2 + $0x18] sm:$0xff]
  %v37 = vld [vmem:[#allocation2 + $0x20] sm:$0xff]
  %v38 = vld [vmem:[#allocation2 + $0x28] sm:$0xff]
  %v39 = vld [vmem:[#allocation2 + $0x30] sm:$0xff]
  %v40 = vld [vmem:[#allocation2 + $0x38] sm:$0xff]
  %v41 = vld [vmem:[#allocation2 + $0x40] sm:$0xff]
  %v42 = vld [vmem:[#allocation2 + $0x48] sm:$0xff]
  %v43 = vld [vmem:[#allocation2 + $0x50] sm:$0xff]
  %v44 = vld [vmem:[#allocation2 + $0x58] sm:$0xff]
  %v45 = vld [vmem:[#allocation2 + $0x60] sm:$0xff]
  %v46 = vld [vmem:[#allocation2 + $0x68] sm:$0xff]
  %v47 = vld [vmem:[#allocation2 + $0x70] sm:$0xff]
  %v48 = vld [vmem:[#allocation2 + $0x78] sm:$0xff]
  %v49 = vld [vmem:[%s0] sm:$0xf]
  %v50 = vld [vmem:[%s0 + $0x4] sm:$0xf]
  %v51 = vld [vmem:[%s0 + $0x8] sm:$0xf]
  %v52 = vld [vmem:[%s0 + $0xc] sm:$0xf]
  %v53 = vld [vmem:[%s0 + $0x10] sm:$0xf]
  %v54 = vld [vmem:[%s0 + $0x14] sm:$0xf]
  %v55 = vld [vmem:[%s0 + $0x18] sm:$0xf]
  %v56 = vld [vmem:[%s0 + $0x1c] sm:$0xf]
  %v57 = vld [vmem:[%s0 + $0x20] sm:$0xf]
  %v58 = vld [vmem:[%s0 + $0x24] sm:$0xf]
  %v59 = vld [vmem:[%s0 + $0x28] sm:$0xf]
  %v60 = vld [vmem:[%s0 + $0x2c] sm:$0xf]
  %v61 = vld [vmem:[%s0 + $0x30] sm:$0xf]
  %v62 = vld [vmem:[%s0 + $0x34] sm:$0xf]
  %v63 = vld [vmem:[%s0 + $0x38] sm:$0xf]
  %v64 = vld [vmem:[%s0 + $0x3c] sm:$0xf]
  %v65 = vld [vmem:[%s1] sm:$0xf]
  %v66 = vld [vmem:[%s1 + $0x4] sm:$0xf]
  %v67 = vld [vmem:[%s1 + $0x8] sm:$0xf]
  %v68 = vld [vmem:[%s1 + $0xc] sm:$0xf]
  %v69 = vld [vmem:[%s1 + $0x10] sm:$0xf]
  %v70 = vld [vmem:[%s1 + $0x14] sm:$0xf]
  %v71 = vld [vmem:[%s1 + $0x18] sm:$0xf]
  %v72 = vld [vmem:[%s1 + $0x1c] sm:$0xf]
  %v73 = vld [vmem:[%s1 + $0x20] sm:$0xf]
  %v74 = vld [vmem:[%s1 + $0x24] sm:$0xf]
  %v75 = vld [vmem:[%s1 + $0x28] sm:$0xf]
  %v76 = vld [vmem:[%s1 + $0x2c] sm:$0xf]
  %v77 = vld [vmem:[%s1 + $0x30] sm:$0xf]
  %v78 = vld [vmem:[%s1 + $0x34] sm:$0x3]
  %v95 = vunpack.c.l.b16 %v49
  %v96 = vunpack.c.l.b16 %v50
  %v97 = vunpack.c.l.b16 %v51
  %v98 = vunpack.c.l.b16 %v52
  %v99 = vunpack.c.l.b16 %v53
  %v100 = vunpack.c.l.b16 %v54
  %v101 = vunpack.c.l.b16 %v55
  %v102 = vunpack.c.l.b16 %v56
  %v103 = vunpack.c.l.b16 %v57
  %v104 = vunpack.c.l.b16 %v58
  %v105 = vunpack.c.l.b16 %v59
  %v106 = vunpack.c.l.b16 %v60
  %v107 = vunpack.c.l.b16 %v61
  %v108 = vunpack.c.l.b16 %v62
  %v109 = vunpack.c.l.b16 %v63
  %v110 = vunpack.c.l.b16 %v64
  %v111 = vpack.c.b16 %v96, %v95
  %v112 = vpack.c.b16 %v98, %v97
  %v113 = vpack.c.b16 %v100, %v99
  %v114 = vpack.c.b16 %v102, %v101
  %v115 = vpack.c.b16 %v104, %v103
  %v116 = vpack.c.b16 %v106, %v105
  %v117 = vpack.c.b16 %v108, %v107
  %v118 = vpack.c.b16 %v110, %v109
  %v133 = vunpack.c.l.b16 %v65
  %v134 = vunpack.c.l.b16 %v66
  %v135 = vunpack.c.l.b16 %v67
  %v136 = vunpack.c.l.b16 %v68
  %v137 = vunpack.c.l.b16 %v69
  %v138 = vunpack.c.l.b16 %v70
  %v139 = vunpack.c.l.b16 %v71
  %v140 = vunpack.c.l.b16 %v72
  %v141 = vunpack.c.l.b16 %v73
  %v142 = vunpack.c.l.b16 %v74
  %v143 = vunpack.c.l.b16 %v75
  %v144 = vunpack.c.l.b16 %v76
  %v145 = vunpack.c.l.b16 %v77
  %v146 = vunpack.c.l.b16 %v78
  %v147 = vpack.c.b16 %v134, %v133
  %v148 = vpack.c.b16 %v136, %v135
  %v149 = vpack.c.b16 %v138, %v137
  %v150 = vpack.c.b16 %v140, %v139
  %v151 = vpack.c.b16 %v142, %v141
  %v152 = vpack.c.b16 %v144, %v143
  %v153 = vpack.c.b16 %v146, %v145
  %vm160 = vcmask 883712
  %v162 = vsel %vm160, %v111, 0
  %v165 = vsel %vm160, %v112, 0
  %v168 = vsel %vm160, %v113, 0
  %v171 = vsel %vm160, %v114, 0
  %v174 = vsel %vm160, %v115, 0
  %v177 = vsel %vm160, %v116, 0
  %v180 = vsel %vm160, %v117, 0
  %v183 = vsel %vm160, %v118, 0
  %vm185 = vcmask 1045504
  %v187 = vsel %vm185, %v153, 0
  %189 = vmatprep.subr.bf16.mxu0 0
  %190 = vmatpush1.bf16.msra.mxu0 0
  %191 = vmatprep.subr.bf16.mxu0 0
  %192 = vmatpush1.bf16.msra.mxu0 %v187
  %193 = vmatprep.subr.bf16.mxu0 0
  %194 = vmatpush1.bf16.msra.mxu0 %v152
  %195 = vmatprep.subr.bf16.mxu0 0
  %196 = vmatpush1.bf16.msra.mxu0 %v151
  %197 = vmatprep.subr.bf16.mxu0 0
  %198 = vmatpush1.bf16.msra.mxu0 %v150
  %199 = vmatprep.subr.bf16.mxu0 0
  %200 = vmatpush1.bf16.msra.mxu0 %v149
  %201 = vmatprep.subr.bf16.mxu0 0
  %202 = vmatpush1.bf16.msra.mxu0 %v148
  %203 = vmatprep.subr.bf16.mxu0 0
  %204 = vmatpush1.bf16.msra.mxu0 %v147
  %205 = vmatprep.subr.bf16.mxu0 0
  %206 = vmatpush2.bf16.msra.mxu0 0
  %207 = vmatprep.subr.bf16.mxu0 0
  %208 = vmatpush2.bf16.msra.mxu0 0
  %209 = vmatprep.subr.bf16.mxu0 0
  %210 = vmatpush2.bf16.msra.mxu0 0
  %211 = vmatprep.subr.bf16.mxu0 0
  %212 = vmatpush2.bf16.msra.mxu0 0
  %213 = vmatprep.subr.bf16.mxu0 0
  %214 = vmatpush2.bf16.msra.mxu0 0
  %215 = vmatprep.subr.bf16.mxu0 0
  %216 = vmatpush2.bf16.msra.mxu0 0
  %217 = vmatprep.subr.bf16.mxu0 0
  %218 = vmatpush2.bf16.msra.mxu0 0
  %219 = vmatprep.subr.bf16.mxu0 0
  %220 = vmatpush2.bf16.msra.mxu0 0
  %221 = vmatprep.mubr.bf16.mxu0 0
  %222 = vmatmul.mubr.bf16.gmra.mxu0 %v162
  %v223 = vpop.f32.mrf.mxu0
  %v224 = vadd.f32 0.0, %v223
  %v225 = vpop.f32.mrf.mxu0
  %v226 = vpop.f32.mrf.mxu0
  %v227 = vadd.f32 0.0, %v226
  %v228 = vpop.f32.mrf.mxu0
  %229 = vmatprep.mubr.bf16.mxu0 0
  %230 = vmatmul.mubr.bf16.gmra.mxu0 %v165
  %v231 = vpop.f32.mrf.mxu0
  %v232 = vadd.f32 0.0, %v231
  %v233 = vpop.f32.mrf.mxu0
  %v234 = vpop.f32.mrf.mxu0
  %v235 = vadd.f32 0.0, %v234
  %v236 = vpop.f32.mrf.mxu0
  %237 = vmatprep.mubr.bf16.mxu0 0
  %238 = vmatmul.mubr.bf16.gmra.mxu0 %v168
  %v239 = vpop.f32.mrf.mxu0
  %v240 = vadd.f32 0.0, %v239
  %v241 = vpop.f32.mrf.mxu0
  %v242 = vpop.f32.mrf.mxu0
  %v243 = vadd.f32 0.0, %v242
  %v244 = vpop.f32.mrf.mxu0
  %245 = vmatprep.mubr.bf16.mxu0 0
  %246 = vmatmul.mubr.bf16.gmra.mxu0 %v171
  %v247 = vpop.f32.mrf.mxu0
  %v248 = vadd.f32 0.0, %v247
  %v249 = vpop.f32.mrf.mxu0
  %v250 = vpop.f32.mrf.mxu0
  %v251 = vadd.f32 0.0, %v250
  %v252 = vpop.f32.mrf.mxu0
  %253 = vmatprep.mubr.bf16.mxu0 0
  %254 = vmatmul.mubr.bf16.gmra.mxu0 %v174
  %v255 = vpop.f32.mrf.mxu0
  %v256 = vadd.f32 0.0, %v255
  %v257 = vpop.f32.mrf.mxu0
  %v258 = vpop.f32.mrf.mxu0
  %v259 = vadd.f32 0.0, %v258
  %v260 = vpop.f32.mrf.mxu0
  %261 = vmatprep.mubr.bf16.mxu0 0
  %262 = vmatmul.mubr.bf16.gmra.mxu0 %v177
  %v263 = vpop.f32.mrf.mxu0
  %v264 = vadd.f32 0.0, %v263
  %v265 = vpop.f32.mrf.mxu0
  %v266 = vpop.f32.mrf.mxu0
  %v267 = vadd.f32 0.0, %v266
  %v268 = vpop.f32.mrf.mxu0
  %269 = vmatprep.mubr.bf16.mxu0 0
  %270 = vmatmul.mubr.bf16.gmra.mxu0 %v180
  %v271 = vpop.f32.mrf.mxu0
  %v272 = vadd.f32 0.0, %v271
  %v273 = vpop.f32.mrf.mxu0
  %v274 = vpop.f32.mrf.mxu0
  %v275 = vadd.f32 0.0, %v274
  %v276 = vpop.f32.mrf.mxu0
  %277 = vmatprep.mubr.bf16.mxu0 0
  %278 = vmatmul.mubr.bf16.gmra.mxu0 %v183
  %v279 = vpop.f32.mrf.mxu0
  %v280 = vadd.f32 0.0, %v279
  %v281 = vpop.f32.mrf.mxu0
  %v282 = vpop.f32.mrf.mxu0
  %v283 = vadd.f32 0.0, %v282
  %v284 = vpop.f32.mrf.mxu0
  %285 = vdwg.mxu0
  %v286 = vadd.f32 %v33, %v224
  %v287 = vadd.f32 %v34, %v227
  %v288 = vadd.f32 %v35, %v232
  %v289 = vadd.f32 %v36, %v235
  %v290 = vadd.f32 %v37, %v240
  %v291 = vadd.f32 %v38, %v243
  %v292 = vadd.f32 %v39, %v248
  %v293 = vadd.f32 %v40, %v251
  %v294 = vadd.f32 %v41, %v256
  %v295 = vadd.f32 %v42, %v259
  %v296 = vadd.f32 %v43, %v264
  %v297 = vadd.f32 %v44, %v267
  %v298 = vadd.f32 %v45, %v272
  %v299 = vadd.f32 %v46, %v275
  %v300 = vadd.f32 %v47, %v280
  %v301 = vadd.f32 %v48, %v283
  %vm302 = vcmask 261120
  %303 = vst.msk [vmem:[#allocation2] sm:$0xff] %vm302, %v286
  %304 = vst.msk [vmem:[#allocation2 + $0x8] sm:$0xff] %vm302, %v287
  %305 = vst.msk [vmem:[#allocation2 + $0x10] sm:$0xff] %vm302, %v288
  %306 = vst.msk [vmem:[#allocation2 + $0x18] sm:$0xff] %vm302, %v289
  %307 = vst.msk [vmem:[#allocation2 + $0x20] sm:$0xff] %vm302, %v290
  %308 = vst.msk [vmem:[#allocation2 + $0x28] sm:$0xff] %vm302, %v291
  %309 = vst.msk [vmem:[#allocation2 + $0x30] sm:$0xff] %vm302, %v292
  %310 = vst.msk [vmem:[#allocation2 + $0x38] sm:$0xff] %vm302, %v293
  %311 = vst.msk [vmem:[#allocation2 + $0x40] sm:$0xff] %vm302, %v294
  %312 = vst.msk [vmem:[#allocation2 + $0x48] sm:$0xff] %vm302, %v295
  %313 = vst.msk [vmem:[#allocation2 + $0x50] sm:$0xff] %vm302, %v296
  %314 = vst.msk [vmem:[#allocation2 + $0x58] sm:$0xff] %vm302, %v297
  %315 = vst.msk [vmem:[#allocation2 + $0x60] sm:$0xff] %vm302, %v298
  %316 = vst.msk [vmem:[#allocation2 + $0x68] sm:$0xff] %vm302, %v299
  %317 = vst.msk [vmem:[#allocation2 + $0x70] sm:$0xff] %vm302, %v300
  %318 = vst.msk [vmem:[#allocation2 + $0x78] sm:$0xff] %vm302, %v301
  // Predicated region
  $region14: #{self_transformer_layer.9} parent=0 // pred_check
    %p319 = pneg %p12
  $region15: #{self_transformer_layer.9} parent=0 // pred_check_branch
    %321 = sbr.rel (%p319) target = $region17
  $region16: #{self_transformer_layer.9} parent=0 // pred_region
    %v322 = vld [vmem:[#allocation2] sm:$0xff]
    %v323 = vld [vmem:[#allocation2 + $0x8] sm:$0xff]
    %v324 = vld [vmem:[#allocation2 + $0x10] sm:$0xff]
    %v325 = vld [vmem:[#allocation2 + $0x18] sm:$0xff]
    %v326 = vld [vmem:[#allocation2 + $0x20] sm:$0xff]
    %v327 = vld [vmem:[#allocation2 + $0x28] sm:$0xff]
    %v328 = vld [vmem:[#allocation2 + $0x30] sm:$0xff]
    %v329 = vld [vmem:[#allocation2 + $0x38] sm:$0xff]
    %v330 = vld [vmem:[#allocation2 + $0x40] sm:$0xff]
    %v331 = vld [vmem:[#allocation2 + $0x48] sm:$0xff]
    %v332 = vld [vmem:[#allocation2 + $0x50] sm:$0xff]
    %v333 = vld [vmem:[#allocation2 + $0x58] sm:$0xff]
    %v334 = vld [vmem:[#allocation2 + $0x60] sm:$0xff]
    %v335 = vld [vmem:[#allocation2 + $0x68] sm:$0xff]
    %v336 = vld [vmem:[#allocation2 + $0x70] sm:$0xff]
    %v337 = vld [vmem:[#allocation2 + $0x78] sm:$0xff]
    %338 = vst.msk [vmem:[%s2] sm:$0xff] %vm302, %v322
    %339 = vst.msk [vmem:[%s2 + $0x8] sm:$0xff] %vm302, %v323
    %340 = vst.msk [vmem:[%s2 + $0x10] sm:$0xff] %vm302, %v324
    %341 = vst.msk [vmem:[%s2 + $0x18] sm:$0xff] %vm302, %v325
    %342 = vst.msk [vmem:[%s2 + $0x20] sm:$0xff] %vm302, %v326
    %343 = vst.msk [vmem:[%s2 + $0x28] sm:$0xff] %vm302, %v327
    %344 = vst.msk [vmem:[%s2 + $0x30] sm:$0xff] %vm302, %v328
    %345 = vst.msk [vmem:[%s2 + $0x38] sm:$0xff] %vm302, %v329
    %346 = vst.msk [vmem:[%s2 + $0x40] sm:$0xff] %vm302, %v330
    %347 = vst.msk [vmem:[%s2 + $0x48] sm:$0xff] %vm302, %v331
    %348 = vst.msk [vmem:[%s2 + $0x50] sm:$0xff] %vm302, %v332
    %349 = vst.msk [vmem:[%s2 + $0x58] sm:$0xff] %vm302, %v333
    %350 = vst.msk [vmem:[%s2 + $0x60] sm:$0xff] %vm302, %v334
    %351 = vst.msk [vmem:[%s2 + $0x68] sm:$0xff] %vm302, %v335
    %352 = vst.msk [vmem:[%s2 + $0x70] sm:$0xff] %vm302, %v336
    %353 = vst.msk [vmem:[%s2 + $0x78] sm:$0xff] %vm302, %v337
  $region17: #{self_transformer_layer.9} parent=0 // pred_fallthru
    _
  // Predicated region
  $region18: #{self_transformer_layer.9} parent=0 // pred_check
    _
  $region19: #{self_transformer_layer.9} parent=0 // pred_check_branch
    %355 = sbr.rel (0) target = $region21
  $region20: #{self_transformer_layer.9} parent=0 // pred_region
    _
  $region21: #{self_transformer_layer.9} parent=0 // pred_fallthru
    _
  // Predicated region
  $region22: #{self_transformer_layer.9} parent=0 // pred_check
    _
  $region23: #{self_transformer_layer.9} parent=0 // pred_check_branch
    %357 = sbr.rel (0) target = $region25
  $region24: #{self_transformer_layer.9} parent=0 // pred_region
    _
  $region25: #{self_transformer_layer.9} parent=0 // pred_fallthru
    _

// kernel: self_transformer_layer.10
$region0: #{self_transformer_layer.10}
  #allocation0 [shape = 'u32[]', space=smem, size = 0x4, offset = 0x4, fixed_abs, tag = 'smem constant byte address 0x4 - core index']
  #allocation1 [shape = 'u32[144,128]{1,0:T(1,128)}', space=vmem, size = 0x12000, scoped, tag = 'internal scratch']
  #allocation2 [shape = 'f32[16,16]{1,0:T(8,128)}', space=vmem, size = 0x2000, scoped, tag = 'scratch operand']
  %s0 = inlined_call_operand.vmem [shape: bf16[16,128], index: 0, kind: input, shape index: {}]
  %s1 = inlined_call_operand.vmem [shape: bf16[128,16], index: 1, kind: input, shape index: {}]
  %s2 = inlined_call_operand.vmem [shape: f32[16,16], index: 2, kind: output, shape index: {0}]
  %s3 = inlined_call_operand.vmem [shape: f32[1,2,16], index: 3, kind: output, shape index: {1}]
  %4 = xla_tuple %s2, %s3
  %s5 = sld [smem:[#allocation0]]
  $region34: #{self_transformer_layer.10} parent=0
    _
  %s7 = ssub.s32 1, %s5
  %s8 = scalar_select 0, %s7, %s5
  // Predicated region
  $region2: #{self_transformer_layer.10} parent=0 // pred_check
    _
  $region3: #{self_transformer_layer.10} parent=0 // pred_check_branch
    %10 = sbr.rel (0) target = $region5
  $region4: #{self_transformer_layer.10} parent=0 // pred_region
    _
  $region5: #{self_transformer_layer.10} parent=0 // pred_fallthru
    _
  // Predicated region
  $region6: #{self_transformer_layer.10} parent=0 // pred_check
    _
  $region7: #{self_transformer_layer.10} parent=0 // pred_check_branch
    %12 = sbr.rel (0) target = $region9
  $region8: #{self_transformer_layer.10} parent=0 // pred_region
    _
  $region9: #{self_transformer_layer.10} parent=0 // pred_fallthru
    _
  %p14 = scmp.eq.s32.totalorder 0, 0
  // Predicated region
  $region10: #{self_transformer_layer.10} parent=0 // pred_check
    %p15 = pneg %p14
  $region11: #{self_transformer_layer.10} parent=0 // pred_check_branch
    %17 = sbr.rel (%p15) target = $region13
  $region12: #{self_transformer_layer.10} parent=0 // pred_region
    %vm18 = vcmask 130048
    %19 = vst.msk [vmem:[#allocation2] sm:$0xff] %vm18, 0.0
    %20 = vst.msk [vmem:[#allocation2 + $0x8] sm:$0xff] %vm18, 0.0
  $region13: #{self_transformer_layer.10} parent=0 // pred_fallthru
    _
  %v21 = vld [vmem:[#allocation2] sm:$0xff]
  %v22 = vld [vmem:[#allocation2 + $0x8] sm:$0xff]
  %v23 = vld [vmem:[%s0] sm:$0xf]
  %v24 = vld [vmem:[%s0 + $0x4] sm:$0xf]
  %v25 = vld [vmem:[%s1] sm:$0xf]
  %v26 = vld [vmem:[%s1 + $0x4] sm:$0xf]
  %v27 = vld [vmem:[%s1 + $0x8] sm:$0xf]
  %v28 = vld [vmem:[%s1 + $0xc] sm:$0xf]
  %v29 = vld [vmem:[%s1 + $0x10] sm:$0xf]
  %v30 = vld [vmem:[%s1 + $0x14] sm:$0xf]
  %v31 = vld [vmem:[%s1 + $0x18] sm:$0xf]
  %v32 = vld [vmem:[%s1 + $0x1c] sm:$0xf]
  %v33 = vld [vmem:[%s1 + $0x20] sm:$0xf]
  %v34 = vld [vmem:[%s1 + $0x24] sm:$0xf]
  %v35 = vld [vmem:[%s1 + $0x28] sm:$0xf]
  %v36 = vld [vmem:[%s1 + $0x2c] sm:$0xf]
  %v37 = vld [vmem:[%s1 + $0x30] sm:$0xf]
  %v38 = vld [vmem:[%s1 + $0x34] sm:$0xf]
  %v39 = vld [vmem:[%s1 + $0x38] sm:$0xf]
  %v40 = vld [vmem:[%s1 + $0x3c] sm:$0xf]
  %v43 = vunpack.c.l.b16 %v23
  %v44 = vunpack.c.l.b16 %v24
  %v45 = vpack.c.b16 %v44, %v43
  %v63 = vunpack.c.l.b16 %v25
  %v64 = vunpack.c.l.b16 %v26
  %v65 = vunpack.c.l.b16 %v27
  %v66 = vunpack.c.l.b16 %v28
  %v67 = vunpack.c.l.b16 %v29
  %v68 = vunpack.c.l.b16 %v30
  %v69 = vunpack.c.l.b16 %v31
  %v70 = vunpack.c.l.b16 %v32
  %v71 = vunpack.c.l.b16 %v33
  %v72 = vunpack.c.l.b16 %v34
  %v73 = vunpack.c.l.b16 %v35
  %v74 = vunpack.c.l.b16 %v36
  %v75 = vunpack.c.l.b16 %v37
  %v76 = vunpack.c.l.b16 %v38
  %v77 = vunpack.c.l.b16 %v39
  %v78 = vunpack.c.l.b16 %v40
  %v79 = vpack.c.b16 %v64, %v63
  %v80 = vpack.c.b16 %v66, %v65
  %v81 = vpack.c.b16 %v68, %v67
  %v82 = vpack.c.b16 %v70, %v69
  %v83 = vpack.c.b16 %v72, %v71
  %v84 = vpack.c.b16 %v74, %v73
  %v85 = vpack.c.b16 %v76, %v75
  %v86 = vpack.c.b16 %v78, %v77
  %95 = vmatprep.subr.bf16.mxu0 0
  %96 = vmatpush1.bf16.msra.mxu0 %v86
  %97 = vmatprep.subr.bf16.mxu0 0
  %98 = vmatpush1.bf16.msra.mxu0 %v85
  %99 = vmatprep.subr.bf16.mxu0 0
  %100 = vmatpush1.bf16.msra.mxu0 %v84
  %101 = vmatprep.subr.bf16.mxu0 0
  %102 = vmatpush1.bf16.msra.mxu0 %v83
  %103 = vmatprep.subr.bf16.mxu0 0
  %104 = vmatpush1.bf16.msra.mxu0 %v82
  %105 = vmatprep.subr.bf16.mxu0 0
  %106 = vmatpush1.bf16.msra.mxu0 %v81
  %107 = vmatprep.subr.bf16.mxu0 0
  %108 = vmatpush1.bf16.msra.mxu0 %v80
  %109 = vmatprep.subr.bf16.mxu0 0
  %110 = vmatpush1.bf16.msra.mxu0 %v79
  %111 = vmatprep.subr.bf16.mxu0 0
  %112 = vmatpush2.bf16.msra.mxu0 0
  %113 = vmatprep.subr.bf16.mxu0 0
  %114 = vmatpush2.bf16.msra.mxu0 0
  %115 = vmatprep.subr.bf16.mxu0 0
  %116 = vmatpush2.bf16.msra.mxu0 0
  %117 = vmatprep.subr.bf16.mxu0 0
  %118 = vmatpush2.bf16.msra.mxu0 0
  %119 = vmatprep.subr.bf16.mxu0 0
  %120 = vmatpush2.bf16.msra.mxu0 0
  %121 = vmatprep.subr.bf16.mxu0 0
  %122 = vmatpush2.bf16.msra.mxu0 0
  %123 = vmatprep.subr.bf16.mxu0 0
  %124 = vmatpush2.bf16.msra.mxu0 0
  %125 = vmatprep.subr.bf16.mxu0 0
  %126 = vmatpush2.bf16.msra.mxu0 0
  %127 = vmatprep.mubr.bf16.mxu0 0
  %128 = vmatmul.mubr.bf16.gmra.mxu0 %v45
  %v129 = vpop.f32.mrf.mxu0
  %v130 = vadd.f32 0.0, %v129
  %v131 = vpop.f32.mrf.mxu0
  %v132 = vpop.f32.mrf.mxu0
  %v133 = vadd.f32 0.0, %v132
  %v134 = vpop.f32.mrf.mxu0
  %135 = vdwg.mxu0
  %v136 = vadd.f32 %v21, %v130
  %v137 = vadd.f32 %v22, %v133
  %vm138 = vcmask 130048
  %139 = vst.msk [vmem:[#allocation2] sm:$0xff] %vm138, %v136
  %140 = vst.msk [vmem:[#allocation2 + $0x8] sm:$0xff] %vm138, %v137
  // Predicated region
  $region14: #{self_transformer_layer.10} parent=0 // pred_check
    %p141 = pneg %p14
  $region15: #{self_transformer_layer.10} parent=0 // pred_check_branch
    %143 = sbr.rel (%p141) target = $region17
  $region16: #{self_transformer_layer.10} parent=0 // pred_region
    %v144 = vld [vmem:[#allocation2] sm:$0xff]
    %v145 = vld [vmem:[#allocation2 + $0x8] sm:$0xff]
    %146 = vst.msk [vmem:[%s2] sm:$0xff] %vm138, %v144
    %147 = vst.msk [vmem:[%s2 + $0x8] sm:$0xff] %vm138, %v145
    %v148 = vsel %vm138, %v144, 0.0
    %v149 = vsel %vm138, %v145, 0.0
    %v150 = vadd.f32 %v148, %v149
    %v151 = vrot.slane %v150, 4
    %v152 = vadd.f32 %v150, %v151
    %v153 = vrot.slane %v152, 2
    %v154 = vadd.f32 %v152, %v153
    %v155 = vrot.slane %v154, 1
    %v156 = vadd.f32 %v154, %v155
    %v157 = vmul.f32 %v144, %v144
    %v158 = vmul.f32 %v145, %v145
    %v159 = vsel %vm138, %v157, 0.0
    %v160 = vsel %vm138, %v158, 0.0
    %v161 = vadd.f32 %v159, %v160
    %v162 = vrot.slane %v161, 4
    %v163 = vadd.f32 %v161, %v162
    %v164 = vrot.slane %v163, 2
    %v165 = vadd.f32 %v163, %v164
    %v166 = vrot.slane %v165, 1
    %v167 = vadd.f32 %v165, %v166
    %vm168 = vcmask 1040384
    %v169 = vsel %vm168, %v156, %v167
    %vm170 = vcmask 123904
    %171 = vst.msk [vmem:[%s3] sm:$0x3] %vm170, %v169
  $region17: #{self_transformer_layer.10} parent=0 // pred_fallthru
    _
  // Predicated region
  $region18: #{self_transformer_layer.10} parent=0 // pred_check
    _
  $region19: #{self_transformer_layer.10} parent=0 // pred_check_branch
    %173 = sbr.rel (0) target = $region21
  $region20: #{self_transformer_layer.10} parent=0 // pred_region
    _
  $region21: #{self_transformer_layer.10} parent=0 // pred_fallthru
    _
  // Predicated region
  $region22: #{self_transformer_layer.10} parent=0 // pred_check
    _
  $region23: #{self_transformer_layer.10} parent=0 // pred_check_branch
    %175 = sbr.rel (0) target = $region25
  $region24: #{self_transformer_layer.10} parent=0 // pred_region
    _
  $region25: #{self_transformer_layer.10} parent=0 // pred_fallthru
    _
  // Predicated region
  $region26: #{self_transformer_layer.10} parent=0 // pred_check
    _
  $region27: #{self_transformer_layer.10} parent=0 // pred_check_branch
    %177 = sbr.rel (0) target = $region29
  $region28: #{self_transformer_layer.10} parent=0 // pred_region
    _
  $region29: #{self_transformer_layer.10} parent=0 // pred_fallthru
    _
  // Predicated region
  $region30: #{self_transformer_layer.10} parent=0 // pred_check
    _
  $region31: #{self_transformer_layer.10} parent=0 // pred_check_branch
    %179 = sbr.rel (0) target = $region33
  $region32: #{self_transformer_layer.10} parent=0 // pred_region
    _
  $region33: #{self_transformer_layer.10} parent=0 // pred_fallthru
    _

// kernel: self_transformer_layer.11
$region0: #{self_transformer_layer.11}
  #allocation0 [shape = 'u32[]', space=smem, size = 0x4, offset = 0x4, fixed_abs, tag = 'smem constant byte address 0x4 - core index']
  #allocation1 [shape = 'u32[144,128]{1,0:T(1,128)}', space=vmem, size = 0x12000, scoped, tag = 'internal scratch']
  #allocation2 [shape = 'f32[16,32]{1,0:T(8,128)}', space=vmem, size = 0x2000, scoped, tag = 'scratch operand']
  %s0 = inlined_call_operand.vmem [shape: bf16[16,16], index: 0, kind: input, shape index: {}]
  %s1 = inlined_call_operand.vmem [shape: bf16[16,32], index: 1, kind: input, shape index: {}]
  %s2 = inlined_call_operand.vmem [shape: f32[1,32], index: 2, kind: input, shape index: {}]
  %s3 = inlined_call_operand.vmem [shape: f32[16,32], index: 3, kind: output, shape index: {}]
  %s4 = sld [smem:[#allocation0]]
  $region30: #{self_transformer_layer.11} parent=0
    _
  %s6 = ssub.s32 1, %s4
  %s7 = scalar_select 0, %s6, %s4
  // Predicated region
  $region2: #{self_transformer_layer.11} parent=0 // pred_check
    _
  $region3: #{self_transformer_layer.11} parent=0 // pred_check_branch
    %9 = sbr.rel (0) target = $region5
  $region4: #{self_transformer_layer.11} parent=0 // pred_region
    _
  $region5: #{self_transformer_layer.11} parent=0 // pred_fallthru
    _
  // Predicated region
  $region6: #{self_transformer_layer.11} parent=0 // pred_check
    _
  $region7: #{self_transformer_layer.11} parent=0 // pred_check_branch
    %11 = sbr.rel (0) target = $region9
  $region8: #{self_transformer_layer.11} parent=0 // pred_region
    _
  $region9: #{self_transformer_layer.11} parent=0 // pred_fallthru
    _
  // Predicated region
  $region10: #{self_transformer_layer.11} parent=0 // pred_check
    _
  $region11: #{self_transformer_layer.11} parent=0 // pred_check_branch
    %13 = sbr.rel (0) target = $region13
  $region12: #{self_transformer_layer.11} parent=0 // pred_region
    _
  $region13: #{self_transformer_layer.11} parent=0 // pred_fallthru
    _
  %p15 = scmp.eq.s32.totalorder 0, 0
  // Predicated region
  $region14: #{self_transformer_layer.11} parent=0 // pred_check
    %p16 = pneg %p15
  $region15: #{self_transformer_layer.11} parent=0 // pred_check_branch
    %18 = sbr.rel (%p16) target = $region17
  $region16: #{self_transformer_layer.11} parent=0 // pred_region
    %vm19 = vcmask 261120
    %20 = vst.msk [vmem:[#allocation2] sm:$0xff] %vm19, 0.0
    %21 = vst.msk [vmem:[#allocation2 + $0x8] sm:$0xff] %vm19, 0.0
  $region17: #{self_transformer_layer.11} parent=0 // pred_fallthru
    _
  %v22 = vld [vmem:[#allocation2] sm:$0xff]
  %v23 = vld [vmem:[#allocation2 + $0x8] sm:$0xff]
  %v24 = vld [vmem:[%s0] sm:$0xf]
  %v25 = vld [vmem:[%s0 + $0x4] sm:$0xf]
  %v26 = vld [vmem:[%s1] sm:$0xf]
  %v27 = vld [vmem:[%s1 + $0x4] sm:$0xf]
  %v30 = vunpack.c.l.b16 %v24
  %v31 = vunpack.c.l.b16 %v25
  %v32 = vpack.c.b16 %v31, %v30
  %v35 = vunpack.c.l.b16 %v26
  %v36 = vunpack.c.l.b16 %v27
  %v37 = vpack.c.b16 %v36, %v35
  %vm39 = vcmask 130048
  %v41 = vsel %vm39, %v32, 0
  %43 = vmatprep.subr.bf16.mxu0 0
  %44 = vmatpush1.bf16.msra.mxu0 0
  %45 = vmatprep.subr.bf16.mxu0 0
  %46 = vmatpush1.bf16.msra.mxu0 0
  %47 = vmatprep.subr.bf16.mxu0 0
  %48 = vmatpush1.bf16.msra.mxu0 0
  %49 = vmatprep.subr.bf16.mxu0 0
  %50 = vmatpush1.bf16.msra.mxu0 0
  %51 = vmatprep.subr.bf16.mxu0 0
  %52 = vmatpush1.bf16.msra.mxu0 0
  %53 = vmatprep.subr.bf16.mxu0 0
  %54 = vmatpush1.bf16.msra.mxu0 0
  %55 = vmatprep.subr.bf16.mxu0 0
  %56 = vmatpush1.bf16.msra.mxu0 0
  %57 = vmatprep.subr.bf16.mxu0 0
  %58 = vmatpush1.bf16.msra.mxu0 %v37
  %59 = vmatprep.subr.bf16.mxu0 0
  %60 = vmatpush2.bf16.msra.mxu0 0
  %61 = vmatprep.subr.bf16.mxu0 0
  %62 = vmatpush2.bf16.msra.mxu0 0
  %63 = vmatprep.subr.bf16.mxu0 0
  %64 = vmatpush2.bf16.msra.mxu0 0
  %65 = vmatprep.subr.bf16.mxu0 0
  %66 = vmatpush2.bf16.msra.mxu0 0
  %67 = vmatprep.subr.bf16.mxu0 0
  %68 = vmatpush2.bf16.msra.mxu0 0
  %69 = vmatprep.subr.bf16.mxu0 0
  %70 = vmatpush2.bf16.msra.mxu0 0
  %71 = vmatprep.subr.bf16.mxu0 0
  %72 = vmatpush2.bf16.msra.mxu0 0
  %73 = vmatprep.subr.bf16.mxu0 0
  %74 = vmatpush2.bf16.msra.mxu0 0
  %75 = vmatprep.mubr.bf16.mxu0 0
  %76 = vmatmul.mubr.bf16.gmra.mxu0 %v41
  %v77 = vpop.f32.mrf.mxu0
  %v78 = vadd.f32 0.0, %v77
  %v79 = vpop.f32.mrf.mxu0
  %v80 = vpop.f32.mrf.mxu0
  %v81 = vadd.f32 0.0, %v80
  %v82 = vpop.f32.mrf.mxu0
  %83 = vdwg.mxu0
  %v84 = vadd.f32 %v22, %v78
  %v85 = vadd.f32 %v23, %v81
  %vm86 = vcmask 261120
  %87 = vst.msk [vmem:[#allocation2] sm:$0xff] %vm86, %v84
  %88 = vst.msk [vmem:[#allocation2 + $0x8] sm:$0xff] %vm86, %v85
  // Predicated region
  $region18: #{self_transformer_layer.11} parent=0 // pred_check
    %p89 = pneg %p15
  $region19: #{self_transformer_layer.11} parent=0 // pred_check_branch
    %91 = sbr.rel (%p89) target = $region21
  $region20: #{self_transformer_layer.11} parent=0 // pred_region
    %v92 = vld [vmem:[#allocation2] sm:$0xff]
    %v93 = vld [vmem:[#allocation2 + $0x8] sm:$0xff]
    %v94 = vld [vmem:[%s2] sm:$0x1]
    %v96 = vlaneseq
    %v97 = vshrl.u32 %v96, 7
    %v98 = vsub.s32 0, %v97
    %v99 = vrot.slane %v94, %v98
    %v101 = vadd.f32 %v92, %v99
    %v102 = vadd.f32 %v93, %v99
    %103 = vst.msk [vmem:[%s3] sm:$0xff] %vm86, %v101
    %104 = vst.msk [vmem:[%s3 + $0x8] sm:$0xff] %vm86, %v102
  $region21: #{self_transformer_layer.11} parent=0 // pred_fallthru
    _
  // Predicated region
  $region22: #{self_transformer_layer.11} parent=0 // pred_check
    _
  $region23: #{self_transformer_layer.11} parent=0 // pred_check_branch
    %106 = sbr.rel (0) target = $region25
  $region24: #{self_transformer_layer.11} parent=0 // pred_region
    _
  $region25: #{self_transformer_layer.11} parent=0 // pred_fallthru
    _
  // Predicated region
  $region26: #{self_transformer_layer.11} parent=0 // pred_check
    _
  $region27: #{self_transformer_layer.11} parent=0 // pred_check_branch
    %108 = sbr.rel (0) target = $region29
  $region28: #{self_transformer_layer.11} parent=0 // pred_region
    _
  $region29: #{self_transformer_layer.11} parent=0 // pred_fallthru
    _

// kernel: self_transformer_layer.12
$region0: #{self_transformer_layer.12}
  #allocation0 [shape = 'u32[]', space=smem, size = 0x4, offset = 0x4, fixed_abs, tag = 'smem constant byte address 0x4 - core index']
  #allocation1 [shape = 'u32[144,128]{1,0:T(1,128)}', space=vmem, size = 0x12000, scoped, tag = 'internal scratch']
  #allocation2 [shape = 'f32[128,1]{1,0:T(8,128)}', space=vmem, size = 0x10000, scoped, tag = 'scratch operand']
  #allocation3 [shape = 'f32[128,1]{1,0:T(8,128)}', space=vmem, size = 0x10000, scoped, tag = 'scratch operand']
  #allocation4 [shape = 'f32[128,16]{1,0:T(8,128)}', space=vmem, size = 0x10000, scoped, tag = 'scratch operand']
  %s0 = inlined_call_operand.vmem [shape: bf16[128,16], index: 0, kind: input, shape index: {}]
  %s1 = inlined_call_operand.vmem [shape: bf16[16,16], index: 1, kind: input, shape index: {}]
  %s2 = inlined_call_operand.vmem [shape: bf16[16,16], index: 2, kind: input, shape index: {}]
  %s3 = inlined_call_operand.vmem [shape: f32[128,16], index: 3, kind: output, shape index: {}]
  %s4 = sld [smem:[#allocation0]]
  $region30: #{self_transformer_layer.12} parent=0
    _
  %s6 = ssub.s32 1, %s4
  %s7 = scalar_select 0, %s6, %s4
  // Predicated region
  $region2: #{self_transformer_layer.12} parent=0 // pred_check
    _
  $region3: #{self_transformer_layer.12} parent=0 // pred_check_branch
    %9 = sbr.rel (0) target = $region5
  $region4: #{self_transformer_layer.12} parent=0 // pred_region
    _
  $region5: #{self_transformer_layer.12} parent=0 // pred_fallthru
    _
  // Predicated region
  $region6: #{self_transformer_layer.12} parent=0 // pred_check
    _
  $region7: #{self_transformer_layer.12} parent=0 // pred_check_branch
    %11 = sbr.rel (0) target = $region9
  $region8: #{self_transformer_layer.12} parent=0 // pred_region
    _
  $region9: #{self_transformer_layer.12} parent=0 // pred_fallthru
    _
  // Predicated region
  $region10: #{self_transformer_layer.12} parent=0 // pred_check
    _
  $region11: #{self_transformer_layer.12} parent=0 // pred_check_branch
    %13 = sbr.rel (0) target = $region13
  $region12: #{self_transformer_layer.12} parent=0 // pred_region
    _
  $region13: #{self_transformer_layer.12} parent=0 // pred_fallthru
    _
  %p15 = scmp.eq.s32.totalorder 0, 0
  // Predicated region
  $region14: #{self_transformer_layer.12} parent=0 // pred_check
    %p16 = pneg %p15
  $region15: #{self_transformer_layer.12} parent=0 // pred_check_branch
    %18 = sbr.rel (%p16) target = $region17
  $region16: #{self_transformer_layer.12} parent=0 // pred_region
    %vm19 = vcmask 7168
    %20 = vst.msk [vmem:[#allocation2] sm:$0xff] %vm19, -inf
    %21 = vst.msk [vmem:[#allocation2 + $0x8] sm:$0xff] %vm19, -inf
    %22 = vst.msk [vmem:[#allocation2 + $0x10] sm:$0xff] %vm19, -inf
    %23 = vst.msk [vmem:[#allocation2 + $0x18] sm:$0xff] %vm19, -inf
    %24 = vst.msk [vmem:[#allocation2 + $0x20] sm:$0xff] %vm19, -inf
    %25 = vst.msk [vmem:[#allocation2 + $0x28] sm:$0xff] %vm19, -inf
    %26 = vst.msk [vmem:[#allocation2 + $0x30] sm:$0xff] %vm19, -inf
    %27 = vst.msk [vmem:[#allocation2 + $0x38] sm:$0xff] %vm19, -inf
    %28 = vst.msk [vmem:[#allocation2 + $0x40] sm:$0xff] %vm19, -inf
    %29 = vst.msk [vmem:[#allocation2 + $0x48] sm:$0xff] %vm19, -inf
    %30 = vst.msk [vmem:[#allocation2 + $0x50] sm:$0xff] %vm19, -inf
    %31 = vst.msk [vmem:[#allocation2 + $0x58] sm:$0xff] %vm19, -inf
    %32 = vst.msk [vmem:[#allocation2 + $0x60] sm:$0xff] %vm19, -inf
    %33 = vst.msk [vmem:[#allocation2 + $0x68] sm:$0xff] %vm19, -inf
    %34 = vst.msk [vmem:[#allocation2 + $0x70] sm:$0xff] %vm19, -inf
    %35 = vst.msk [vmem:[#allocation2 + $0x78] sm:$0xff] %vm19, -inf
    %36 = vst.msk [vmem:[#allocation3] sm:$0xff] %vm19, 0.0
    %37 = vst.msk [vmem:[#allocation3 + $0x8] sm:$0xff] %vm19, 0.0
    %38 = vst.msk [vmem:[#allocation3 + $0x10] sm:$0xff] %vm19, 0.0
    %39 = vst.msk [vmem:[#allocation3 + $0x18] sm:$0xff] %vm19, 0.0
    %40 = vst.msk [vmem:[#allocation3 + $0x20] sm:$0xff] %vm19, 0.0
    %41 = vst.msk [vmem:[#allocation3 + $0x28] sm:$0xff] %vm19, 0.0
    %42 = vst.msk [vmem:[#allocation3 + $0x30] sm:$0xff] %vm19, 0.0
    %43 = vst.msk [vmem:[#allocation3 + $0x38] sm:$0xff] %vm19, 0.0
    %44 = vst.msk [vmem:[#allocation3 + $0x40] sm:$0xff] %vm19, 0.0
    %45 = vst.msk [vmem:[#allocation3 + $0x48] sm:$0xff] %vm19, 0.0
    %46 = vst.msk [vmem:[#allocation3 + $0x50] sm:$0xff] %vm19, 0.0
    %47 = vst.msk [vmem:[#allocation3 + $0x58] sm:$0xff] %vm19, 0.0
    %48 = vst.msk [vmem:[#allocation3 + $0x60] sm:$0xff] %vm19, 0.0
    %49 = vst.msk [vmem:[#allocation3 + $0x68] sm:$0xff] %vm19, 0.0
    %50 = vst.msk [vmem:[#allocation3 + $0x70] sm:$0xff] %vm19, 0.0
    %51 = vst.msk [vmem:[#allocation3 + $0x78] sm:$0xff] %vm19, 0.0
    %vm52 = vcmask 130048
    %53 = vst.msk [vmem:[#allocation4] sm:$0xff] %vm52, 0.0
    %54 = vst.msk [vmem:[#allocation4 + $0x8] sm:$0xff] %vm52, 0.0
    %55 = vst.msk [vmem:[#allocation4 + $0x10] sm:$0xff] %vm52, 0.0
    %56 = vst.msk [vmem:[#allocation4 + $0x18] sm:$0xff] %vm52, 0.0
    %57 = vst.msk [vmem:[#allocation4 + $0x20] sm:$0xff] %vm52, 0.0
    %58 = vst.msk [vmem:[#allocation4 + $0x28] sm:$0xff] %vm52, 0.0
    %59 = vst.msk [vmem:[#allocation4 + $0x30] sm:$0xff] %vm52, 0.0
    %60 = vst.msk [vmem:[#allocation4 + $0x38] sm:$0xff] %vm52, 0.0
    %61 = vst.msk [vmem:[#allocation4 + $0x40] sm:$0xff] %vm52, 0.0
    %62 = vst.msk [vmem:[#allocation4 + $0x48] sm:$0xff] %vm52, 0.0
    %63 = vst.msk [vmem:[#allocation4 + $0x50] sm:$0xff] %vm52, 0.0
    %64 = vst.msk [vmem:[#allocation4 + $0x58] sm:$0xff] %vm52, 0.0
    %65 = vst.msk [vmem:[#allocation4 + $0x60] sm:$0xff] %vm52, 0.0
    %66 = vst.msk [vmem:[#allocation4 + $0x68] sm:$0xff] %vm52, 0.0
    %67 = vst.msk [vmem:[#allocation4 + $0x70] sm:$0xff] %vm52, 0.0
    %68 = vst.msk [vmem:[#allocation4 + $0x78] sm:$0xff] %vm52, 0.0
  $region17: #{self_transformer_layer.12} parent=0 // pred_fallthru
    _
  %v69 = vld [vmem:[%s0] sm:$0xf]
  %v70 = vld [vmem:[%s0 + $0x4] sm:$0xf]
  %v71 = vld [vmem:[%s0 + $0x8] sm:$0xf]
  %v72 = vld [vmem:[%s0 + $0xc] sm:$0xf]
  %v73 = vld [vmem:[%s0 + $0x10] sm:$0xf]
  %v74 = vld [vmem:[%s0 + $0x14] sm:$0xf]
  %v75 = vld [vmem:[%s0 + $0x18] sm:$0xf]
  %v76 = vld [vmem:[%s0 + $0x1c] sm:$0xf]
  %v77 = vld [vmem:[%s0 + $0x20] sm:$0xf]
  %v78 = vld [vmem:[%s0 + $0x24] sm:$0xf]
  %v79 = vld [vmem:[%s0 + $0x28] sm:$0xf]
  %v80 = vld [vmem:[%s0 + $0x2c] sm:$0xf]
  %v81 = vld [vmem:[%s0 + $0x30] sm:$0xf]
  %v82 = vld [vmem:[%s0 + $0x34] sm:$0xf]
  %v83 = vld [vmem:[%s0 + $0x38] sm:$0xf]
  %v84 = vld [vmem:[%s0 + $0x3c] sm:$0xf]
  %v85 = vld [vmem:[%s1] sm:$0xf]
  %v86 = vld [vmem:[%s1 + $0x4] sm:$0xf]
  %v103 = vunpack.c.l.b16 %v69
  %v104 = vunpack.c.l.b16 %v70
  %v105 = vunpack.c.l.b16 %v71
  %v106 = vunpack.c.l.b16 %v72
  %v107 = vunpack.c.l.b16 %v73
  %v108 = vunpack.c.l.b16 %v74
  %v109 = vunpack.c.l.b16 %v75
  %v110 = vunpack.c.l.b16 %v76
  %v111 = vunpack.c.l.b16 %v77
  %v112 = vunpack.c.l.b16 %v78
  %v113 = vunpack.c.l.b16 %v79
  %v114 = vunpack.c.l.b16 %v80
  %v115 = vunpack.c.l.b16 %v81
  %v116 = vunpack.c.l.b16 %v82
  %v117 = vunpack.c.l.b16 %v83
  %v118 = vunpack.c.l.b16 %v84
  %v119 = vpack.c.b16 %v104, %v103
  %v120 = vpack.c.b16 %v106, %v105
  %v121 = vpack.c.b16 %v108, %v107
  %v122 = vpack.c.b16 %v110, %v109
  %v123 = vpack.c.b16 %v112, %v111
  %v124 = vpack.c.b16 %v114, %v113
  %v125 = vpack.c.b16 %v116, %v115
  %v126 = vpack.c.b16 %v118, %v117
  %v129 = vunpack.c.l.b16 %v85
  %v130 = vunpack.c.l.b16 %v86
  %v131 = vpack.c.b16 %v130, %v129
  %vm132 = vcmask 130048
  %v134 = vsel %vm132, %v119, 0
  %v137 = vsel %vm132, %v120, 0
  %v140 = vsel %vm132, %v121, 0
  %v143 = vsel %vm132, %v122, 0
  %v146 = vsel %vm132, %v123, 0
  %v149 = vsel %vm132, %v124, 0
  %v152 = vsel %vm132, %v125, 0
  %v155 = vsel %vm132, %v126, 0
  %v158 = vsel %vm132, %v131, 0
  %160 = vmatprep.subr.bf16.mxu0 0
  %161 = vmatpush1.bf16.xpose.msra.mxu0 0
  %162 = vmatprep.subr.bf16.mxu0 0
  %163 = vmatpush1.bf16.xpose.msra.mxu0 0
  %164 = vmatprep.subr.bf16.mxu0 0
  %165 = vmatpush1.bf16.xpose.msra.mxu0 0
  %166 = vmatprep.subr.bf16.mxu0 0
  %167 = vmatpush1.bf16.xpose.msra.mxu0 0
  %168 = vmatprep.subr.bf16.mxu0 0
  %169 = vmatpush1.bf16.xpose.msra.mxu0 0
  %170 = vmatprep.subr.bf16.mxu0 0
  %171 = vmatpush1.bf16.xpose.msra.mxu0 0
  %172 = vmatprep.subr.bf16.mxu0 0
  %173 = vmatpush1.bf16.xpose.msra.mxu0 0
  %174 = vmatprep.subr.bf16.mxu0 0
  %175 = vmatpush1.bf16.xpose.msra.mxu0 %v158
  %176 = vmatprep.subr.bf16.mxu0 0
  %177 = vmatpush2.bf16.xpose.msra.mxu0 0
  %178 = vmatprep.subr.bf16.mxu0 0
  %179 = vmatpush2.bf16.xpose.msra.mxu0 0
  %180 = vmatprep.subr.bf16.mxu0 0
  %181 = vmatpush2.bf16.xpose.msra.mxu0 0
  %182 = vmatprep.subr.bf16.mxu0 0
  %183 = vmatpush2.bf16.xpose.msra.mxu0 0
  %184 = vmatprep.subr.bf16.mxu0 0
  %185 = vmatpush2.bf16.xpose.msra.mxu0 0
  %186 = vmatprep.subr.bf16.mxu0 0
  %187 = vmatpush2.bf16.xpose.msra.mxu0 0
  %188 = vmatprep.subr.bf16.mxu0 0
  %189 = vmatpush2.bf16.xpose.msra.mxu0 0
  %190 = vmatprep.subr.bf16.mxu0 0
  %191 = vmatpush2.bf16.xpose.msra.mxu0 0
  %192 = vmatprep.mubr.bf16.mxu0 0
  %193 = vmatmul.mubr.bf16.gmra.mxu0 %v134
  %v194 = vpop.f32.mrf.mxu0
  %v195 = vadd.f32 0.0, %v194
  %v196 = vpop.f32.mrf.mxu0
  %v197 = vpop.f32.mrf.mxu0
  %v198 = vadd.f32 0.0, %v197
  %v199 = vpop.f32.mrf.mxu0
  %200 = vmatprep.mubr.bf16.mxu0 0
  %201 = vmatmul.mubr.bf16.gmra.mxu0 %v137
  %v202 = vpop.f32.mrf.mxu0
  %v203 = vadd.f32 0.0, %v202
  %v204 = vpop.f32.mrf.mxu0
  %v205 = vpop.f32.mrf.mxu0
  %v206 = vadd.f32 0.0, %v205
  %v207 = vpop.f32.mrf.mxu0
  %208 = vmatprep.mubr.bf16.mxu0 0
  %209 = vmatmul.mubr.bf16.gmra.mxu0 %v140
  %v210 = vpop.f32.mrf.mxu0
  %v211 = vadd.f32 0.0, %v210
  %v212 = vpop.f32.mrf.mxu0
  %v213 = vpop.f32.mrf.mxu0
  %v214 = vadd.f32 0.0, %v213
  %v215 = vpop.f32.mrf.mxu0
  %216 = vmatprep.mubr.bf16.mxu0 0
  %217 = vmatmul.mubr.bf16.gmra.mxu0 %v143
  %v218 = vpop.f32.mrf.mxu0
  %v219 = vadd.f32 0.0, %v218
  %v220 = vpop.f32.mrf.mxu0
  %v221 = vpop.f32.mrf.mxu0
  %v222 = vadd.f32 0.0, %v221
  %v223 = vpop.f32.mrf.mxu0
  %224 = vmatprep.mubr.bf16.mxu0 0
  %225 = vmatmul.mubr.bf16.gmra.mxu0 %v146
  %v226 = vpop.f32.mrf.mxu0
  %v227 = vadd.f32 0.0, %v226
  %v228 = vpop.f32.mrf.mxu0
  %v229 = vpop.f32.mrf.mxu0
  %v230 = vadd.f32 0.0, %v229
  %v231 = vpop.f32.mrf.mxu0
  %232 = vmatprep.mubr.bf16.mxu0 0
  %233 = vmatmul.mubr.bf16.gmra.mxu0 %v149
  %v234 = vpop.f32.mrf.mxu0
  %v235 = vadd.f32 0.0, %v234
  %v236 = vpop.f32.mrf.mxu0
  %v237 = vpop.f32.mrf.mxu0
  %v238 = vadd.f32 0.0, %v237
  %v239 = vpop.f32.mrf.mxu0
  %240 = vmatprep.mubr.bf16.mxu0 0
  %241 = vmatmul.mubr.bf16.gmra.mxu0 %v152
  %v242 = vpop.f32.mrf.mxu0
  %v243 = vadd.f32 0.0, %v242
  %v244 = vpop.f32.mrf.mxu0
  %v245 = vpop.f32.mrf.mxu0
  %v246 = vadd.f32 0.0, %v245
  %v247 = vpop.f32.mrf.mxu0
  %248 = vmatprep.mubr.bf16.mxu0 0
  %249 = vmatmul.mubr.bf16.gmra.mxu0 %v155
  %v250 = vpop.f32.mrf.mxu0
  %v251 = vadd.f32 0.0, %v250
  %v252 = vpop.f32.mrf.mxu0
  %v253 = vpop.f32.mrf.mxu0
  %v254 = vadd.f32 0.0, %v253
  %v255 = vpop.f32.mrf.mxu0
  %256 = vdwg.mxu0
  %v257 = vld [vmem:[#allocation2] sm:$0xff]
  %v258 = vld [vmem:[#allocation2 + $0x8] sm:$0xff]
  %v259 = vld [vmem:[#allocation2 + $0x10] sm:$0xff]
  %v260 = vld [vmem:[#allocation2 + $0x18] sm:$0xff]
  %v261 = vld [vmem:[#allocation2 + $0x20] sm:$0xff]
  %v262 = vld [vmem:[#allocation2 + $0x28] sm:$0xff]
  %v263 = vld [vmem:[#allocation2 + $0x30] sm:$0xff]
  %v264 = vld [vmem:[#allocation2 + $0x38] sm:$0xff]
  %v265 = vld [vmem:[#allocation2 + $0x40] sm:$0xff]
  %v266 = vld [vmem:[#allocation2 + $0x48] sm:$0xff]
  %v267 = vld [vmem:[#allocation2 + $0x50] sm:$0xff]
  %v268 = vld [vmem:[#allocation2 + $0x58] sm:$0xff]
  %v269 = vld [vmem:[#allocation2 + $0x60] sm:$0xff]
  %v270 = vld [vmem:[#allocation2 + $0x68] sm:$0xff]
  %v271 = vld [vmem:[#allocation2 + $0x70] sm:$0xff]
  %v272 = vld [vmem:[#allocation2 + $0x78] sm:$0xff]
  %v273 = vsel %vm132, %v195, -inf
  %274 = vmax.xlane.f32.xlu0 %v273
  %v275 = vpop.xlane.xlu0 %274
  %v276 = vsel %vm132, %v198, -inf
  %277 = vmax.xlane.f32.xlu0 %v276
  %v278 = vpop.xlane.xlu0 %277
  %v279 = vsel %vm132, %v203, -inf
  %280 = vmax.xlane.f32.xlu0 %v279
  %v281 = vpop.xlane.xlu0 %280
  %v282 = vsel %vm132, %v206, -inf
  %283 = vmax.xlane.f32.xlu0 %v282
  %v284 = vpop.xlane.xlu0 %283
  %v285 = vsel %vm132, %v211, -inf
  %286 = vmax.xlane.f32.xlu0 %v285
  %v287 = vpop.xlane.xlu0 %286
  %v288 = vsel %vm132, %v214, -inf
  %289 = vmax.xlane.f32.xlu0 %v288
  %v290 = vpop.xlane.xlu0 %289
  %v291 = vsel %vm132, %v219, -inf
  %292 = vmax.xlane.f32.xlu0 %v291
  %v293 = vpop.xlane.xlu0 %292
  %v294 = vsel %vm132, %v222, -inf
  %295 = vmax.xlane.f32.xlu0 %v294
  %v296 = vpop.xlane.xlu0 %295
  %v297 = vsel %vm132, %v227, -inf
  %298 = vmax.xlane.f32.xlu0 %v297
  %v299 = vpop.xlane.xlu0 %298
  %v300 = vsel %vm132, %v230, -inf
  %301 = vmax.xlane.f32.xlu0 %v300
  %v302 = vpop.xlane.xlu0 %301
  %v303 = vsel %vm132, %v235, -inf
  %304 = vmax.xlane.f32.xlu0 %v303
  %v305 = vpop.xlane.xlu0 %304
  %v306 = vsel %vm132, %v238, -inf
  %307 = vmax.xlane.f32.xlu0 %v306
  %v308 = vpop.xlane.xlu0 %307
  %v309 = vsel %vm132, %v243, -inf
  %310 = vmax.xlane.f32.xlu0 %v309
  %v311 = vpop.xlane.xlu0 %310
  %v312 = vsel %vm132, %v246, -inf
  %313 = vmax.xlane.f32.xlu0 %v312
  %v314 = vpop.xlane.xlu0 %313
  %v315 = vsel %vm132, %v251, -inf
  %316 = vmax.xlane.f32.xlu0 %v315
  %v317 = vpop.xlane.xlu0 %316
  %v318 = vsel %vm132, %v254, -inf
  %319 = vmax.xlane.f32.xlu0 %v318
  %v320 = vpop.xlane.xlu0 %319
  %v321 = vmax.f32 %v257, %v275
  %v322 = vmax.f32 %v258, %v278
  %v323 = vmax.f32 %v259, %v281
  %v324 = vmax.f32 %v260, %v284
  %v325 = vmax.f32 %v261, %v287
  %v326 = vmax.f32 %v262, %v290
  %v327 = vmax.f32 %v263, %v293
  %v328 = vmax.f32 %v264, %v296
  %v329 = vmax.f32 %v265, %v299
  %v330 = vmax.f32 %v266, %v302
  %v331 = vmax.f32 %v267, %v305
  %v332 = vmax.f32 %v268, %v308
  %v333 = vmax.f32 %v269, %v311
  %v334 = vmax.f32 %v270, %v314
  %v335 = vmax.f32 %v271, %v317
  %v336 = vmax.f32 %v272, %v320
  %v337 = vsub.f32 %v257, %v321
  %v338 = vsub.f32 %v258, %v322
  %v339 = vsub.f32 %v259, %v323
  %v340 = vsub.f32 %v260, %v324
  %v341 = vsub.f32 %v261, %v325
  %v342 = vsub.f32 %v262, %v326
  %v343 = vsub.f32 %v263, %v327
  %v344 = vsub.f32 %v264, %v328
  %v345 = vsub.f32 %v265, %v329
  %v346 = vsub.f32 %v266, %v330
  %v347 = vsub.f32 %v267, %v331
  %v348 = vsub.f32 %v268, %v332
  %v349 = vsub.f32 %v269, %v333
  %v350 = vsub.f32 %v270, %v334
  %v351 = vsub.f32 %v271, %v335
  %v352 = vsub.f32 %v272, %v336
  %v353 = vmul.f32 %v337, 1.442695
  %v354 = vpow.pop %v353
  %v355 = vmul.f32 %v338, 1.442695
  %v356 = vpow.pop %v355
  %v357 = vmul.f32 %v339, 1.442695
  %v358 = vpow.pop %v357
  %v359 = vmul.f32 %v340, 1.442695
  %v360 = vpow.pop %v359
  %v361 = vmul.f32 %v341, 1.442695
  %v362 = vpow.pop %v361
  %v363 = vmul.f32 %v342, 1.442695
  %v364 = vpow.pop %v363
  %v365 = vmul.f32 %v343, 1.442695
  %v366 = vpow.pop %v365
  %v367 = vmul.f32 %v344, 1.442695
  %v368 = vpow.pop %v367
  %v369 = vmul.f32 %v345, 1.442695
  %v370 = vpow.pop %v369
  %v371 = vmul.f32 %v346, 1.442695
  %v372 = vpow.pop %v371
  %v373 = vmul.f32 %v347, 1.442695
  %v374 = vpow.pop %v373
  %v375 = vmul.f32 %v348, 1.442695
  %v376 = vpow.pop %v375
  %v377 = vmul.f32 %v349, 1.442695
  %v378 = vpow.pop %v377
  %v379 = vmul.f32 %v350, 1.442695
  %v380 = vpow.pop %v379
  %v381 = vmul.f32 %v351, 1.442695
  %v382 = vpow.pop %v381
  %v383 = vmul.f32 %v352, 1.442695
  %v384 = vpow.pop %v383
  %386 = vset.pattern.permute.xlu0 0
  %387 = vperm.xlu0 %386, %v321
  %v388 = vpop.permute.xlu0 %387
  %391 = vset.pattern.permute.xlu0 0
  %392 = vperm.xlu0 %391, %v322
  %v393 = vpop.permute.xlu0 %392
  %396 = vset.pattern.permute.xlu0 0
  %397 = vperm.xlu0 %396, %v323
  %v398 = vpop.permute.xlu0 %397
  %401 = vset.pattern.permute.xlu0 0
  %402 = vperm.xlu0 %401, %v324
  %v403 = vpop.permute.xlu0 %402
  %406 = vset.pattern.permute.xlu0 0
  %407 = vperm.xlu0 %406, %v325
  %v408 = vpop.permute.xlu0 %407
  %411 = vset.pattern.permute.xlu0 0
  %412 = vperm.xlu0 %411, %v326
  %v413 = vpop.permute.xlu0 %412
  %416 = vset.pattern.permute.xlu0 0
  %417 = vperm.xlu0 %416, %v327
  %v418 = vpop.permute.xlu0 %417
  %421 = vset.pattern.permute.xlu0 0
  %422 = vperm.xlu0 %421, %v328
  %v423 = vpop.permute.xlu0 %422
  %426 = vset.pattern.permute.xlu0 0
  %427 = vperm.xlu0 %426, %v329
  %v428 = vpop.permute.xlu0 %427
  %431 = vset.pattern.permute.xlu0 0
  %432 = vperm.xlu0 %431, %v330
  %v433 = vpop.permute.xlu0 %432
  %436 = vset.pattern.permute.xlu0 0
  %437 = vperm.xlu0 %436, %v331
  %v438 = vpop.permute.xlu0 %437
  %441 = vset.pattern.permute.xlu0 0
  %442 = vperm.xlu0 %441, %v332
  %v443 = vpop.permute.xlu0 %442
  %446 = vset.pattern.permute.xlu0 0
  %447 = vperm.xlu0 %446, %v333
  %v448 = vpop.permute.xlu0 %447
  %451 = vset.pattern.permute.xlu0 0
  %452 = vperm.xlu0 %451, %v334
  %v453 = vpop.permute.xlu0 %452
  %456 = vset.pattern.permute.xlu0 0
  %457 = vperm.xlu0 %456, %v335
  %v458 = vpop.permute.xlu0 %457
  %461 = vset.pattern.permute.xlu0 0
  %462 = vperm.xlu0 %461, %v336
  %v463 = vpop.permute.xlu0 %462
  %v465 = vsub.f32 %v195, %v388
  %v466 = vsub.f32 %v198, %v393
  %v467 = vsub.f32 %v203, %v398
  %v468 = vsub.f32 %v206, %v403
  %v469 = vsub.f32 %v211, %v408
  %v470 = vsub.f32 %v214, %v413
  %v471 = vsub.f32 %v219, %v418
  %v472 = vsub.f32 %v222, %v423
  %v473 = vsub.f32 %v227, %v428
  %v474 = vsub.f32 %v230, %v433
  %v475 = vsub.f32 %v235, %v438
  %v476 = vsub.f32 %v238, %v443
  %v477 = vsub.f32 %v243, %v448
  %v478 = vsub.f32 %v246, %v453
  %v479 = vsub.f32 %v251, %v458
  %v480 = vsub.f32 %v254, %v463
  %v481 = vmul.f32 %v465, 1.442695
  %v482 = vpow.pop %v481
  %v483 = vmul.f32 %v466, 1.442695
  %v484 = vpow.pop %v483
  %v485 = vmul.f32 %v467, 1.442695
  %v486 = vpow.pop %v485
  %v487 = vmul.f32 %v468, 1.442695
  %v488 = vpow.pop %v487
  %v489 = vmul.f32 %v469, 1.442695
  %v490 = vpow.pop %v489
  %v491 = vmul.f32 %v470, 1.442695
  %v492 = vpow.pop %v491
  %v493 = vmul.f32 %v471, 1.442695
  %v494 = vpow.pop %v493
  %v495 = vmul.f32 %v472, 1.442695
  %v496 = vpow.pop %v495
  %v497 = vmul.f32 %v473, 1.442695
  %v498 = vpow.pop %v497
  %v499 = vmul.f32 %v474, 1.442695
  %v500 = vpow.pop %v499
  %v501 = vmul.f32 %v475, 1.442695
  %v502 = vpow.pop %v501
  %v503 = vmul.f32 %v476, 1.442695
  %v504 = vpow.pop %v503
  %v505 = vmul.f32 %v477, 1.442695
  %v506 = vpow.pop %v505
  %v507 = vmul.f32 %v478, 1.442695
  %v508 = vpow.pop %v507
  %v509 = vmul.f32 %v479, 1.442695
  %v510 = vpow.pop %v509
  %v511 = vmul.f32 %v480, 1.442695
  %v512 = vpow.pop %v511
  %v513 = vld [vmem:[#allocation3] sm:$0xff]
  %v514 = vld [vmem:[#allocation3 + $0x8] sm:$0xff]
  %v515 = vld [vmem:[#allocation3 + $0x10] sm:$0xff]
  %v516 = vld [vmem:[#allocation3 + $0x18] sm:$0xff]
  %v517 = vld [vmem:[#allocation3 + $0x20] sm:$0xff]
  %v518 = vld [vmem:[#allocation3 + $0x28] sm:$0xff]
  %v519 = vld [vmem:[#allocation3 + $0x30] sm:$0xff]
  %v520 = vld [vmem:[#allocation3 + $0x38] sm:$0xff]
  %v521 = vld [vmem:[#allocation3 + $0x40] sm:$0xff]
  %v522 = vld [vmem:[#allocation3 + $0x48] sm:$0xff]
  %v523 = vld [vmem:[#allocation3 + $0x50] sm:$0xff]
  %v524 = vld [vmem:[#allocation3 + $0x58] sm:$0xff]
  %v525 = vld [vmem:[#allocation3 + $0x60] sm:$0xff]
  %v526 = vld [vmem:[#allocation3 + $0x68] sm:$0xff]
  %v527 = vld [vmem:[#allocation3 + $0x70] sm:$0xff]
  %v528 = vld [vmem:[#allocation3 + $0x78] sm:$0xff]
  %v529 = vmul.f32 %v354, %v513
  %v530 = vmul.f32 %v356, %v514
  %v531 = vmul.f32 %v358, %v515
  %v532 = vmul.f32 %v360, %v516
  %v533 = vmul.f32 %v362, %v517
  %v534 = vmul.f32 %v364, %v518
  %v535 = vmul.f32 %v366, %v519
  %v536 = vmul.f32 %v368, %v520
  %v537 = vmul.f32 %v370, %v521
  %v538 = vmul.f32 %v372, %v522
  %v539 = vmul.f32 %v374, %v523
  %v540 = vmul.f32 %v376, %v524
  %v541 = vmul.f32 %v378, %v525
  %v542 = vmul.f32 %v380, %v526
  %v543 = vmul.f32 %v382, %v527
  %v544 = vmul.f32 %v384, %v528
  %v545 = vsel %vm132, %v482, 0.0
  %546 = vadd.xlane.f32.xlu0 %v545
  %v547 = vpop.xlane.xlu0 %546
  %v548 = vsel %vm132, %v484, 0.0
  %549 = vadd.xlane.f32.xlu0 %v548
  %v550 = vpop.xlane.xlu0 %549
  %v551 = vsel %vm132, %v486, 0.0
  %552 = vadd.xlane.f32.xlu0 %v551
  %v553 = vpop.xlane.xlu0 %552
  %v554 = vsel %vm132, %v488, 0.0
  %555 = vadd.xlane.f32.xlu0 %v554
  %v556 = vpop.xlane.xlu0 %555
  %v557 = vsel %vm132, %v490, 0.0
  %558 = vadd.xlane.f32.xlu0 %v557
  %v559 = vpop.xlane.xlu0 %558
  %v560 = vsel %vm132, %v492, 0.0
  %561 = vadd.xlane.f32.xlu0 %v560
  %v562 = vpop.xlane.xlu0 %561
  %v563 = vsel %vm132, %v494, 0.0
  %564 = vadd.xlane.f32.xlu0 %v563
  %v565 = vpop.xlane.xlu0 %564
  %v566 = vsel %vm132, %v496, 0.0
  %567 = vadd.xlane.f32.xlu0 %v566
  %v568 = vpop.xlane.xlu0 %567
  %v569 = vsel %vm132, %v498, 0.0
  %570 = vadd.xlane.f32.xlu0 %v569
  %v571 = vpop.xlane.xlu0 %570
  %v572 = vsel %vm132, %v500, 0.0
  %573 = vadd.xlane.f32.xlu0 %v572
  %v574 = vpop.xlane.xlu0 %573
  %v575 = vsel %vm132, %v502, 0.0
  %576 = vadd.xlane.f32.xlu0 %v575
  %v577 = vpop.xlane.xlu0 %576
  %v578 = vsel %vm132, %v504, 0.0
  %579 = vadd.xlane.f32.xlu0 %v578
  %v580 = vpop.xlane.xlu0 %579
  %v581 = vsel %vm132, %v506, 0.0
  %582 = vadd.xlane.f32.xlu0 %v581
  %v583 = vpop.xlane.xlu0 %582
  %v584 = vsel %vm132, %v508, 0.0
  %585 = vadd.xlane.f32.xlu0 %v584
  %v586 = vpop.xlane.xlu0 %585
  %v587 = vsel %vm132, %v510, 0.0
  %588 = vadd.xlane.f32.xlu0 %v587
  %v589 = vpop.xlane.xlu0 %588
  %v590 = vsel %vm132, %v512, 0.0
  %591 = vadd.xlane.f32.xlu0 %v590
  %v592 = vpop.xlane.xlu0 %591
  %v593 = vadd.f32 %v529, %v547
  %v594 = vadd.f32 %v530, %v550
  %v595 = vadd.f32 %v531, %v553
  %v596 = vadd.f32 %v532, %v556
  %v597 = vadd.f32 %v533, %v559
  %v598 = vadd.f32 %v534, %v562
  %v599 = vadd.f32 %v535, %v565
  %v600 = vadd.f32 %v536, %v568
  %v601 = vadd.f32 %v537, %v571
  %v602 = vadd.f32 %v538, %v574
  %v603 = vadd.f32 %v539, %v577
  %v604 = vadd.f32 %v540, %v580
  %v605 = vadd.f32 %v541, %v583
  %v606 = vadd.f32 %v542, %v586
  %v607 = vadd.f32 %v543, %v589
  %v608 = vadd.f32 %v544, %v592
  %vm609 = vcmask 7168
  %610 = vst.msk [vmem:[#allocation3] sm:$0xff] %vm609, %v593
  %611 = vst.msk [vmem:[#allocation3 + $0x8] sm:$0xff] %vm609, %v594
  %612 = vst.msk [vmem:[#allocation3 + $0x10] sm:$0xff] %vm609, %v595
  %613 = vst.msk [vmem:[#allocation3 + $0x18] sm:$0xff] %vm609, %v596
  %614 = vst.msk [vmem:[#allocation3 + $0x20] sm:$0xff] %vm609, %v597
  %615 = vst.msk [vmem:[#allocation3 + $0x28] sm:$0xff] %vm609, %v598
  %616 = vst.msk [vmem:[#allocation3 + $0x30] sm:$0xff] %vm609, %v599
  %617 = vst.msk [vmem:[#allocation3 + $0x38] sm:$0xff] %vm609, %v600
  %618 = vst.msk [vmem:[#allocation3 + $0x40] sm:$0xff] %vm609, %v601
  %619 = vst.msk [vmem:[#allocation3 + $0x48] sm:$0xff] %vm609, %v602
  %620 = vst.msk [vmem:[#allocation3 + $0x50] sm:$0xff] %vm609, %v603
  %621 = vst.msk [vmem:[#allocation3 + $0x58] sm:$0xff] %vm609, %v604
  %622 = vst.msk [vmem:[#allocation3 + $0x60] sm:$0xff] %vm609, %v605
  %623 = vst.msk [vmem:[#allocation3 + $0x68] sm:$0xff] %vm609, %v606
  %624 = vst.msk [vmem:[#allocation3 + $0x70] sm:$0xff] %vm609, %v607
  %625 = vst.msk [vmem:[#allocation3 + $0x78] sm:$0xff] %vm609, %v608
  %v626 = vld [vmem:[#allocation4] sm:$0xff]
  %v627 = vld [vmem:[#allocation4 + $0x8] sm:$0xff]
  %v628 = vld [vmem:[#allocation4 + $0x10] sm:$0xff]
  %v629 = vld [vmem:[#allocation4 + $0x18] sm:$0xff]
  %v630 = vld [vmem:[#allocation4 + $0x20] sm:$0xff]
  %v631 = vld [vmem:[#allocation4 + $0x28] sm:$0xff]
  %v632 = vld [vmem:[#allocation4 + $0x30] sm:$0xff]
  %v633 = vld [vmem:[#allocation4 + $0x38] sm:$0xff]
  %v634 = vld [vmem:[#allocation4 + $0x40] sm:$0xff]
  %v635 = vld [vmem:[#allocation4 + $0x48] sm:$0xff]
  %v636 = vld [vmem:[#allocation4 + $0x50] sm:$0xff]
  %v637 = vld [vmem:[#allocation4 + $0x58] sm:$0xff]
  %v638 = vld [vmem:[#allocation4 + $0x60] sm:$0xff]
  %v639 = vld [vmem:[#allocation4 + $0x68] sm:$0xff]
  %v640 = vld [vmem:[#allocation4 + $0x70] sm:$0xff]
  %v641 = vld [vmem:[#allocation4 + $0x78] sm:$0xff]
  %643 = vset.pattern.permute.xlu0 0
  %644 = vperm.xlu0 %643, %v354
  %v645 = vpop.permute.xlu0 %644
  %648 = vset.pattern.permute.xlu0 0
  %649 = vperm.xlu0 %648, %v356
  %v650 = vpop.permute.xlu0 %649
  %653 = vset.pattern.permute.xlu0 0
  %654 = vperm.xlu0 %653, %v358
  %v655 = vpop.permute.xlu0 %654
  %658 = vset.pattern.permute.xlu0 0
  %659 = vperm.xlu0 %658, %v360
  %v660 = vpop.permute.xlu0 %659
  %663 = vset.pattern.permute.xlu0 0
  %664 = vperm.xlu0 %663, %v362
  %v665 = vpop.permute.xlu0 %664
  %668 = vset.pattern.permute.xlu0 0
  %669 = vperm.xlu0 %668, %v364
  %v670 = vpop.permute.xlu0 %669
  %673 = vset.pattern.permute.xlu0 0
  %674 = vperm.xlu0 %673, %v366
  %v675 = vpop.permute.xlu0 %674
  %678 = vset.pattern.permute.xlu0 0
  %679 = vperm.xlu0 %678, %v368
  %v680 = vpop.permute.xlu0 %679
  %683 = vset.pattern.permute.xlu0 0
  %684 = vperm.xlu0 %683, %v370
  %v685 = vpop.permute.xlu0 %684
  %688 = vset.pattern.permute.xlu0 0
  %689 = vperm.xlu0 %688, %v372
  %v690 = vpop.permute.xlu0 %689
  %693 = vset.pattern.permute.xlu0 0
  %694 = vperm.xlu0 %693, %v374
  %v695 = vpop.permute.xlu0 %694
  %698 = vset.pattern.permute.xlu0 0
  %699 = vperm.xlu0 %698, %v376
  %v700 = vpop.permute.xlu0 %699
  %703 = vset.pattern.permute.xlu0 0
  %704 = vperm.xlu0 %703, %v378
  %v705 = vpop.permute.xlu0 %704
  %708 = vset.pattern.permute.xlu0 0
  %709 = vperm.xlu0 %708, %v380
  %v710 = vpop.permute.xlu0 %709
  %713 = vset.pattern.permute.xlu0 0
  %714 = vperm.xlu0 %713, %v382
  %v715 = vpop.permute.xlu0 %714
  %718 = vset.pattern.permute.xlu0 0
  %719 = vperm.xlu0 %718, %v384
  %v720 = vpop.permute.xlu0 %719
  %v722 = vmul.f32 %v645, %v626
  %v723 = vmul.f32 %v650, %v627
  %v724 = vmul.f32 %v655, %v628
  %v725 = vmul.f32 %v660, %v629
  %v726 = vmul.f32 %v665, %v630
  %v727 = vmul.f32 %v670, %v631
  %v728 = vmul.f32 %v675, %v632
  %v729 = vmul.f32 %v680, %v633
  %v730 = vmul.f32 %v685, %v634
  %v731 = vmul.f32 %v690, %v635
  %v732 = vmul.f32 %v695, %v636
  %v733 = vmul.f32 %v700, %v637
  %v734 = vmul.f32 %v705, %v638
  %v735 = vmul.f32 %v710, %v639
  %v736 = vmul.f32 %v715, %v640
  %v737 = vmul.f32 %v720, %v641
  %v738 = vpack.c.bf16 %v484, %v482
  %v739 = vpack.c.bf16 %v488, %v486
  %v740 = vpack.c.bf16 %v492, %v490
  %v741 = vpack.c.bf16 %v496, %v494
  %v742 = vpack.c.bf16 %v500, %v498
  %v743 = vpack.c.bf16 %v504, %v502
  %v744 = vpack.c.bf16 %v508, %v506
  %v745 = vpack.c.bf16 %v512, %v510
  %v746 = vld [vmem:[%s2] sm:$0xf]
  %v747 = vld [vmem:[%s2 + $0x4] sm:$0xf]
  %v750 = vunpack.c.l.b16 %v746
  %v751 = vunpack.c.l.b16 %v747
  %v752 = vpack.c.b16 %v751, %v750
  %v755 = vsel %vm132, %v738, 0
  %v758 = vsel %vm132, %v739, 0
  %v761 = vsel %vm132, %v740, 0
  %v764 = vsel %vm132, %v741, 0
  %v767 = vsel %vm132, %v742, 0
  %v770 = vsel %vm132, %v743, 0
  %v773 = vsel %vm132, %v744, 0
  %v776 = vsel %vm132, %v745, 0
  %778 = vmatprep.subr.bf16.mxu0 0
  %779 = vmatpush1.bf16.msra.mxu0 0
  %780 = vmatprep.subr.bf16.mxu0 0
  %781 = vmatpush1.bf16.msra.mxu0 0
  %782 = vmatprep.subr.bf16.mxu0 0
  %783 = vmatpush1.bf16.msra.mxu0 0
  %784 = vmatprep.subr.bf16.mxu0 0
  %785 = vmatpush1.bf16.msra.mxu0 0
  %786 = vmatprep.subr.bf16.mxu0 0
  %787 = vmatpush1.bf16.msra.mxu0 0
  %788 = vmatprep.subr.bf16.mxu0 0
  %789 = vmatpush1.bf16.msra.mxu0 0
  %790 = vmatprep.subr.bf16.mxu0 0
  %791 = vmatpush1.bf16.msra.mxu0 0
  %792 = vmatprep.subr.bf16.mxu0 0
  %793 = vmatpush1.bf16.msra.mxu0 %v752
  %794 = vmatprep.subr.bf16.mxu0 0
  %795 = vmatpush2.bf16.msra.mxu0 0
  %796 = vmatprep.subr.bf16.mxu0 0
  %797 = vmatpush2.bf16.msra.mxu0 0
  %798 = vmatprep.subr.bf16.mxu0 0
  %799 = vmatpush2.bf16.msra.mxu0 0
  %800 = vmatprep.subr.bf16.mxu0 0
  %801 = vmatpush2.bf16.msra.mxu0 0
  %802 = vmatprep.subr.bf16.mxu0 0
  %803 = vmatpush2.bf16.msra.mxu0 0
  %804 = vmatprep.subr.bf16.mxu0 0
  %805 = vmatpush2.bf16.msra.mxu0 0
  %806 = vmatprep.subr.bf16.mxu0 0
  %807 = vmatpush2.bf16.msra.mxu0 0
  %808 = vmatprep.subr.bf16.mxu0 0
  %809 = vmatpush2.bf16.msra.mxu0 0
  %810 = vmatprep.mubr.bf16.mxu0 0
  %811 = vmatmul.mubr.bf16.gmra.mxu0 %v755
  %v812 = vpop.f32.mrf.mxu0
  %v813 = vadd.f32 0.0, %v812
  %v814 = vpop.f32.mrf.mxu0
  %v815 = vpop.f32.mrf.mxu0
  %v816 = vadd.f32 0.0, %v815
  %v817 = vpop.f32.mrf.mxu0
  %818 = vmatprep.mubr.bf16.mxu0 0
  %819 = vmatmul.mubr.bf16.gmra.mxu0 %v758
  %v820 = vpop.f32.mrf.mxu0
  %v821 = vadd.f32 0.0, %v820
  %v822 = vpop.f32.mrf.mxu0
  %v823 = vpop.f32.mrf.mxu0
  %v824 = vadd.f32 0.0, %v823
  %v825 = vpop.f32.mrf.mxu0
  %826 = vmatprep.mubr.bf16.mxu0 0
  %827 = vmatmul.mubr.bf16.gmra.mxu0 %v761
  %v828 = vpop.f32.mrf.mxu0
  %v829 = vadd.f32 0.0, %v828
  %v830 = vpop.f32.mrf.mxu0
  %v831 = vpop.f32.mrf.mxu0
  %v832 = vadd.f32 0.0, %v831
  %v833 = vpop.f32.mrf.mxu0
  %834 = vmatprep.mubr.bf16.mxu0 0
  %835 = vmatmul.mubr.bf16.gmra.mxu0 %v764
  %v836 = vpop.f32.mrf.mxu0
  %v837 = vadd.f32 0.0, %v836
  %v838 = vpop.f32.mrf.mxu0
  %v839 = vpop.f32.mrf.mxu0
  %v840 = vadd.f32 0.0, %v839
  %v841 = vpop.f32.mrf.mxu0
  %842 = vmatprep.mubr.bf16.mxu0 0
  %843 = vmatmul.mubr.bf16.gmra.mxu0 %v767
  %v844 = vpop.f32.mrf.mxu0
  %v845 = vadd.f32 0.0, %v844
  %v846 = vpop.f32.mrf.mxu0
  %v847 = vpop.f32.mrf.mxu0
  %v848 = vadd.f32 0.0, %v847
  %v849 = vpop.f32.mrf.mxu0
  %850 = vmatprep.mubr.bf16.mxu0 0
  %851 = vmatmul.mubr.bf16.gmra.mxu0 %v770
  %v852 = vpop.f32.mrf.mxu0
  %v853 = vadd.f32 0.0, %v852
  %v854 = vpop.f32.mrf.mxu0
  %v855 = vpop.f32.mrf.mxu0
  %v856 = vadd.f32 0.0, %v855
  %v857 = vpop.f32.mrf.mxu0
  %858 = vmatprep.mubr.bf16.mxu0 0
  %859 = vmatmul.mubr.bf16.gmra.mxu0 %v773
  %v860 = vpop.f32.mrf.mxu0
  %v861 = vadd.f32 0.0, %v860
  %v862 = vpop.f32.mrf.mxu0
  %v863 = vpop.f32.mrf.mxu0
  %v864 = vadd.f32 0.0, %v863
  %v865 = vpop.f32.mrf.mxu0
  %866 = vmatprep.mubr.bf16.mxu0 0
  %867 = vmatmul.mubr.bf16.gmra.mxu0 %v776
  %v868 = vpop.f32.mrf.mxu0
  %v869 = vadd.f32 0.0, %v868
  %v870 = vpop.f32.mrf.mxu0
  %v871 = vpop.f32.mrf.mxu0
  %v872 = vadd.f32 0.0, %v871
  %v873 = vpop.f32.mrf.mxu0
  %874 = vdwg.mxu0
  %v875 = vadd.f32 %v722, %v813
  %v876 = vadd.f32 %v723, %v816
  %v877 = vadd.f32 %v724, %v821
  %v878 = vadd.f32 %v725, %v824
  %v879 = vadd.f32 %v726, %v829
  %v880 = vadd.f32 %v727, %v832
  %v881 = vadd.f32 %v728, %v837
  %v882 = vadd.f32 %v729, %v840
  %v883 = vadd.f32 %v730, %v845
  %v884 = vadd.f32 %v731, %v848
  %v885 = vadd.f32 %v732, %v853
  %v886 = vadd.f32 %v733, %v856
  %v887 = vadd.f32 %v734, %v861
  %v888 = vadd.f32 %v735, %v864
  %v889 = vadd.f32 %v736, %v869
  %v890 = vadd.f32 %v737, %v872
  %891 = vst.msk [vmem:[#allocation4] sm:$0xff] %vm132, %v875
  %892 = vst.msk [vmem:[#allocation4 + $0x8] sm:$0xff] %vm132, %v876
  %893 = vst.msk [vmem:[#allocation4 + $0x10] sm:$0xff] %vm132, %v877
  %894 = vst.msk [vmem:[#allocation4 + $0x18] sm:$0xff] %vm132, %v878
  %895 = vst.msk [vmem:[#allocation4 + $0x20] sm:$0xff] %vm132, %v879
  %896 = vst.msk [vmem:[#allocation4 + $0x28] sm:$0xff] %vm132, %v880
  %897 = vst.msk [vmem:[#allocation4 + $0x30] sm:$0xff] %vm132, %v881
  %898 = vst.msk [vmem:[#allocation4 + $0x38] sm:$0xff] %vm132, %v882
  %899 = vst.msk [vmem:[#allocation4 + $0x40] sm:$0xff] %vm132, %v883
  %900 = vst.msk [vmem:[#allocation4 + $0x48] sm:$0xff] %vm132, %v884
  %901 = vst.msk [vmem:[#allocation4 + $0x50] sm:$0xff] %vm132, %v885
  %902 = vst.msk [vmem:[#allocation4 + $0x58] sm:$0xff] %vm132, %v886
  %903 = vst.msk [vmem:[#allocation4 + $0x60] sm:$0xff] %vm132, %v887
  %904 = vst.msk [vmem:[#allocation4 + $0x68] sm:$0xff] %vm132, %v888
  %905 = vst.msk [vmem:[#allocation4 + $0x70] sm:$0xff] %vm132, %v889
  %906 = vst.msk [vmem:[#allocation4 + $0x78] sm:$0xff] %vm132, %v890
  %907 = vst.msk [vmem:[#allocation2] sm:$0xff] %vm609, %v321
  %908 = vst.msk [vmem:[#allocation2 + $0x8] sm:$0xff] %vm609, %v322
  %909 = vst.msk [vmem:[#allocation2 + $0x10] sm:$0xff] %vm609, %v323
  %910 = vst.msk [vmem:[#allocation2 + $0x18] sm:$0xff] %vm609, %v324
  %911 = vst.msk [vmem:[#allocation2 + $0x20] sm:$0xff] %vm609, %v325
  %912 = vst.msk [vmem:[#allocation2 + $0x28] sm:$0xff] %vm609, %v326
  %913 = vst.msk [vmem:[#allocation2 + $0x30] sm:$0xff] %vm609, %v327
  %914 = vst.msk [vmem:[#allocation2 + $0x38] sm:$0xff] %vm609, %v328
  %915 = vst.msk [vmem:[#allocation2 + $0x40] sm:$0xff] %vm609, %v329
  %916 = vst.msk [vmem:[#allocation2 + $0x48] sm:$0xff] %vm609, %v330
  %917 = vst.msk [vmem:[#allocation2 + $0x50] sm:$0xff] %vm609, %v331
  %918 = vst.msk [vmem:[#allocation2 + $0x58] sm:$0xff] %vm609, %v332
  %919 = vst.msk [vmem:[#allocation2 + $0x60] sm:$0xff] %vm609, %v333
  %920 = vst.msk [vmem:[#allocation2 + $0x68] sm:$0xff] %vm609, %v334
  %921 = vst.msk [vmem:[#allocation2 + $0x70] sm:$0xff] %vm609, %v335
  %922 = vst.msk [vmem:[#allocation2 + $0x78] sm:$0xff] %vm609, %v336
  // Predicated region
  $region18: #{self_transformer_layer.12} parent=0 // pred_check
    %p923 = pneg %p15
  $region19: #{self_transformer_layer.12} parent=0 // pred_check_branch
    %925 = sbr.rel (%p923) target = $region21
  $region20: #{self_transformer_layer.12} parent=0 // pred_region
    %v926 = vld [vmem:[#allocation4] sm:$0xff]
    %v927 = vld [vmem:[#allocation4 + $0x8] sm:$0xff]
    %v928 = vld [vmem:[#allocation4 + $0x10] sm:$0xff]
    %v929 = vld [vmem:[#allocation4 + $0x18] sm:$0xff]
    %v930 = vld [vmem:[#allocation4 + $0x20] sm:$0xff]
    %v931 = vld [vmem:[#allocation4 + $0x28] sm:$0xff]
    %v932 = vld [vmem:[#allocation4 + $0x30] sm:$0xff]
    %v933 = vld [vmem:[#allocation4 + $0x38] sm:$0xff]
    %v934 = vld [vmem:[#allocation4 + $0x40] sm:$0xff]
    %v935 = vld [vmem:[#allocation4 + $0x48] sm:$0xff]
    %v936 = vld [vmem:[#allocation4 + $0x50] sm:$0xff]
    %v937 = vld [vmem:[#allocation4 + $0x58] sm:$0xff]
    %v938 = vld [vmem:[#allocation4 + $0x60] sm:$0xff]
    %v939 = vld [vmem:[#allocation4 + $0x68] sm:$0xff]
    %v940 = vld [vmem:[#allocation4 + $0x70] sm:$0xff]
    %v941 = vld [vmem:[#allocation4 + $0x78] sm:$0xff]
    %v942 = vld [vmem:[#allocation3] sm:$0xff]
    %v943 = vld [vmem:[#allocation3 + $0x8] sm:$0xff]
    %v944 = vld [vmem:[#allocation3 + $0x10] sm:$0xff]
    %v945 = vld [vmem:[#allocation3 + $0x18] sm:$0xff]
    %v946 = vld [vmem:[#allocation3 + $0x20] sm:$0xff]
    %v947 = vld [vmem:[#allocation3 + $0x28] sm:$0xff]
    %v948 = vld [vmem:[#allocation3 + $0x30] sm:$0xff]
    %v949 = vld [vmem:[#allocation3 + $0x38] sm:$0xff]
    %v950 = vld [vmem:[#allocation3 + $0x40] sm:$0xff]
    %v951 = vld [vmem:[#allocation3 + $0x48] sm:$0xff]
    %v952 = vld [vmem:[#allocation3 + $0x50] sm:$0xff]
    %v953 = vld [vmem:[#allocation3 + $0x58] sm:$0xff]
    %v954 = vld [vmem:[#allocation3 + $0x60] sm:$0xff]
    %v955 = vld [vmem:[#allocation3 + $0x68] sm:$0xff]
    %v956 = vld [vmem:[#allocation3 + $0x70] sm:$0xff]
    %v957 = vld [vmem:[#allocation3 + $0x78] sm:$0xff]
    %v958 = vrcp.pop %v942
    %v959 = vrcp.pop %v943
    %v960 = vrcp.pop %v944
    %v961 = vrcp.pop %v945
    %v962 = vrcp.pop %v946
    %v963 = vrcp.pop %v947
    %v964 = vrcp.pop %v948
    %v965 = vrcp.pop %v949
    %v966 = vrcp.pop %v950
    %v967 = vrcp.pop %v951
    %v968 = vrcp.pop %v952
    %v969 = vrcp.pop %v953
    %v970 = vrcp.pop %v954
    %v971 = vrcp.pop %v955
    %v972 = vrcp.pop %v956
    %v973 = vrcp.pop %v957
    %975 = vset.pattern.permute.xlu0 0
    %976 = vperm.xlu0 %975, %v958
    %v977 = vpop.permute.xlu0 %976
    %980 = vset.pattern.permute.xlu0 0
    %981 = vperm.xlu0 %980, %v959
    %v982 = vpop.permute.xlu0 %981
    %985 = vset.pattern.permute.xlu0 0
    %986 = vperm.xlu0 %985, %v960
    %v987 = vpop.permute.xlu0 %986
    %990 = vset.pattern.permute.xlu0 0
    %991 = vperm.xlu0 %990, %v961
    %v992 = vpop.permute.xlu0 %991
    %995 = vset.pattern.permute.xlu0 0
    %996 = vperm.xlu0 %995, %v962
    %v997 = vpop.permute.xlu0 %996
    %1000 = vset.pattern.permute.xlu0 0
    %1001 = vperm.xlu0 %1000, %v963
    %v1002 = vpop.permute.xlu0 %1001
    %1005 = vset.pattern.permute.xlu0 0
    %1006 = vperm.xlu0 %1005, %v964
    %v1007 = vpop.permute.xlu0 %1006
    %1010 = vset.pattern.permute.xlu0 0
    %1011 = vperm.xlu0 %1010, %v965
    %v1012 = vpop.permute.xlu0 %1011
    %1015 = vset.pattern.permute.xlu0 0
    %1016 = vperm.xlu0 %1015, %v966
    %v1017 = vpop.permute.xlu0 %1016
    %1020 = vset.pattern.permute.xlu0 0
    %1021 = vperm.xlu0 %1020, %v967
    %v1022 = vpop.permute.xlu0 %1021
    %1025 = vset.pattern.permute.xlu0 0
    %1026 = vperm.xlu0 %1025, %v968
    %v1027 = vpop.permute.xlu0 %1026
    %1030 = vset.pattern.permute.xlu0 0
    %1031 = vperm.xlu0 %1030, %v969
    %v1032 = vpop.permute.xlu0 %1031
    %1035 = vset.pattern.permute.xlu0 0
    %1036 = vperm.xlu0 %1035, %v970
    %v1037 = vpop.permute.xlu0 %1036
    %1040 = vset.pattern.permute.xlu0 0
    %1041 = vperm.xlu0 %1040, %v971
    %v1042 = vpop.permute.xlu0 %1041
    %1045 = vset.pattern.permute.xlu0 0
    %1046 = vperm.xlu0 %1045, %v972
    %v1047 = vpop.permute.xlu0 %1046
    %1050 = vset.pattern.permute.xlu0 0
    %1051 = vperm.xlu0 %1050, %v973
    %v1052 = vpop.permute.xlu0 %1051
    %v1054 = vmul.f32 %v926, %v977
    %v1055 = vmul.f32 %v927, %v982
    %v1056 = vmul.f32 %v928, %v987
    %v1057 = vmul.f32 %v929, %v992
    %v1058 = vmul.f32 %v930, %v997
    %v1059 = vmul.f32 %v931, %v1002
    %v1060 = vmul.f32 %v932, %v1007
    %v1061 = vmul.f32 %v933, %v1012
    %v1062 = vmul.f32 %v934, %v1017
    %v1063 = vmul.f32 %v935, %v1022
    %v1064 = vmul.f32 %v936, %v1027
    %v1065 = vmul.f32 %v937, %v1032
    %v1066 = vmul.f32 %v938, %v1037
    %v1067 = vmul.f32 %v939, %v1042
    %v1068 = vmul.f32 %v940, %v1047
    %v1069 = vmul.f32 %v941, %v1052
    %1070 = vst.msk [vmem:[%s3] sm:$0xff] %vm132, %v1054
    %1071 = vst.msk [vmem:[%s3 + $0x8] sm:$0xff] %vm132, %v1055
    %1072 = vst.msk [vmem:[%s3 + $0x10] sm:$0xff] %vm132, %v1056
    %1073 = vst.msk [vmem:[%s3 + $0x18] sm:$0xff] %vm132, %v1057
    %1074 = vst.msk [vmem:[%s3 + $0x20] sm:$0xff] %vm132, %v1058
    %1075 = vst.msk [vmem:[%s3 + $0x28] sm:$0xff] %vm132, %v1059
    %1076 = vst.msk [vmem:[%s3 + $0x30] sm:$0xff] %vm132, %v1060
    %1077 = vst.msk [vmem:[%s3 + $0x38] sm:$0xff] %vm132, %v1061
    %1078 = vst.msk [vmem:[%s3 + $0x40] sm:$0xff] %vm132, %v1062
    %1079 = vst.msk [vmem:[%s3 + $0x48] sm:$0xff] %vm132, %v1063
    %1080 = vst.msk [vmem:[%s3 + $0x50] sm:$0xff] %vm132, %v1064
    %1081 = vst.msk [vmem:[%s3 + $0x58] sm:$0xff] %vm132, %v1065
    %1082 = vst.msk [vmem:[%s3 + $0x60] sm:$0xff] %vm132, %v1066
    %1083 = vst.msk [vmem:[%s3 + $0x68] sm:$0xff] %vm132, %v1067
    %1084 = vst.msk [vmem:[%s3 + $0x70] sm:$0xff] %vm132, %v1068
    %1085 = vst.msk [vmem:[%s3 + $0x78] sm:$0xff] %vm132, %v1069
  $region21: #{self_transformer_layer.12} parent=0 // pred_fallthru
    _
  // Predicated region
  $region22: #{self_transformer_layer.12} parent=0 // pred_check
    _
  $region23: #{self_transformer_layer.12} parent=0 // pred_check_branch
    %1087 = sbr.rel (0) target = $region25
  $region24: #{self_transformer_layer.12} parent=0 // pred_region
    _
  $region25: #{self_transformer_layer.12} parent=0 // pred_fallthru
    _
  // Predicated region
  $region26: #{self_transformer_layer.12} parent=0 // pred_check
    _
  $region27: #{self_transformer_layer.12} parent=0 // pred_check_branch
    %1089 = sbr.rel (0) target = $region29
  $region28: #{self_transformer_layer.12} parent=0 // pred_region
    _
  $region29: #{self_transformer_layer.12} parent=0 // pred_fallthru
    _

// kernel: self_transformer_layer.13
$region0: #{self_transformer_layer.13}
  #allocation0 [shape = 'u32[]', space=smem, size = 0x4, offset = 0x4, fixed_abs, tag = 'smem constant byte address 0x4 - core index']
  #allocation1 [shape = 'u32[144,128]{1,0:T(1,128)}', space=vmem, size = 0x12000, scoped, tag = 'internal scratch']
  #allocation2 [shape = 'f32[128,16]{1,0:T(8,128)}', space=vmem, size = 0x10000, scoped, tag = 'scratch operand']
  %s0 = inlined_call_operand.vmem [shape: bf16[128,432], index: 0, kind: input, shape index: {}]
  %s1 = inlined_call_operand.vmem [shape: bf16[432,16], index: 1, kind: input, shape index: {}]
  %s2 = inlined_call_operand.vmem [shape: f32[128,16], index: 2, kind: output, shape index: {0}]
  %s3 = inlined_call_operand.vmem [shape: f32[1,2,16], index: 3, kind: output, shape index: {1}]
  %4 = xla_tuple %s2, %s3
  %s5 = sld [smem:[#allocation0]]
  $region34: #{self_transformer_layer.13} parent=0
    _
  %s7 = ssub.s32 1, %s5
  %s8 = scalar_select 0, %s7, %s5
  // Predicated region
  $region2: #{self_transformer_layer.13} parent=0 // pred_check
    _
  $region3: #{self_transformer_layer.13} parent=0 // pred_check_branch
    %10 = sbr.rel (0) target = $region5
  $region4: #{self_transformer_layer.13} parent=0 // pred_region
    _
  $region5: #{self_transformer_layer.13} parent=0 // pred_fallthru
    _
  // Predicated region
  $region6: #{self_transformer_layer.13} parent=0 // pred_check
    _
  $region7: #{self_transformer_layer.13} parent=0 // pred_check_branch
    %12 = sbr.rel (0) target = $region9
  $region8: #{self_transformer_layer.13} parent=0 // pred_region
    _
  $region9: #{self_transformer_layer.13} parent=0 // pred_fallthru
    _
  %p14 = scmp.eq.s32.totalorder 0, 0
  // Predicated region
  $region10: #{self_transformer_layer.13} parent=0 // pred_check
    %p15 = pneg %p14
  $region11: #{self_transformer_layer.13} parent=0 // pred_check_branch
    %17 = sbr.rel (%p15) target = $region13
  $region12: #{self_transformer_layer.13} parent=0 // pred_region
    %vm18 = vcmask 130048
    %19 = vst.msk [vmem:[#allocation2] sm:$0xff] %vm18, 0.0
    %20 = vst.msk [vmem:[#allocation2 + $0x8] sm:$0xff] %vm18, 0.0
    %21 = vst.msk [vmem:[#allocation2 + $0x10] sm:$0xff] %vm18, 0.0
    %22 = vst.msk [vmem:[#allocation2 + $0x18] sm:$0xff] %vm18, 0.0
    %23 = vst.msk [vmem:[#allocation2 + $0x20] sm:$0xff] %vm18, 0.0
    %24 = vst.msk [vmem:[#allocation2 + $0x28] sm:$0xff] %vm18, 0.0
    %25 = vst.msk [vmem:[#allocation2 + $0x30] sm:$0xff] %vm18, 0.0
    %26 = vst.msk [vmem:[#allocation2 + $0x38] sm:$0xff] %vm18, 0.0
    %27 = vst.msk [vmem:[#allocation2 + $0x40] sm:$0xff] %vm18, 0.0
    %28 = vst.msk [vmem:[#allocation2 + $0x48] sm:$0xff] %vm18, 0.0
    %29 = vst.msk [vmem:[#allocation2 + $0x50] sm:$0xff] %vm18, 0.0
    %30 = vst.msk [vmem:[#allocation2 + $0x58] sm:$0xff] %vm18, 0.0
    %31 = vst.msk [vmem:[#allocation2 + $0x60] sm:$0xff] %vm18, 0.0
    %32 = vst.msk [vmem:[#allocation2 + $0x68] sm:$0xff] %vm18, 0.0
    %33 = vst.msk [vmem:[#allocation2 + $0x70] sm:$0xff] %vm18, 0.0
    %34 = vst.msk [vmem:[#allocation2 + $0x78] sm:$0xff] %vm18, 0.0
  $region13: #{self_transformer_layer.13} parent=0 // pred_fallthru
    _
  %v35 = vld [vmem:[#allocation2] sm:$0xff]
  %v36 = vld [vmem:[#allocation2 + $0x8] sm:$0xff]
  %v37 = vld [vmem:[#allocation2 + $0x10] sm:$0xff]
  %v38 = vld [vmem:[#allocation2 + $0x18] sm:$0xff]
  %v39 = vld [vmem:[#allocation2 + $0x20] sm:$0xff]
  %v40 = vld [vmem:[#allocation2 + $0x28] sm:$0xff]
  %v41 = vld [vmem:[#allocation2 + $0x30] sm:$0xff]
  %v42 = vld [vmem:[#allocation2 + $0x38] sm:$0xff]
  %v43 = vld [vmem:[#allocation2 + $0x40] sm:$0xff]
  %v44 = vld [vmem:[#allocation2 + $0x48] sm:$0xff]
  %v45 = vld [vmem:[#allocation2 + $0x50] sm:$0xff]
  %v46 = vld [vmem:[#allocation2 + $0x58] sm:$0xff]
  %v47 = vld [vmem:[#allocation2 + $0x60] sm:$0xff]
  %v48 = vld [vmem:[#allocation2 + $0x68] sm:$0xff]
  %v49 = vld [vmem:[#allocation2 + $0x70] sm:$0xff]
  %v50 = vld [vmem:[#allocation2 + $0x78] sm:$0xff]
  %v51 = vld [vmem:[%s0] sm:$0xff]
  %v52 = vld [vmem:[%s0 + $0x8] sm:$0xff]
  %v53 = vld [vmem:[%s0 + $0x10] sm:$0xff]
  %v54 = vld [vmem:[%s0 + $0x18] sm:$0xff]
  %v55 = vld [vmem:[%s0 + $0x20] sm:$0xff]
  %v56 = vld [vmem:[%s0 + $0x28] sm:$0xff]
  %v57 = vld [vmem:[%s0 + $0x30] sm:$0xff]
  %v58 = vld [vmem:[%s0 + $0x38] sm:$0xff]
  %v59 = vld [vmem:[%s0 + $0x40] sm:$0xff]
  %v60 = vld [vmem:[%s0 + $0x48] sm:$0xff]
  %v61 = vld [vmem:[%s0 + $0x50] sm:$0xff]
  %v62 = vld [vmem:[%s0 + $0x58] sm:$0xff]
  %v63 = vld [vmem:[%s0 + $0x60] sm:$0xff]
  %v64 = vld [vmem:[%s0 + $0x68] sm:$0xff]
  %v65 = vld [vmem:[%s0 + $0x70] sm:$0xff]
  %v66 = vld [vmem:[%s0 + $0x78] sm:$0xff]
  %v67 = vld [vmem:[%s0 + $0x80] sm:$0xff]
  %v68 = vld [vmem:[%s0 + $0x88] sm:$0xff]
  %v69 = vld [vmem:[%s0 + $0x90] sm:$0xff]
  %v70 = vld [vmem:[%s0 + $0x98] sm:$0xff]
  %v71 = vld [vmem:[%s0 + $0xa0] sm:$0xff]
  %v72 = vld [vmem:[%s0 + $0xa8] sm:$0xff]
  %v73 = vld [vmem:[%s0 + $0xb0] sm:$0xff]
  %v74 = vld [vmem:[%s0 + $0xb8] sm:$0xff]
  %v75 = vld [vmem:[%s0 + $0xc0] sm:$0xff]
  %v76 = vld [vmem:[%s0 + $0xc8] sm:$0xff]
  %v77 = vld [vmem:[%s0 + $0xd0] sm:$0xff]
  %v78 = vld [vmem:[%s0 + $0xd8] sm:$0xff]
  %v79 = vld [vmem:[%s0 + $0xe0] sm:$0xff]
  %v80 = vld [vmem:[%s0 + $0xe8] sm:$0xff]
  %v81 = vld [vmem:[%s0 + $0xf0] sm:$0xff]
  %v82 = vld [vmem:[%s0 + $0xf8] sm:$0xff]
  %v83 = vld [vmem:[%s1] sm:$0xf]
  %v84 = vld [vmem:[%s1 + $0x4] sm:$0xf]
  %v85 = vld [vmem:[%s1 + $0x8] sm:$0xf]
  %v86 = vld [vmem:[%s1 + $0xc] sm:$0xf]
  %v87 = vld [vmem:[%s1 + $0x10] sm:$0xf]
  %v88 = vld [vmem:[%s1 + $0x14] sm:$0xf]
  %v89 = vld [vmem:[%s1 + $0x18] sm:$0xf]
  %v90 = vld [vmem:[%s1 + $0x1c] sm:$0xf]
  %v91 = vld [vmem:[%s1 + $0x20] sm:$0xf]
  %v92 = vld [vmem:[%s1 + $0x24] sm:$0xf]
  %v93 = vld [vmem:[%s1 + $0x28] sm:$0xf]
  %v94 = vld [vmem:[%s1 + $0x2c] sm:$0xf]
  %v95 = vld [vmem:[%s1 + $0x30] sm:$0xf]
  %v96 = vld [vmem:[%s1 + $0x34] sm:$0xf]
  %v97 = vld [vmem:[%s1 + $0x38] sm:$0xf]
  %v98 = vld [vmem:[%s1 + $0x3c] sm:$0xf]
  %v99 = vld [vmem:[%s1 + $0x40] sm:$0xf]
  %v100 = vld [vmem:[%s1 + $0x44] sm:$0xf]
  %v101 = vld [vmem:[%s1 + $0x48] sm:$0xf]
  %v102 = vld [vmem:[%s1 + $0x4c] sm:$0xf]
  %v103 = vld [vmem:[%s1 + $0x50] sm:$0xf]
  %v104 = vld [vmem:[%s1 + $0x54] sm:$0xf]
  %v105 = vld [vmem:[%s1 + $0x58] sm:$0xf]
  %v106 = vld [vmem:[%s1 + $0x5c] sm:$0xf]
  %v107 = vld [vmem:[%s1 + $0x60] sm:$0xf]
  %v108 = vld [vmem:[%s1 + $0x64] sm:$0xf]
  %v109 = vld [vmem:[%s1 + $0x68] sm:$0xf]
  %v110 = vld [vmem:[%s1 + $0x6c] sm:$0xf]
  %v111 = vld [vmem:[%s1 + $0x70] sm:$0xf]
  %v112 = vld [vmem:[%s1 + $0x74] sm:$0xf]
  %v113 = vld [vmem:[%s1 + $0x78] sm:$0xf]
  %v114 = vld [vmem:[%s1 + $0x7c] sm:$0xf]
  %v115 = vld [vmem:[%s1 + $0x80] sm:$0xf]
  %v116 = vld [vmem:[%s1 + $0x84] sm:$0xf]
  %v117 = vld [vmem:[%s1 + $0x88] sm:$0xf]
  %v118 = vld [vmem:[%s1 + $0x8c] sm:$0xf]
  %v119 = vld [vmem:[%s1 + $0x90] sm:$0xf]
  %v120 = vld [vmem:[%s1 + $0x94] sm:$0xf]
  %v121 = vld [vmem:[%s1 + $0x98] sm:$0xf]
  %v122 = vld [vmem:[%s1 + $0x9c] sm:$0xf]
  %v123 = vld [vmem:[%s1 + $0xa0] sm:$0xf]
  %v124 = vld [vmem:[%s1 + $0xa4] sm:$0xf]
  %v125 = vld [vmem:[%s1 + $0xa8] sm:$0xf]
  %v126 = vld [vmem:[%s1 + $0xac] sm:$0xf]
  %v127 = vld [vmem:[%s1 + $0xb0] sm:$0xf]
  %v128 = vld [vmem:[%s1 + $0xb4] sm:$0xf]
  %v129 = vld [vmem:[%s1 + $0xb8] sm:$0xf]
  %v130 = vld [vmem:[%s1 + $0xbc] sm:$0xf]
  %v131 = vld [vmem:[%s1 + $0xc0] sm:$0xf]
  %v132 = vld [vmem:[%s1 + $0xc4] sm:$0xf]
  %v133 = vld [vmem:[%s1 + $0xc8] sm:$0xf]
  %v134 = vld [vmem:[%s1 + $0xcc] sm:$0xf]
  %v135 = vld [vmem:[%s1 + $0xd0] sm:$0xf]
  %v136 = vld [vmem:[%s1 + $0xd4] sm:$0xf]
  %v169 = vunpack.c.l.b16 %v51
  %v170 = vunpack.c.h.b16 %v51
  %v171 = vunpack.c.l.b16 %v52
  %v172 = vunpack.c.h.b16 %v52
  %v173 = vunpack.c.l.b16 %v53
  %v174 = vunpack.c.h.b16 %v53
  %v175 = vunpack.c.l.b16 %v54
  %v176 = vunpack.c.h.b16 %v54
  %v177 = vunpack.c.l.b16 %v55
  %v178 = vunpack.c.h.b16 %v55
  %v179 = vunpack.c.l.b16 %v56
  %v180 = vunpack.c.h.b16 %v56
  %v181 = vunpack.c.l.b16 %v57
  %v182 = vunpack.c.h.b16 %v57
  %v183 = vunpack.c.l.b16 %v58
  %v184 = vunpack.c.h.b16 %v58
  %v185 = vunpack.c.l.b16 %v59
  %v186 = vunpack.c.h.b16 %v59
  %v187 = vunpack.c.l.b16 %v60
  %v188 = vunpack.c.h.b16 %v60
  %v189 = vunpack.c.l.b16 %v61
  %v190 = vunpack.c.h.b16 %v61
  %v191 = vunpack.c.l.b16 %v62
  %v192 = vunpack.c.h.b16 %v62
  %v193 = vunpack.c.l.b16 %v63
  %v194 = vunpack.c.h.b16 %v63
  %v195 = vunpack.c.l.b16 %v64
  %v196 = vunpack.c.h.b16 %v64
  %v197 = vunpack.c.l.b16 %v65
  %v198 = vunpack.c.h.b16 %v65
  %v199 = vunpack.c.l.b16 %v66
  %v200 = vunpack.c.h.b16 %v66
  %v201 = vunpack.c.l.b16 %v67
  %v202 = vunpack.c.h.b16 %v67
  %v203 = vunpack.c.l.b16 %v68
  %v204 = vunpack.c.h.b16 %v68
  %v205 = vunpack.c.l.b16 %v69
  %v206 = vunpack.c.h.b16 %v69
  %v207 = vunpack.c.l.b16 %v70
  %v208 = vunpack.c.h.b16 %v70
  %v209 = vunpack.c.l.b16 %v71
  %v210 = vunpack.c.h.b16 %v71
  %v211 = vunpack.c.l.b16 %v72
  %v212 = vunpack.c.h.b16 %v72
  %v213 = vunpack.c.l.b16 %v73
  %v214 = vunpack.c.h.b16 %v73
  %v215 = vunpack.c.l.b16 %v74
  %v216 = vunpack.c.h.b16 %v74
  %v217 = vunpack.c.l.b16 %v75
  %v218 = vunpack.c.h.b16 %v75
  %v219 = vunpack.c.l.b16 %v76
  %v220 = vunpack.c.h.b16 %v76
  %v221 = vunpack.c.l.b16 %v77
  %v222 = vunpack.c.h.b16 %v77
  %v223 = vunpack.c.l.b16 %v78
  %v224 = vunpack.c.h.b16 %v78
  %v225 = vunpack.c.l.b16 %v79
  %v226 = vunpack.c.h.b16 %v79
  %v227 = vunpack.c.l.b16 %v80
  %v228 = vunpack.c.h.b16 %v80
  %v229 = vunpack.c.l.b16 %v81
  %v230 = vunpack.c.h.b16 %v81
  %v231 = vunpack.c.l.b16 %v82
  %v232 = vunpack.c.h.b16 %v82
  %v233 = vpack.c.b16 %v173, %v169
  %v234 = vpack.c.b16 %v174, %v170
  %v235 = vpack.c.b16 %v175, %v171
  %v236 = vpack.c.b16 %v176, %v172
  %v237 = vpack.c.b16 %v181, %v177
  %v238 = vpack.c.b16 %v182, %v178
  %v239 = vpack.c.b16 %v183, %v179
  %v240 = vpack.c.b16 %v184, %v180
  %v241 = vpack.c.b16 %v189, %v185
  %v242 = vpack.c.b16 %v190, %v186
  %v243 = vpack.c.b16 %v191, %v187
  %v244 = vpack.c.b16 %v192, %v188
  %v245 = vpack.c.b16 %v197, %v193
  %v246 = vpack.c.b16 %v198, %v194
  %v247 = vpack.c.b16 %v199, %v195
  %v248 = vpack.c.b16 %v200, %v196
  %v249 = vpack.c.b16 %v205, %v201
  %v250 = vpack.c.b16 %v206, %v202
  %v251 = vpack.c.b16 %v207, %v203
  %v252 = vpack.c.b16 %v208, %v204
  %v253 = vpack.c.b16 %v213, %v209
  %v254 = vpack.c.b16 %v214, %v210
  %v255 = vpack.c.b16 %v215, %v211
  %v256 = vpack.c.b16 %v216, %v212
  %v257 = vpack.c.b16 %v221, %v217
  %v258 = vpack.c.b16 %v222, %v218
  %v259 = vpack.c.b16 %v223, %v219
  %v260 = vpack.c.b16 %v224, %v220
  %v261 = vpack.c.b16 %v229, %v225
  %v262 = vpack.c.b16 %v230, %v226
  %v263 = vpack.c.b16 %v231, %v227
  %v264 = vpack.c.b16 %v232, %v228
  %v343 = vunpack.c.l.b16 %v83
  %v344 = vunpack.c.l.b16 %v84
  %v345 = vunpack.c.l.b16 %v85
  %v346 = vunpack.c.l.b16 %v86
  %v347 = vunpack.c.l.b16 %v87
  %v348 = vunpack.c.l.b16 %v88
  %v349 = vunpack.c.l.b16 %v89
  %v350 = vunpack.c.l.b16 %v90
  %v351 = vunpack.c.l.b16 %v91
  %v352 = vunpack.c.l.b16 %v92
  %v353 = vunpack.c.l.b16 %v93
  %v354 = vunpack.c.l.b16 %v94
  %v355 = vunpack.c.l.b16 %v95
  %v356 = vunpack.c.l.b16 %v96
  %v357 = vunpack.c.l.b16 %v97
  %v358 = vunpack.c.l.b16 %v98
  %v359 = vunpack.c.l.b16 %v99
  %v360 = vunpack.c.l.b16 %v100
  %v361 = vunpack.c.l.b16 %v101
  %v362 = vunpack.c.l.b16 %v102
  %v363 = vunpack.c.l.b16 %v103
  %v364 = vunpack.c.l.b16 %v104
  %v365 = vunpack.c.l.b16 %v105
  %v366 = vunpack.c.l.b16 %v106
  %v367 = vunpack.c.l.b16 %v107
  %v368 = vunpack.c.l.b16 %v108
  %v369 = vunpack.c.l.b16 %v109
  %v370 = vunpack.c.l.b16 %v110
  %v371 = vunpack.c.l.b16 %v111
  %v372 = vunpack.c.l.b16 %v112
  %v373 = vunpack.c.l.b16 %v113
  %v374 = vunpack.c.l.b16 %v114
  %v375 = vunpack.c.l.b16 %v115
  %v376 = vunpack.c.l.b16 %v116
  %v377 = vunpack.c.l.b16 %v117
  %v378 = vunpack.c.l.b16 %v118
  %v379 = vunpack.c.l.b16 %v119
  %v380 = vunpack.c.l.b16 %v120
  %v381 = vunpack.c.l.b16 %v121
  %v382 = vunpack.c.l.b16 %v122
  %v383 = vunpack.c.l.b16 %v123
  %v384 = vunpack.c.l.b16 %v124
  %v385 = vunpack.c.l.b16 %v125
  %v386 = vunpack.c.l.b16 %v126
  %v387 = vunpack.c.l.b16 %v127
  %v388 = vunpack.c.l.b16 %v128
  %v389 = vunpack.c.l.b16 %v129
  %v390 = vunpack.c.l.b16 %v130
  %v391 = vunpack.c.l.b16 %v131
  %v392 = vunpack.c.l.b16 %v132
  %v393 = vunpack.c.l.b16 %v133
  %v394 = vunpack.c.l.b16 %v134
  %v395 = vunpack.c.l.b16 %v135
  %v396 = vunpack.c.l.b16 %v136
  %v397 = vpack.c.b16 %v344, %v343
  %v398 = vpack.c.b16 %v346, %v345
  %v399 = vpack.c.b16 %v348, %v347
  %v400 = vpack.c.b16 %v350, %v349
  %v401 = vpack.c.b16 %v352, %v351
  %v402 = vpack.c.b16 %v354, %v353
  %v403 = vpack.c.b16 %v356, %v355
  %v404 = vpack.c.b16 %v358, %v357
  %v405 = vpack.c.b16 %v360, %v359
  %v406 = vpack.c.b16 %v362, %v361
  %v407 = vpack.c.b16 %v364, %v363
  %v408 = vpack.c.b16 %v366, %v365
  %v409 = vpack.c.b16 %v368, %v367
  %v410 = vpack.c.b16 %v370, %v369
  %v411 = vpack.c.b16 %v372, %v371
  %v412 = vpack.c.b16 %v374, %v373
  %v413 = vpack.c.b16 %v376, %v375
  %v414 = vpack.c.b16 %v378, %v377
  %v415 = vpack.c.b16 %v380, %v379
  %v416 = vpack.c.b16 %v382, %v381
  %v417 = vpack.c.b16 %v384, %v383
  %v418 = vpack.c.b16 %v386, %v385
  %v419 = vpack.c.b16 %v388, %v387
  %v420 = vpack.c.b16 %v390, %v389
  %v421 = vpack.c.b16 %v392, %v391
  %v422 = vpack.c.b16 %v394, %v393
  %v423 = vpack.c.b16 %v396, %v395
  %vm451 = vcmask 392192
  %v453 = vsel %vm451, %v236, 0
  %v456 = vsel %vm451, %v240, 0
  %v459 = vsel %vm451, %v244, 0
  %v462 = vsel %vm451, %v248, 0
  %v465 = vsel %vm451, %v252, 0
  %v468 = vsel %vm451, %v256, 0
  %v471 = vsel %vm451, %v260, 0
  %v474 = vsel %vm451, %v264, 0
  %476 = vmatprep.subr.bf16.mxu0 0
  %477 = vmatpush1.bf16.msra.mxu0 %v404
  %478 = vmatprep.subr.bf16.mxu0 0
  %479 = vmatpush1.bf16.msra.mxu0 %v403
  %480 = vmatprep.subr.bf16.mxu0 0
  %481 = vmatpush1.bf16.msra.mxu0 %v402
  %482 = vmatprep.subr.bf16.mxu0 0
  %483 = vmatpush1.bf16.msra.mxu0 %v401
  %484 = vmatprep.subr.bf16.mxu0 0
  %485 = vmatpush1.bf16.msra.mxu0 %v400
  %486 = vmatprep.subr.bf16.mxu0 0
  %487 = vmatpush1.bf16.msra.mxu0 %v399
  %488 = vmatprep.subr.bf16.mxu0 0
  %489 = vmatpush1.bf16.msra.mxu0 %v398
  %490 = vmatprep.subr.bf16.mxu0 0
  %491 = vmatpush1.bf16.msra.mxu0 %v397
  %492 = vmatprep.subr.bf16.mxu0 0
  %493 = vmatpush2.bf16.msra.mxu0 %v412
  %494 = vmatprep.subr.bf16.mxu0 0
  %495 = vmatpush2.bf16.msra.mxu0 %v411
  %496 = vmatprep.subr.bf16.mxu0 0
  %497 = vmatpush2.bf16.msra.mxu0 %v410
  %498 = vmatprep.subr.bf16.mxu0 0
  %499 = vmatpush2.bf16.msra.mxu0 %v409
  %500 = vmatprep.subr.bf16.mxu0 0
  %501 = vmatpush2.bf16.msra.mxu0 %v408
  %502 = vmatprep.subr.bf16.mxu0 0
  %503 = vmatpush2.bf16.msra.mxu0 %v407
  %504 = vmatprep.subr.bf16.mxu0 0
  %505 = vmatpush2.bf16.msra.mxu0 %v406
  %506 = vmatprep.subr.bf16.mxu0 0
  %507 = vmatpush2.bf16.msra.mxu0 %v405
  %508 = vmatprep.mubr.bf16.mxu0 %v234
  %509 = vmatmul.mubr.bf16.gmra.mxu0 %v233
  %v510 = vpop.f32.mrf.mxu0
  %v511 = vadd.f32 0.0, %v510
  %v512 = vpop.f32.mrf.mxu0
  %v513 = vpop.f32.mrf.mxu0
  %v514 = vadd.f32 0.0, %v513
  %v515 = vpop.f32.mrf.mxu0
  %516 = vmatprep.mubr.bf16.mxu0 %v238
  %517 = vmatmul.mubr.bf16.gmra.mxu0 %v237
  %v518 = vpop.f32.mrf.mxu0
  %v519 = vadd.f32 0.0, %v518
  %v520 = vpop.f32.mrf.mxu0
  %v521 = vpop.f32.mrf.mxu0
  %v522 = vadd.f32 0.0, %v521
  %v523 = vpop.f32.mrf.mxu0
  %524 = vmatprep.mubr.bf16.mxu0 %v242
  %525 = vmatmul.mubr.bf16.gmra.mxu0 %v241
  %v526 = vpop.f32.mrf.mxu0
  %v527 = vadd.f32 0.0, %v526
  %v528 = vpop.f32.mrf.mxu0
  %v529 = vpop.f32.mrf.mxu0
  %v530 = vadd.f32 0.0, %v529
  %v531 = vpop.f32.mrf.mxu0
  %532 = vmatprep.mubr.bf16.mxu0 %v246
  %533 = vmatmul.mubr.bf16.gmra.mxu0 %v245
  %v534 = vpop.f32.mrf.mxu0
  %v535 = vadd.f32 0.0, %v534
  %v536 = vpop.f32.mrf.mxu0
  %v537 = vpop.f32.mrf.mxu0
  %v538 = vadd.f32 0.0, %v537
  %v539 = vpop.f32.mrf.mxu0
  %540 = vmatprep.mubr.bf16.mxu0 %v250
  %541 = vmatmul.mubr.bf16.gmra.mxu0 %v249
  %v542 = vpop.f32.mrf.mxu0
  %v543 = vadd.f32 0.0, %v542
  %v544 = vpop.f32.mrf.mxu0
  %v545 = vpop.f32.mrf.mxu0
  %v546 = vadd.f32 0.0, %v545
  %v547 = vpop.f32.mrf.mxu0
  %548 = vmatprep.mubr.bf16.mxu0 %v254
  %549 = vmatmul.mubr.bf16.gmra.mxu0 %v253
  %v550 = vpop.f32.mrf.mxu0
  %v551 = vadd.f32 0.0, %v550
  %v552 = vpop.f32.mrf.mxu0
  %v553 = vpop.f32.mrf.mxu0
  %v554 = vadd.f32 0.0, %v553
  %v555 = vpop.f32.mrf.mxu0
  %556 = vmatprep.mubr.bf16.mxu0 %v258
  %557 = vmatmul.mubr.bf16.gmra.mxu0 %v257
  %v558 = vpop.f32.mrf.mxu0
  %v559 = vadd.f32 0.0, %v558
  %v560 = vpop.f32.mrf.mxu0
  %v561 = vpop.f32.mrf.mxu0
  %v562 = vadd.f32 0.0, %v561
  %v563 = vpop.f32.mrf.mxu0
  %564 = vmatprep.mubr.bf16.mxu0 %v262
  %565 = vmatmul.mubr.bf16.gmra.mxu0 %v261
  %v566 = vpop.f32.mrf.mxu0
  %v567 = vadd.f32 0.0, %v566
  %v568 = vpop.f32.mrf.mxu0
  %v569 = vpop.f32.mrf.mxu0
  %v570 = vadd.f32 0.0, %v569
  %v571 = vpop.f32.mrf.mxu0
  %572 = vdwg.mxu0
  %573 = vmatprep.subr.bf16.mxu0 0
  %574 = vmatpush1.bf16.msra.mxu0 %v420
  %575 = vmatprep.subr.bf16.mxu0 0
  %576 = vmatpush1.bf16.msra.mxu0 %v419
  %577 = vmatprep.subr.bf16.mxu0 0
  %578 = vmatpush1.bf16.msra.mxu0 %v418
  %579 = vmatprep.subr.bf16.mxu0 0
  %580 = vmatpush1.bf16.msra.mxu0 %v417
  %581 = vmatprep.subr.bf16.mxu0 0
  %582 = vmatpush1.bf16.msra.mxu0 %v416
  %583 = vmatprep.subr.bf16.mxu0 0
  %584 = vmatpush1.bf16.msra.mxu0 %v415
  %585 = vmatprep.subr.bf16.mxu0 0
  %586 = vmatpush1.bf16.msra.mxu0 %v414
  %587 = vmatprep.subr.bf16.mxu0 0
  %588 = vmatpush1.bf16.msra.mxu0 %v413
  %589 = vmatprep.subr.bf16.mxu0 0
  %590 = vmatpush2.bf16.msra.mxu0 0
  %591 = vmatprep.subr.bf16.mxu0 0
  %592 = vmatpush2.bf16.msra.mxu0 0
  %593 = vmatprep.subr.bf16.mxu0 0
  %594 = vmatpush2.bf16.msra.mxu0 0
  %595 = vmatprep.subr.bf16.mxu0 0
  %596 = vmatpush2.bf16.msra.mxu0 0
  %597 = vmatprep.subr.bf16.mxu0 0
  %598 = vmatpush2.bf16.msra.mxu0 0
  %599 = vmatprep.subr.bf16.mxu0 0
  %600 = vmatpush2.bf16.msra.mxu0 %v423
  %601 = vmatprep.subr.bf16.mxu0 0
  %602 = vmatpush2.bf16.msra.mxu0 %v422
  %603 = vmatprep.subr.bf16.mxu0 0
  %604 = vmatpush2.bf16.msra.mxu0 %v421
  %605 = vmatprep.mubr.bf16.mxu0 %v453
  %606 = vmatmul.mubr.bf16.gmra.mxu0 %v235
  %v607 = vpop.f32.mrf.mxu0
  %v608 = vadd.f32 %v511, %v607
  %v609 = vpop.f32.mrf.mxu0
  %v610 = vpop.f32.mrf.mxu0
  %v611 = vadd.f32 %v514, %v610
  %v612 = vpop.f32.mrf.mxu0
  %613 = vmatprep.mubr.bf16.mxu0 %v456
  %614 = vmatmul.mubr.bf16.gmra.mxu0 %v239
  %v615 = vpop.f32.mrf.mxu0
  %v616 = vadd.f32 %v519, %v615
  %v617 = vpop.f32.mrf.mxu0
  %v618 = vpop.f32.mrf.mxu0
  %v619 = vadd.f32 %v522, %v618
  %v620 = vpop.f32.mrf.mxu0
  %621 = vmatprep.mubr.bf16.mxu0 %v459
  %622 = vmatmul.mubr.bf16.gmra.mxu0 %v243
  %v623 = vpop.f32.mrf.mxu0
  %v624 = vadd.f32 %v527, %v623
  %v625 = vpop.f32.mrf.mxu0
  %v626 = vpop.f32.mrf.mxu0
  %v627 = vadd.f32 %v530, %v626
  %v628 = vpop.f32.mrf.mxu0
  %629 = vmatprep.mubr.bf16.mxu0 %v462
  %630 = vmatmul.mubr.bf16.gmra.mxu0 %v247
  %v631 = vpop.f32.mrf.mxu0
  %v632 = vadd.f32 %v535, %v631
  %v633 = vpop.f32.mrf.mxu0
  %v634 = vpop.f32.mrf.mxu0
  %v635 = vadd.f32 %v538, %v634
  %v636 = vpop.f32.mrf.mxu0
  %637 = vmatprep.mubr.bf16.mxu0 %v465
  %638 = vmatmul.mubr.bf16.gmra.mxu0 %v251
  %v639 = vpop.f32.mrf.mxu0
  %v640 = vadd.f32 %v543, %v639
  %v641 = vpop.f32.mrf.mxu0
  %v642 = vpop.f32.mrf.mxu0
  %v643 = vadd.f32 %v546, %v642
  %v644 = vpop.f32.mrf.mxu0
  %645 = vmatprep.mubr.bf16.mxu0 %v468
  %646 = vmatmul.mubr.bf16.gmra.mxu0 %v255
  %v647 = vpop.f32.mrf.mxu0
  %v648 = vadd.f32 %v551, %v647
  %v649 = vpop.f32.mrf.mxu0
  %v650 = vpop.f32.mrf.mxu0
  %v651 = vadd.f32 %v554, %v650
  %v652 = vpop.f32.mrf.mxu0
  %653 = vmatprep.mubr.bf16.mxu0 %v471
  %654 = vmatmul.mubr.bf16.gmra.mxu0 %v259
  %v655 = vpop.f32.mrf.mxu0
  %v656 = vadd.f32 %v559, %v655
  %v657 = vpop.f32.mrf.mxu0
  %v658 = vpop.f32.mrf.mxu0
  %v659 = vadd.f32 %v562, %v658
  %v660 = vpop.f32.mrf.mxu0
  %661 = vmatprep.mubr.bf16.mxu0 %v474
  %662 = vmatmul.mubr.bf16.gmra.mxu0 %v263
  %v663 = vpop.f32.mrf.mxu0
  %v664 = vadd.f32 %v567, %v663
  %v665 = vpop.f32.mrf.mxu0
  %v666 = vpop.f32.mrf.mxu0
  %v667 = vadd.f32 %v570, %v666
  %v668 = vpop.f32.mrf.mxu0
  %669 = vdwg.mxu0
  %v670 = vadd.f32 %v35, %v608
  %v671 = vadd.f32 %v36, %v611
  %v672 = vadd.f32 %v37, %v616
  %v673 = vadd.f32 %v38, %v619
  %v674 = vadd.f32 %v39, %v624
  %v675 = vadd.f32 %v40, %v627
  %v676 = vadd.f32 %v41, %v632
  %v677 = vadd.f32 %v42, %v635
  %v678 = vadd.f32 %v43, %v640
  %v679 = vadd.f32 %v44, %v643
  %v680 = vadd.f32 %v45, %v648
  %v681 = vadd.f32 %v46, %v651
  %v682 = vadd.f32 %v47, %v656
  %v683 = vadd.f32 %v48, %v659
  %v684 = vadd.f32 %v49, %v664
  %v685 = vadd.f32 %v50, %v667
  %vm686 = vcmask 130048
  %687 = vst.msk [vmem:[#allocation2] sm:$0xff] %vm686, %v670
  %688 = vst.msk [vmem:[#allocation2 + $0x8] sm:$0xff] %vm686, %v671
  %689 = vst.msk [vmem:[#allocation2 + $0x10] sm:$0xff] %vm686, %v672
  %690 = vst.msk [vmem:[#allocation2 + $0x18] sm:$0xff] %vm686, %v673
  %691 = vst.msk [vmem:[#allocation2 + $0x20] sm:$0xff] %vm686, %v674
  %692 = vst.msk [vmem:[#allocation2 + $0x28] sm:$0xff] %vm686, %v675
  %693 = vst.msk [vmem:[#allocation2 + $0x30] sm:$0xff] %vm686, %v676
  %694 = vst.msk [vmem:[#allocation2 + $0x38] sm:$0xff] %vm686, %v677
  %695 = vst.msk [vmem:[#allocation2 + $0x40] sm:$0xff] %vm686, %v678
  %696 = vst.msk [vmem:[#allocation2 + $0x48] sm:$0xff] %vm686, %v679
  %697 = vst.msk [vmem:[#allocation2 + $0x50] sm:$0xff] %vm686, %v680
  %698 = vst.msk [vmem:[#allocation2 + $0x58] sm:$0xff] %vm686, %v681
  %699 = vst.msk [vmem:[#allocation2 + $0x60] sm:$0xff] %vm686, %v682
  %700 = vst.msk [vmem:[#allocation2 + $0x68] sm:$0xff] %vm686, %v683
  %701 = vst.msk [vmem:[#allocation2 + $0x70] sm:$0xff] %vm686, %v684
  %702 = vst.msk [vmem:[#allocation2 + $0x78] sm:$0xff] %vm686, %v685
  // Predicated region
  $region14: #{self_transformer_layer.13} parent=0 // pred_check
    %p703 = pneg %p14
  $region15: #{self_transformer_layer.13} parent=0 // pred_check_branch
    %705 = sbr.rel (%p703) target = $region17
  $region16: #{self_transformer_layer.13} parent=0 // pred_region
    %v706 = vld [vmem:[#allocation2] sm:$0xff]
    %v707 = vld [vmem:[#allocation2 + $0x8] sm:$0xff]
    %v708 = vld [vmem:[#allocation2 + $0x10] sm:$0xff]
    %v709 = vld [vmem:[#allocation2 + $0x18] sm:$0xff]
    %v710 = vld [vmem:[#allocation2 + $0x20] sm:$0xff]
    %v711 = vld [vmem:[#allocation2 + $0x28] sm:$0xff]
    %v712 = vld [vmem:[#allocation2 + $0x30] sm:$0xff]
    %v713 = vld [vmem:[#allocation2 + $0x38] sm:$0xff]
    %v714 = vld [vmem:[#allocation2 + $0x40] sm:$0xff]
    %v715 = vld [vmem:[#allocation2 + $0x48] sm:$0xff]
    %v716 = vld [vmem:[#allocation2 + $0x50] sm:$0xff]
    %v717 = vld [vmem:[#allocation2 + $0x58] sm:$0xff]
    %v718 = vld [vmem:[#allocation2 + $0x60] sm:$0xff]
    %v719 = vld [vmem:[#allocation2 + $0x68] sm:$0xff]
    %v720 = vld [vmem:[#allocation2 + $0x70] sm:$0xff]
    %v721 = vld [vmem:[#allocation2 + $0x78] sm:$0xff]
    %722 = vst.msk [vmem:[%s2] sm:$0xff] %vm686, %v706
    %723 = vst.msk [vmem:[%s2 + $0x8] sm:$0xff] %vm686, %v707
    %724 = vst.msk [vmem:[%s2 + $0x10] sm:$0xff] %vm686, %v708
    %725 = vst.msk [vmem:[%s2 + $0x18] sm:$0xff] %vm686, %v709
    %726 = vst.msk [vmem:[%s2 + $0x20] sm:$0xff] %vm686, %v710
    %727 = vst.msk [vmem:[%s2 + $0x28] sm:$0xff] %vm686, %v711
    %728 = vst.msk [vmem:[%s2 + $0x30] sm:$0xff] %vm686, %v712
    %729 = vst.msk [vmem:[%s2 + $0x38] sm:$0xff] %vm686, %v713
    %730 = vst.msk [vmem:[%s2 + $0x40] sm:$0xff] %vm686, %v714
    %731 = vst.msk [vmem:[%s2 + $0x48] sm:$0xff] %vm686, %v715
    %732 = vst.msk [vmem:[%s2 + $0x50] sm:$0xff] %vm686, %v716
    %733 = vst.msk [vmem:[%s2 + $0x58] sm:$0xff] %vm686, %v717
    %734 = vst.msk [vmem:[%s2 + $0x60] sm:$0xff] %vm686, %v718
    %735 = vst.msk [vmem:[%s2 + $0x68] sm:$0xff] %vm686, %v719
    %736 = vst.msk [vmem:[%s2 + $0x70] sm:$0xff] %vm686, %v720
    %737 = vst.msk [vmem:[%s2 + $0x78] sm:$0xff] %vm686, %v721
    %v738 = vsel %vm686, %v706, 0.0
    %v739 = vsel %vm686, %v707, 0.0
    %v740 = vadd.f32 %v738, %v739
    %v741 = vsel %vm686, %v708, 0.0
    %v742 = vadd.f32 %v740, %v741
    %v743 = vsel %vm686, %v709, 0.0
    %v744 = vadd.f32 %v742, %v743
    %v745 = vsel %vm686, %v710, 0.0
    %v746 = vadd.f32 %v744, %v745
    %v747 = vsel %vm686, %v711, 0.0
    %v748 = vadd.f32 %v746, %v747
    %v749 = vsel %vm686, %v712, 0.0
    %v750 = vadd.f32 %v748, %v749
    %v751 = vsel %vm686, %v713, 0.0
    %v752 = vadd.f32 %v750, %v751
    %v753 = vsel %vm686, %v714, 0.0
    %v754 = vadd.f32 %v752, %v753
    %v755 = vsel %vm686, %v715, 0.0
    %v756 = vadd.f32 %v754, %v755
    %v757 = vsel %vm686, %v716, 0.0
    %v758 = vadd.f32 %v756, %v757
    %v759 = vsel %vm686, %v717, 0.0
    %v760 = vadd.f32 %v758, %v759
    %v761 = vsel %vm686, %v718, 0.0
    %v762 = vadd.f32 %v760, %v761
    %v763 = vsel %vm686, %v719, 0.0
    %v764 = vadd.f32 %v762, %v763
    %v765 = vsel %vm686, %v720, 0.0
    %v766 = vadd.f32 %v764, %v765
    %v767 = vsel %vm686, %v721, 0.0
    %v768 = vadd.f32 %v766, %v767
    %v769 = vrot.slane %v768, 4
    %v770 = vadd.f32 %v768, %v769
    %v771 = vrot.slane %v770, 2
    %v772 = vadd.f32 %v770, %v771
    %v773 = vrot.slane %v772, 1
    %v774 = vadd.f32 %v772, %v773
    %v775 = vmul.f32 %v706, %v706
    %v776 = vmul.f32 %v707, %v707
    %v777 = vmul.f32 %v708, %v708
    %v778 = vmul.f32 %v709, %v709
    %v779 = vmul.f32 %v710, %v710
    %v780 = vmul.f32 %v711, %v711
    %v781 = vmul.f32 %v712, %v712
    %v782 = vmul.f32 %v713, %v713
    %v783 = vmul.f32 %v714, %v714
    %v784 = vmul.f32 %v715, %v715
    %v785 = vmul.f32 %v716, %v716
    %v786 = vmul.f32 %v717, %v717
    %v787 = vmul.f32 %v718, %v718
    %v788 = vmul.f32 %v719, %v719
    %v789 = vmul.f32 %v720, %v720
    %v790 = vmul.f32 %v721, %v721
    %v791 = vsel %vm686, %v775, 0.0
    %v792 = vsel %vm686, %v776, 0.0
    %v793 = vadd.f32 %v791, %v792
    %v794 = vsel %vm686, %v777, 0.0
    %v795 = vadd.f32 %v793, %v794
    %v796 = vsel %vm686, %v778, 0.0
    %v797 = vadd.f32 %v795, %v796
    %v798 = vsel %vm686, %v779, 0.0
    %v799 = vadd.f32 %v797, %v798
    %v800 = vsel %vm686, %v780, 0.0
    %v801 = vadd.f32 %v799, %v800
    %v802 = vsel %vm686, %v781, 0.0
    %v803 = vadd.f32 %v801, %v802
    %v804 = vsel %vm686, %v782, 0.0
    %v805 = vadd.f32 %v803, %v804
    %v806 = vsel %vm686, %v783, 0.0
    %v807 = vadd.f32 %v805, %v806
    %v808 = vsel %vm686, %v784, 0.0
    %v809 = vadd.f32 %v807, %v808
    %v810 = vsel %vm686, %v785, 0.0
    %v811 = vadd.f32 %v809, %v810
    %v812 = vsel %vm686, %v786, 0.0
    %v813 = vadd.f32 %v811, %v812
    %v814 = vsel %vm686, %v787, 0.0
    %v815 = vadd.f32 %v813, %v814
    %v816 = vsel %vm686, %v788, 0.0
    %v817 = vadd.f32 %v815, %v816
    %v818 = vsel %vm686, %v789, 0.0
    %v819 = vadd.f32 %v817, %v818
    %v820 = vsel %vm686, %v790, 0.0
    %v821 = vadd.f32 %v819, %v820
    %v822 = vrot.slane %v821, 4
    %v823 = vadd.f32 %v821, %v822
    %v824 = vrot.slane %v823, 2
    %v825 = vadd.f32 %v823, %v824
    %v826 = vrot.slane %v825, 1
    %v827 = vadd.f32 %v825, %v826
    %vm828 = vcmask 1040384
    %v829 = vsel %vm828, %v774, %v827
    %vm830 = vcmask 123904
    %831 = vst.msk [vmem:[%s3] sm:$0x3] %vm830, %v829
  $region17: #{self_transformer_layer.13} parent=0 // pred_fallthru
    _
  // Predicated region
  $region18: #{self_transformer_layer.13} parent=0 // pred_check
    _
  $region19: #{self_transformer_layer.13} parent=0 // pred_check_branch
    %833 = sbr.rel (0) target = $region21
  $region20: #{self_transformer_layer.13} parent=0 // pred_region
    _
  $region21: #{self_transformer_layer.13} parent=0 // pred_fallthru
    _
  // Predicated region
  $region22: #{self_transformer_layer.13} parent=0 // pred_check
    _
  $region23: #{self_transformer_layer.13} parent=0 // pred_check_branch
    %835 = sbr.rel (0) target = $region25
  $region24: #{self_transformer_layer.13} parent=0 // pred_region
    _
  $region25: #{self_transformer_layer.13} parent=0 // pred_fallthru
    _
  // Predicated region
  $region26: #{self_transformer_layer.13} parent=0 // pred_check
    _
  $region27: #{self_transformer_layer.13} parent=0 // pred_check_branch
    %837 = sbr.rel (0) target = $region29
  $region28: #{self_transformer_layer.13} parent=0 // pred_region
    _
  $region29: #{self_transformer_layer.13} parent=0 // pred_fallthru
    _
  // Predicated region
  $region30: #{self_transformer_layer.13} parent=0 // pred_check
    _
  $region31: #{self_transformer_layer.13} parent=0 // pred_check_branch
    %839 = sbr.rel (0) target = $region33
  $region32: #{self_transformer_layer.13} parent=0 // pred_region
    _
  $region33: #{self_transformer_layer.13} parent=0 // pred_fallthru
    _

// kernel: self_transformer_layer.14
$region0: #{self_transformer_layer.14}
  #allocation0 [shape = 'u32[]', space=smem, size = 0x4, offset = 0x4, fixed_abs, tag = 'smem constant byte address 0x4 - core index']
  #allocation1 [shape = 'u32[144,128]{1,0:T(1,128)}', space=vmem, size = 0x12000, scoped, tag = 'internal scratch']
  %s0 = inlined_call_operand.vmem [shape: f32[128,16], index: 0, kind: input, shape index: {}]
  %s1 = inlined_call_operand.vmem [shape: f32[1,16], index: 1, kind: input, shape index: {}]
  %s2 = inlined_call_operand.vmem [shape: f32[1,16], index: 2, kind: input, shape index: {}]
  %s3 = inlined_call_operand.vmem [shape: f32[128,16], index: 3, kind: input, shape index: {}]
  %s4 = inlined_call_operand.vmem [shape: f32[128,16], index: 4, kind: output, shape index: {0}]
  %s5 = inlined_call_operand.vmem [shape: f32[1,2,16], index: 5, kind: output, shape index: {1}]
  %6 = xla_tuple %s4, %s5
  %s7 = sld [smem:[#allocation0]]
  $region34: #{self_transformer_layer.14} parent=0
    _
  %s9 = ssub.s32 1, %s7
  %s10 = scalar_select 0, %s9, %s7
  // Predicated region
  $region2: #{self_transformer_layer.14} parent=0 // pred_check
    _
  $region3: #{self_transformer_layer.14} parent=0 // pred_check_branch
    %12 = sbr.rel (0) target = $region5
  $region4: #{self_transformer_layer.14} parent=0 // pred_region
    _
  $region5: #{self_transformer_layer.14} parent=0 // pred_fallthru
    _
  // Predicated region
  $region6: #{self_transformer_layer.14} parent=0 // pred_check
    _
  $region7: #{self_transformer_layer.14} parent=0 // pred_check_branch
    %14 = sbr.rel (0) target = $region9
  $region8: #{self_transformer_layer.14} parent=0 // pred_region
    _
  $region9: #{self_transformer_layer.14} parent=0 // pred_fallthru
    _
  // Predicated region
  $region10: #{self_transformer_layer.14} parent=0 // pred_check
    _
  $region11: #{self_transformer_layer.14} parent=0 // pred_check_branch
    %16 = sbr.rel (0) target = $region13
  $region12: #{self_transformer_layer.14} parent=0 // pred_region
    _
  $region13: #{self_transformer_layer.14} parent=0 // pred_fallthru
    _
  // Predicated region
  $region14: #{self_transformer_layer.14} parent=0 // pred_check
    _
  $region15: #{self_transformer_layer.14} parent=0 // pred_check_branch
    %18 = sbr.rel (0) target = $region17
  $region16: #{self_transformer_layer.14} parent=0 // pred_region
    _
  $region17: #{self_transformer_layer.14} parent=0 // pred_fallthru
    _
  %v19 = vld [vmem:[%s0] sm:$0xff]
  %v20 = vld [vmem:[%s0 + $0x8] sm:$0xff]
  %v21 = vld [vmem:[%s0 + $0x10] sm:$0xff]
  %v22 = vld [vmem:[%s0 + $0x18] sm:$0xff]
  %v23 = vld [vmem:[%s0 + $0x20] sm:$0xff]
  %v24 = vld [vmem:[%s0 + $0x28] sm:$0xff]
  %v25 = vld [vmem:[%s0 + $0x30] sm:$0xff]
  %v26 = vld [vmem:[%s0 + $0x38] sm:$0xff]
  %v27 = vld [vmem:[%s0 + $0x40] sm:$0xff]
  %v28 = vld [vmem:[%s0 + $0x48] sm:$0xff]
  %v29 = vld [vmem:[%s0 + $0x50] sm:$0xff]
  %v30 = vld [vmem:[%s0 + $0x58] sm:$0xff]
  %v31 = vld [vmem:[%s0 + $0x60] sm:$0xff]
  %v32 = vld [vmem:[%s0 + $0x68] sm:$0xff]
  %v33 = vld [vmem:[%s0 + $0x70] sm:$0xff]
  %v34 = vld [vmem:[%s0 + $0x78] sm:$0xff]
  %v35 = vld [vmem:[%s1] sm:$0x1]
  %v37 = vlaneseq
  %v38 = vshrl.u32 %v37, 7
  %v39 = vsub.s32 0, %v38
  %v40 = vrot.slane %v35, %v39
  %v42 = vmul.f32 %v19, %v40
  %v43 = vmul.f32 %v20, %v40
  %v44 = vmul.f32 %v21, %v40
  %v45 = vmul.f32 %v22, %v40
  %v46 = vmul.f32 %v23, %v40
  %v47 = vmul.f32 %v24, %v40
  %v48 = vmul.f32 %v25, %v40
  %v49 = vmul.f32 %v26, %v40
  %v50 = vmul.f32 %v27, %v40
  %v51 = vmul.f32 %v28, %v40
  %v52 = vmul.f32 %v29, %v40
  %v53 = vmul.f32 %v30, %v40
  %v54 = vmul.f32 %v31, %v40
  %v55 = vmul.f32 %v32, %v40
  %v56 = vmul.f32 %v33, %v40
  %v57 = vmul.f32 %v34, %v40
  %v58 = vld [vmem:[%s2] sm:$0x1]
  %v60 = vlaneseq
  %v61 = vshrl.u32 %v60, 7
  %v62 = vsub.s32 0, %v61
  %v63 = vrot.slane %v58, %v62
  %v65 = vadd.f32 %v42, %v63
  %v66 = vadd.f32 %v43, %v63
  %v67 = vadd.f32 %v44, %v63
  %v68 = vadd.f32 %v45, %v63
  %v69 = vadd.f32 %v46, %v63
  %v70 = vadd.f32 %v47, %v63
  %v71 = vadd.f32 %v48, %v63
  %v72 = vadd.f32 %v49, %v63
  %v73 = vadd.f32 %v50, %v63
  %v74 = vadd.f32 %v51, %v63
  %v75 = vadd.f32 %v52, %v63
  %v76 = vadd.f32 %v53, %v63
  %v77 = vadd.f32 %v54, %v63
  %v78 = vadd.f32 %v55, %v63
  %v79 = vadd.f32 %v56, %v63
  %v80 = vadd.f32 %v57, %v63
  %v81 = vld [vmem:[%s3] sm:$0xff]
  %v82 = vld [vmem:[%s3 + $0x8] sm:$0xff]
  %v83 = vld [vmem:[%s3 + $0x10] sm:$0xff]
  %v84 = vld [vmem:[%s3 + $0x18] sm:$0xff]
  %v85 = vld [vmem:[%s3 + $0x20] sm:$0xff]
  %v86 = vld [vmem:[%s3 + $0x28] sm:$0xff]
  %v87 = vld [vmem:[%s3 + $0x30] sm:$0xff]
  %v88 = vld [vmem:[%s3 + $0x38] sm:$0xff]
  %v89 = vld [vmem:[%s3 + $0x40] sm:$0xff]
  %v90 = vld [vmem:[%s3 + $0x48] sm:$0xff]
  %v91 = vld [vmem:[%s3 + $0x50] sm:$0xff]
  %v92 = vld [vmem:[%s3 + $0x58] sm:$0xff]
  %v93 = vld [vmem:[%s3 + $0x60] sm:$0xff]
  %v94 = vld [vmem:[%s3 + $0x68] sm:$0xff]
  %v95 = vld [vmem:[%s3 + $0x70] sm:$0xff]
  %v96 = vld [vmem:[%s3 + $0x78] sm:$0xff]
  %v97 = vadd.f32 %v65, %v81
  %v98 = vadd.f32 %v66, %v82
  %v99 = vadd.f32 %v67, %v83
  %v100 = vadd.f32 %v68, %v84
  %v101 = vadd.f32 %v69, %v85
  %v102 = vadd.f32 %v70, %v86
  %v103 = vadd.f32 %v71, %v87
  %v104 = vadd.f32 %v72, %v88
  %v105 = vadd.f32 %v73, %v89
  %v106 = vadd.f32 %v74, %v90
  %v107 = vadd.f32 %v75, %v91
  %v108 = vadd.f32 %v76, %v92
  %v109 = vadd.f32 %v77, %v93
  %v110 = vadd.f32 %v78, %v94
  %v111 = vadd.f32 %v79, %v95
  %v112 = vadd.f32 %v80, %v96
  %vm113 = vcmask 130048
  %114 = vst.msk [vmem:[%s4] sm:$0xff] %vm113, %v97
  %115 = vst.msk [vmem:[%s4 + $0x8] sm:$0xff] %vm113, %v98
  %116 = vst.msk [vmem:[%s4 + $0x10] sm:$0xff] %vm113, %v99
  %117 = vst.msk [vmem:[%s4 + $0x18] sm:$0xff] %vm113, %v100
  %118 = vst.msk [vmem:[%s4 + $0x20] sm:$0xff] %vm113, %v101
  %119 = vst.msk [vmem:[%s4 + $0x28] sm:$0xff] %vm113, %v102
  %120 = vst.msk [vmem:[%s4 + $0x30] sm:$0xff] %vm113, %v103
  %121 = vst.msk [vmem:[%s4 + $0x38] sm:$0xff] %vm113, %v104
  %122 = vst.msk [vmem:[%s4 + $0x40] sm:$0xff] %vm113, %v105
  %123 = vst.msk [vmem:[%s4 + $0x48] sm:$0xff] %vm113, %v106
  %124 = vst.msk [vmem:[%s4 + $0x50] sm:$0xff] %vm113, %v107
  %125 = vst.msk [vmem:[%s4 + $0x58] sm:$0xff] %vm113, %v108
  %126 = vst.msk [vmem:[%s4 + $0x60] sm:$0xff] %vm113, %v109
  %127 = vst.msk [vmem:[%s4 + $0x68] sm:$0xff] %vm113, %v110
  %128 = vst.msk [vmem:[%s4 + $0x70] sm:$0xff] %vm113, %v111
  %129 = vst.msk [vmem:[%s4 + $0x78] sm:$0xff] %vm113, %v112
  %v130 = vsel %vm113, %v97, 0.0
  %v131 = vsel %vm113, %v98, 0.0
  %v132 = vadd.f32 %v130, %v131
  %v133 = vsel %vm113, %v99, 0.0
  %v134 = vadd.f32 %v132, %v133
  %v135 = vsel %vm113, %v100, 0.0
  %v136 = vadd.f32 %v134, %v135
  %v137 = vsel %vm113, %v101, 0.0
  %v138 = vadd.f32 %v136, %v137
  %v139 = vsel %vm113, %v102, 0.0
  %v140 = vadd.f32 %v138, %v139
  %v141 = vsel %vm113, %v103, 0.0
  %v142 = vadd.f32 %v140, %v141
  %v143 = vsel %vm113, %v104, 0.0
  %v144 = vadd.f32 %v142, %v143
  %v145 = vsel %vm113, %v105, 0.0
  %v146 = vadd.f32 %v144, %v145
  %v147 = vsel %vm113, %v106, 0.0
  %v148 = vadd.f32 %v146, %v147
  %v149 = vsel %vm113, %v107, 0.0
  %v150 = vadd.f32 %v148, %v149
  %v151 = vsel %vm113, %v108, 0.0
  %v152 = vadd.f32 %v150, %v151
  %v153 = vsel %vm113, %v109, 0.0
  %v154 = vadd.f32 %v152, %v153
  %v155 = vsel %vm113, %v110, 0.0
  %v156 = vadd.f32 %v154, %v155
  %v157 = vsel %vm113, %v111, 0.0
  %v158 = vadd.f32 %v156, %v157
  %v159 = vsel %vm113, %v112, 0.0
  %v160 = vadd.f32 %v158, %v159
  %v161 = vrot.slane %v160, 4
  %v162 = vadd.f32 %v160, %v161
  %v163 = vrot.slane %v162, 2
  %v164 = vadd.f32 %v162, %v163
  %v165 = vrot.slane %v164, 1
  %v166 = vadd.f32 %v164, %v165
  %v167 = vmul.f32 %v97, %v97
  %v168 = vmul.f32 %v98, %v98
  %v169 = vmul.f32 %v99, %v99
  %v170 = vmul.f32 %v100, %v100
  %v171 = vmul.f32 %v101, %v101
  %v172 = vmul.f32 %v102, %v102
  %v173 = vmul.f32 %v103, %v103
  %v174 = vmul.f32 %v104, %v104
  %v175 = vmul.f32 %v105, %v105
  %v176 = vmul.f32 %v106, %v106
  %v177 = vmul.f32 %v107, %v107
  %v178 = vmul.f32 %v108, %v108
  %v179 = vmul.f32 %v109, %v109
  %v180 = vmul.f32 %v110, %v110
  %v181 = vmul.f32 %v111, %v111
  %v182 = vmul.f32 %v112, %v112
  %v183 = vsel %vm113, %v167, 0.0
  %v184 = vsel %vm113, %v168, 0.0
  %v185 = vadd.f32 %v183, %v184
  %v186 = vsel %vm113, %v169, 0.0
  %v187 = vadd.f32 %v185, %v186
  %v188 = vsel %vm113, %v170, 0.0
  %v189 = vadd.f32 %v187, %v188
  %v190 = vsel %vm113, %v171, 0.0
  %v191 = vadd.f32 %v189, %v190
  %v192 = vsel %vm113, %v172, 0.0
  %v193 = vadd.f32 %v191, %v192
  %v194 = vsel %vm113, %v173, 0.0
  %v195 = vadd.f32 %v193, %v194
  %v196 = vsel %vm113, %v174, 0.0
  %v197 = vadd.f32 %v195, %v196
  %v198 = vsel %vm113, %v175, 0.0
  %v199 = vadd.f32 %v197, %v198
  %v200 = vsel %vm113, %v176, 0.0
  %v201 = vadd.f32 %v199, %v200
  %v202 = vsel %vm113, %v177, 0.0
  %v203 = vadd.f32 %v201, %v202
  %v204 = vsel %vm113, %v178, 0.0
  %v205 = vadd.f32 %v203, %v204
  %v206 = vsel %vm113, %v179, 0.0
  %v207 = vadd.f32 %v205, %v206
  %v208 = vsel %vm113, %v180, 0.0
  %v209 = vadd.f32 %v207, %v208
  %v210 = vsel %vm113, %v181, 0.0
  %v211 = vadd.f32 %v209, %v210
  %v212 = vsel %vm113, %v182, 0.0
  %v213 = vadd.f32 %v211, %v212
  %v214 = vrot.slane %v213, 4
  %v215 = vadd.f32 %v213, %v214
  %v216 = vrot.slane %v215, 2
  %v217 = vadd.f32 %v215, %v216
  %v218 = vrot.slane %v217, 1
  %v219 = vadd.f32 %v217, %v218
  %vm220 = vcmask 1040384
  %v221 = vsel %vm220, %v166, %v219
  %vm222 = vcmask 123904
  %223 = vst.msk [vmem:[%s5] sm:$0x3] %vm222, %v221
  // Predicated region
  $region18: #{self_transformer_layer.14} parent=0 // pred_check
    _
  $region19: #{self_transformer_layer.14} parent=0 // pred_check_branch
    %225 = sbr.rel (0) target = $region21
  $region20: #{self_transformer_layer.14} parent=0 // pred_region
    _
  $region21: #{self_transformer_layer.14} parent=0 // pred_fallthru
    _
  // Predicated region
  $region22: #{self_transformer_layer.14} parent=0 // pred_check
    _
  $region23: #{self_transformer_layer.14} parent=0 // pred_check_branch
    %227 = sbr.rel (0) target = $region25
  $region24: #{self_transformer_layer.14} parent=0 // pred_region
    _
  $region25: #{self_transformer_layer.14} parent=0 // pred_fallthru
    _
  // Predicated region
  $region26: #{self_transformer_layer.14} parent=0 // pred_check
    _
  $region27: #{self_transformer_layer.14} parent=0 // pred_check_branch
    %229 = sbr.rel (0) target = $region29
  $region28: #{self_transformer_layer.14} parent=0 // pred_region
    _
  $region29: #{self_transformer_layer.14} parent=0 // pred_fallthru
    _
  // Predicated region
  $region30: #{self_transformer_layer.14} parent=0 // pred_check
    _
  $region31: #{self_transformer_layer.14} parent=0 // pred_check_branch
    %231 = sbr.rel (0) target = $region33
  $region32: #{self_transformer_layer.14} parent=0 // pred_region
    _
  $region33: #{self_transformer_layer.14} parent=0 // pred_fallthru
    _

// kernel: self_transformer_layer.17
$region0: #{self_transformer_layer.17}
  #allocation0 [shape = 'u32[]', space=smem, size = 0x4, offset = 0x4, fixed_abs, tag = 'smem constant byte address 0x4 - core index']
  #allocation1 [shape = 'u32[144,128]{1,0:T(1,128)}', space=vmem, size = 0x12000, scoped, tag = 'internal scratch']
  %s0 = inlined_call_operand.vmem [shape: f32[128,16], index: 0, kind: input, shape index: {}]
  %s1 = inlined_call_operand.vmem [shape: f32[1,16], index: 1, kind: input, shape index: {}]
  %s2 = inlined_call_operand.vmem [shape: f32[1,16], index: 2, kind: input, shape index: {}]
  %s3 = inlined_call_operand.vmem [shape: f32[128,16], index: 3, kind: output, shape index: {}]
  %s4 = sld [smem:[#allocation0]]
  $region22: #{self_transformer_layer.17} parent=0
    _
  %s6 = ssub.s32 1, %s4
  %s7 = scalar_select 0, %s6, %s4
  // Predicated region
  $region2: #{self_transformer_layer.17} parent=0 // pred_check
    _
  $region3: #{self_transformer_layer.17} parent=0 // pred_check_branch
    %9 = sbr.rel (0) target = $region5
  $region4: #{self_transformer_layer.17} parent=0 // pred_region
    _
  $region5: #{self_transformer_layer.17} parent=0 // pred_fallthru
    _
  // Predicated region
  $region6: #{self_transformer_layer.17} parent=0 // pred_check
    _
  $region7: #{self_transformer_layer.17} parent=0 // pred_check_branch
    %11 = sbr.rel (0) target = $region9
  $region8: #{self_transformer_layer.17} parent=0 // pred_region
    _
  $region9: #{self_transformer_layer.17} parent=0 // pred_fallthru
    _
  // Predicated region
  $region10: #{self_transformer_layer.17} parent=0 // pred_check
    _
  $region11: #{self_transformer_layer.17} parent=0 // pred_check_branch
    %13 = sbr.rel (0) target = $region13
  $region12: #{self_transformer_layer.17} parent=0 // pred_region
    _
  $region13: #{self_transformer_layer.17} parent=0 // pred_fallthru
    _
  %v14 = vld [vmem:[%s0] sm:$0xff]
  %v15 = vld [vmem:[%s0 + $0x8] sm:$0xff]
  %v16 = vld [vmem:[%s0 + $0x10] sm:$0xff]
  %v17 = vld [vmem:[%s0 + $0x18] sm:$0xff]
  %v18 = vld [vmem:[%s0 + $0x20] sm:$0xff]
  %v19 = vld [vmem:[%s0 + $0x28] sm:$0xff]
  %v20 = vld [vmem:[%s0 + $0x30] sm:$0xff]
  %v21 = vld [vmem:[%s0 + $0x38] sm:$0xff]
  %v22 = vld [vmem:[%s0 + $0x40] sm:$0xff]
  %v23 = vld [vmem:[%s0 + $0x48] sm:$0xff]
  %v24 = vld [vmem:[%s0 + $0x50] sm:$0xff]
  %v25 = vld [vmem:[%s0 + $0x58] sm:$0xff]
  %v26 = vld [vmem:[%s0 + $0x60] sm:$0xff]
  %v27 = vld [vmem:[%s0 + $0x68] sm:$0xff]
  %v28 = vld [vmem:[%s0 + $0x70] sm:$0xff]
  %v29 = vld [vmem:[%s0 + $0x78] sm:$0xff]
  %v30 = vld [vmem:[%s1] sm:$0x1]
  %v32 = vlaneseq
  %v33 = vshrl.u32 %v32, 7
  %v34 = vsub.s32 0, %v33
  %v35 = vrot.slane %v30, %v34
  %v37 = vmul.f32 %v14, %v35
  %v38 = vmul.f32 %v15, %v35
  %v39 = vmul.f32 %v16, %v35
  %v40 = vmul.f32 %v17, %v35
  %v41 = vmul.f32 %v18, %v35
  %v42 = vmul.f32 %v19, %v35
  %v43 = vmul.f32 %v20, %v35
  %v44 = vmul.f32 %v21, %v35
  %v45 = vmul.f32 %v22, %v35
  %v46 = vmul.f32 %v23, %v35
  %v47 = vmul.f32 %v24, %v35
  %v48 = vmul.f32 %v25, %v35
  %v49 = vmul.f32 %v26, %v35
  %v50 = vmul.f32 %v27, %v35
  %v51 = vmul.f32 %v28, %v35
  %v52 = vmul.f32 %v29, %v35
  %v53 = vld [vmem:[%s2] sm:$0x1]
  %v55 = vlaneseq
  %v56 = vshrl.u32 %v55, 7
  %v57 = vsub.s32 0, %v56
  %v58 = vrot.slane %v53, %v57
  %v60 = vadd.f32 %v37, %v58
  %v61 = vadd.f32 %v38, %v58
  %v62 = vadd.f32 %v39, %v58
  %v63 = vadd.f32 %v40, %v58
  %v64 = vadd.f32 %v41, %v58
  %v65 = vadd.f32 %v42, %v58
  %v66 = vadd.f32 %v43, %v58
  %v67 = vadd.f32 %v44, %v58
  %v68 = vadd.f32 %v45, %v58
  %v69 = vadd.f32 %v46, %v58
  %v70 = vadd.f32 %v47, %v58
  %v71 = vadd.f32 %v48, %v58
  %v72 = vadd.f32 %v49, %v58
  %v73 = vadd.f32 %v50, %v58
  %v74 = vadd.f32 %v51, %v58
  %v75 = vadd.f32 %v52, %v58
  %v76 = vmax.f32 %v60, 0.0
  %v77 = vmax.f32 %v61, 0.0
  %v78 = vmax.f32 %v62, 0.0
  %v79 = vmax.f32 %v63, 0.0
  %v80 = vmax.f32 %v64, 0.0
  %v81 = vmax.f32 %v65, 0.0
  %v82 = vmax.f32 %v66, 0.0
  %v83 = vmax.f32 %v67, 0.0
  %v84 = vmax.f32 %v68, 0.0
  %v85 = vmax.f32 %v69, 0.0
  %v86 = vmax.f32 %v70, 0.0
  %v87 = vmax.f32 %v71, 0.0
  %v88 = vmax.f32 %v72, 0.0
  %v89 = vmax.f32 %v73, 0.0
  %v90 = vmax.f32 %v74, 0.0
  %v91 = vmax.f32 %v75, 0.0
  %vm92 = vcmask 130048
  %93 = vst.msk [vmem:[%s3] sm:$0xff] %vm92, %v76
  %94 = vst.msk [vmem:[%s3 + $0x8] sm:$0xff] %vm92, %v77
  %95 = vst.msk [vmem:[%s3 + $0x10] sm:$0xff] %vm92, %v78
  %96 = vst.msk [vmem:[%s3 + $0x18] sm:$0xff] %vm92, %v79
  %97 = vst.msk [vmem:[%s3 + $0x20] sm:$0xff] %vm92, %v80
  %98 = vst.msk [vmem:[%s3 + $0x28] sm:$0xff] %vm92, %v81
  %99 = vst.msk [vmem:[%s3 + $0x30] sm:$0xff] %vm92, %v82
  %100 = vst.msk [vmem:[%s3 + $0x38] sm:$0xff] %vm92, %v83
  %101 = vst.msk [vmem:[%s3 + $0x40] sm:$0xff] %vm92, %v84
  %102 = vst.msk [vmem:[%s3 + $0x48] sm:$0xff] %vm92, %v85
  %103 = vst.msk [vmem:[%s3 + $0x50] sm:$0xff] %vm92, %v86
  %104 = vst.msk [vmem:[%s3 + $0x58] sm:$0xff] %vm92, %v87
  %105 = vst.msk [vmem:[%s3 + $0x60] sm:$0xff] %vm92, %v88
  %106 = vst.msk [vmem:[%s3 + $0x68] sm:$0xff] %vm92, %v89
  %107 = vst.msk [vmem:[%s3 + $0x70] sm:$0xff] %vm92, %v90
  %108 = vst.msk [vmem:[%s3 + $0x78] sm:$0xff] %vm92, %v91
  // Predicated region
  $region14: #{self_transformer_layer.17} parent=0 // pred_check
    _
  $region15: #{self_transformer_layer.17} parent=0 // pred_check_branch
    %110 = sbr.rel (0) target = $region17
  $region16: #{self_transformer_layer.17} parent=0 // pred_region
    _
  $region17: #{self_transformer_layer.17} parent=0 // pred_fallthru
    _
  // Predicated region
  $region18: #{self_transformer_layer.17} parent=0 // pred_check
    _
  $region19: #{self_transformer_layer.17} parent=0 // pred_check_branch
    %112 = sbr.rel (0) target = $region21
  $region20: #{self_transformer_layer.17} parent=0 // pred_region
    _
  $region21: #{self_transformer_layer.17} parent=0 // pred_fallthru
    _

// kernel: self_transformer_layer.16
$region0: #{self_transformer_layer.16}
  #allocation0 [shape = 'u32[]', space=smem, size = 0x4, offset = 0x4, fixed_abs, tag = 'smem constant byte address 0x4 - core index']
  #allocation1 [shape = 'u32[144,128]{1,0:T(1,128)}', space=vmem, size = 0x12000, scoped, tag = 'internal scratch']
  #allocation2 [shape = 'f32[128,16]{1,0:T(8,128)}', space=vmem, size = 0x10000, scoped, tag = 'scratch operand']
  %s0 = inlined_call_operand.vmem [shape: bf16[128,432], index: 0, kind: input, shape index: {}]
  %s1 = inlined_call_operand.vmem [shape: bf16[432,16], index: 1, kind: input, shape index: {}]
  %s2 = inlined_call_operand.vmem [shape: f32[128,16], index: 2, kind: input, shape index: {}]
  %s3 = inlined_call_operand.vmem [shape: f32[128,16], index: 3, kind: output, shape index: {0}]
  %s4 = inlined_call_operand.vmem [shape: f32[1,2,16], index: 4, kind: output, shape index: {1}]
  %5 = xla_tuple %s3, %s4
  %s6 = sld [smem:[#allocation0]]
  $region38: #{self_transformer_layer.16} parent=0
    _
  %s8 = ssub.s32 1, %s6
  %s9 = scalar_select 0, %s8, %s6
  // Predicated region
  $region2: #{self_transformer_layer.16} parent=0 // pred_check
    _
  $region3: #{self_transformer_layer.16} parent=0 // pred_check_branch
    %11 = sbr.rel (0) target = $region5
  $region4: #{self_transformer_layer.16} parent=0 // pred_region
    _
  $region5: #{self_transformer_layer.16} parent=0 // pred_fallthru
    _
  // Predicated region
  $region6: #{self_transformer_layer.16} parent=0 // pred_check
    _
  $region7: #{self_transformer_layer.16} parent=0 // pred_check_branch
    %13 = sbr.rel (0) target = $region9
  $region8: #{self_transformer_layer.16} parent=0 // pred_region
    _
  $region9: #{self_transformer_layer.16} parent=0 // pred_fallthru
    _
  // Predicated region
  $region10: #{self_transformer_layer.16} parent=0 // pred_check
    _
  $region11: #{self_transformer_layer.16} parent=0 // pred_check_branch
    %15 = sbr.rel (0) target = $region13
  $region12: #{self_transformer_layer.16} parent=0 // pred_region
    _
  $region13: #{self_transformer_layer.16} parent=0 // pred_fallthru
    _
  %p17 = scmp.eq.s32.totalorder 0, 0
  // Predicated region
  $region14: #{self_transformer_layer.16} parent=0 // pred_check
    %p18 = pneg %p17
  $region15: #{self_transformer_layer.16} parent=0 // pred_check_branch
    %20 = sbr.rel (%p18) target = $region17
  $region16: #{self_transformer_layer.16} parent=0 // pred_region
    %vm21 = vcmask 130048
    %22 = vst.msk [vmem:[#allocation2] sm:$0xff] %vm21, 0.0
    %23 = vst.msk [vmem:[#allocation2 + $0x8] sm:$0xff] %vm21, 0.0
    %24 = vst.msk [vmem:[#allocation2 + $0x10] sm:$0xff] %vm21, 0.0
    %25 = vst.msk [vmem:[#allocation2 + $0x18] sm:$0xff] %vm21, 0.0
    %26 = vst.msk [vmem:[#allocation2 + $0x20] sm:$0xff] %vm21, 0.0
    %27 = vst.msk [vmem:[#allocation2 + $0x28] sm:$0xff] %vm21, 0.0
    %28 = vst.msk [vmem:[#allocation2 + $0x30] sm:$0xff] %vm21, 0.0
    %29 = vst.msk [vmem:[#allocation2 + $0x38] sm:$0xff] %vm21, 0.0
    %30 = vst.msk [vmem:[#allocation2 + $0x40] sm:$0xff] %vm21, 0.0
    %31 = vst.msk [vmem:[#allocation2 + $0x48] sm:$0xff] %vm21, 0.0
    %32 = vst.msk [vmem:[#allocation2 + $0x50] sm:$0xff] %vm21, 0.0
    %33 = vst.msk [vmem:[#allocation2 + $0x58] sm:$0xff] %vm21, 0.0
    %34 = vst.msk [vmem:[#allocation2 + $0x60] sm:$0xff] %vm21, 0.0
    %35 = vst.msk [vmem:[#allocation2 + $0x68] sm:$0xff] %vm21, 0.0
    %36 = vst.msk [vmem:[#allocation2 + $0x70] sm:$0xff] %vm21, 0.0
    %37 = vst.msk [vmem:[#allocation2 + $0x78] sm:$0xff] %vm21, 0.0
  $region17: #{self_transformer_layer.16} parent=0 // pred_fallthru
    _
  %v38 = vld [vmem:[#allocation2] sm:$0xff]
  %v39 = vld [vmem:[#allocation2 + $0x8] sm:$0xff]
  %v40 = vld [vmem:[#allocation2 + $0x10] sm:$0xff]
  %v41 = vld [vmem:[#allocation2 + $0x18] sm:$0xff]
  %v42 = vld [vmem:[#allocation2 + $0x20] sm:$0xff]
  %v43 = vld [vmem:[#allocation2 + $0x28] sm:$0xff]
  %v44 = vld [vmem:[#allocation2 + $0x30] sm:$0xff]
  %v45 = vld [vmem:[#allocation2 + $0x38] sm:$0xff]
  %v46 = vld [vmem:[#allocation2 + $0x40] sm:$0xff]
  %v47 = vld [vmem:[#allocation2 + $0x48] sm:$0xff]
  %v48 = vld [vmem:[#allocation2 + $0x50] sm:$0xff]
  %v49 = vld [vmem:[#allocation2 + $0x58] sm:$0xff]
  %v50 = vld [vmem:[#allocation2 + $0x60] sm:$0xff]
  %v51 = vld [vmem:[#allocation2 + $0x68] sm:$0xff]
  %v52 = vld [vmem:[#allocation2 + $0x70] sm:$0xff]
  %v53 = vld [vmem:[#allocation2 + $0x78] sm:$0xff]
  %v54 = vld [vmem:[%s0] sm:$0xff]
  %v55 = vld [vmem:[%s0 + $0x8] sm:$0xff]
  %v56 = vld [vmem:[%s0 + $0x10] sm:$0xff]
  %v57 = vld [vmem:[%s0 + $0x18] sm:$0xff]
  %v58 = vld [vmem:[%s0 + $0x20] sm:$0xff]
  %v59 = vld [vmem:[%s0 + $0x28] sm:$0xff]
  %v60 = vld [vmem:[%s0 + $0x30] sm:$0xff]
  %v61 = vld [vmem:[%s0 + $0x38] sm:$0xff]
  %v62 = vld [vmem:[%s0 + $0x40] sm:$0xff]
  %v63 = vld [vmem:[%s0 + $0x48] sm:$0xff]
  %v64 = vld [vmem:[%s0 + $0x50] sm:$0xff]
  %v65 = vld [vmem:[%s0 + $0x58] sm:$0xff]
  %v66 = vld [vmem:[%s0 + $0x60] sm:$0xff]
  %v67 = vld [vmem:[%s0 + $0x68] sm:$0xff]
  %v68 = vld [vmem:[%s0 + $0x70] sm:$0xff]
  %v69 = vld [vmem:[%s0 + $0x78] sm:$0xff]
  %v70 = vld [vmem:[%s0 + $0x80] sm:$0xff]
  %v71 = vld [vmem:[%s0 + $0x88] sm:$0xff]
  %v72 = vld [vmem:[%s0 + $0x90] sm:$0xff]
  %v73 = vld [vmem:[%s0 + $0x98] sm:$0xff]
  %v74 = vld [vmem:[%s0 + $0xa0] sm:$0xff]
  %v75 = vld [vmem:[%s0 + $0xa8] sm:$0xff]
  %v76 = vld [vmem:[%s0 + $0xb0] sm:$0xff]
  %v77 = vld [vmem:[%s0 + $0xb8] sm:$0xff]
  %v78 = vld [vmem:[%s0 + $0xc0] sm:$0xff]
  %v79 = vld [vmem:[%s0 + $0xc8] sm:$0xff]
  %v80 = vld [vmem:[%s0 + $0xd0] sm:$0xff]
  %v81 = vld [vmem:[%s0 + $0xd8] sm:$0xff]
  %v82 = vld [vmem:[%s0 + $0xe0] sm:$0xff]
  %v83 = vld [vmem:[%s0 + $0xe8] sm:$0xff]
  %v84 = vld [vmem:[%s0 + $0xf0] sm:$0xff]
  %v85 = vld [vmem:[%s0 + $0xf8] sm:$0xff]
  %v86 = vld [vmem:[%s1] sm:$0xf]
  %v87 = vld [vmem:[%s1 + $0x4] sm:$0xf]
  %v88 = vld [vmem:[%s1 + $0x8] sm:$0xf]
  %v89 = vld [vmem:[%s1 + $0xc] sm:$0xf]
  %v90 = vld [vmem:[%s1 + $0x10] sm:$0xf]
  %v91 = vld [vmem:[%s1 + $0x14] sm:$0xf]
  %v92 = vld [vmem:[%s1 + $0x18] sm:$0xf]
  %v93 = vld [vmem:[%s1 + $0x1c] sm:$0xf]
  %v94 = vld [vmem:[%s1 + $0x20] sm:$0xf]
  %v95 = vld [vmem:[%s1 + $0x24] sm:$0xf]
  %v96 = vld [vmem:[%s1 + $0x28] sm:$0xf]
  %v97 = vld [vmem:[%s1 + $0x2c] sm:$0xf]
  %v98 = vld [vmem:[%s1 + $0x30] sm:$0xf]
  %v99 = vld [vmem:[%s1 + $0x34] sm:$0xf]
  %v100 = vld [vmem:[%s1 + $0x38] sm:$0xf]
  %v101 = vld [vmem:[%s1 + $0x3c] sm:$0xf]
  %v102 = vld [vmem:[%s1 + $0x40] sm:$0xf]
  %v103 = vld [vmem:[%s1 + $0x44] sm:$0xf]
  %v104 = vld [vmem:[%s1 + $0x48] sm:$0xf]
  %v105 = vld [vmem:[%s1 + $0x4c] sm:$0xf]
  %v106 = vld [vmem:[%s1 + $0x50] sm:$0xf]
  %v107 = vld [vmem:[%s1 + $0x54] sm:$0xf]
  %v108 = vld [vmem:[%s1 + $0x58] sm:$0xf]
  %v109 = vld [vmem:[%s1 + $0x5c] sm:$0xf]
  %v110 = vld [vmem:[%s1 + $0x60] sm:$0xf]
  %v111 = vld [vmem:[%s1 + $0x64] sm:$0xf]
  %v112 = vld [vmem:[%s1 + $0x68] sm:$0xf]
  %v113 = vld [vmem:[%s1 + $0x6c] sm:$0xf]
  %v114 = vld [vmem:[%s1 + $0x70] sm:$0xf]
  %v115 = vld [vmem:[%s1 + $0x74] sm:$0xf]
  %v116 = vld [vmem:[%s1 + $0x78] sm:$0xf]
  %v117 = vld [vmem:[%s1 + $0x7c] sm:$0xf]
  %v118 = vld [vmem:[%s1 + $0x80] sm:$0xf]
  %v119 = vld [vmem:[%s1 + $0x84] sm:$0xf]
  %v120 = vld [vmem:[%s1 + $0x88] sm:$0xf]
  %v121 = vld [vmem:[%s1 + $0x8c] sm:$0xf]
  %v122 = vld [vmem:[%s1 + $0x90] sm:$0xf]
  %v123 = vld [vmem:[%s1 + $0x94] sm:$0xf]
  %v124 = vld [vmem:[%s1 + $0x98] sm:$0xf]
  %v125 = vld [vmem:[%s1 + $0x9c] sm:$0xf]
  %v126 = vld [vmem:[%s1 + $0xa0] sm:$0xf]
  %v127 = vld [vmem:[%s1 + $0xa4] sm:$0xf]
  %v128 = vld [vmem:[%s1 + $0xa8] sm:$0xf]
  %v129 = vld [vmem:[%s1 + $0xac] sm:$0xf]
  %v130 = vld [vmem:[%s1 + $0xb0] sm:$0xf]
  %v131 = vld [vmem:[%s1 + $0xb4] sm:$0xf]
  %v132 = vld [vmem:[%s1 + $0xb8] sm:$0xf]
  %v133 = vld [vmem:[%s1 + $0xbc] sm:$0xf]
  %v134 = vld [vmem:[%s1 + $0xc0] sm:$0xf]
  %v135 = vld [vmem:[%s1 + $0xc4] sm:$0xf]
  %v136 = vld [vmem:[%s1 + $0xc8] sm:$0xf]
  %v137 = vld [vmem:[%s1 + $0xcc] sm:$0xf]
  %v138 = vld [vmem:[%s1 + $0xd0] sm:$0xf]
  %v139 = vld [vmem:[%s1 + $0xd4] sm:$0xf]
  %v172 = vunpack.c.l.b16 %v54
  %v173 = vunpack.c.h.b16 %v54
  %v174 = vunpack.c.l.b16 %v55
  %v175 = vunpack.c.h.b16 %v55
  %v176 = vunpack.c.l.b16 %v56
  %v177 = vunpack.c.h.b16 %v56
  %v178 = vunpack.c.l.b16 %v57
  %v179 = vunpack.c.h.b16 %v57
  %v180 = vunpack.c.l.b16 %v58
  %v181 = vunpack.c.h.b16 %v58
  %v182 = vunpack.c.l.b16 %v59
  %v183 = vunpack.c.h.b16 %v59
  %v184 = vunpack.c.l.b16 %v60
  %v185 = vunpack.c.h.b16 %v60
  %v186 = vunpack.c.l.b16 %v61
  %v187 = vunpack.c.h.b16 %v61
  %v188 = vunpack.c.l.b16 %v62
  %v189 = vunpack.c.h.b16 %v62
  %v190 = vunpack.c.l.b16 %v63
  %v191 = vunpack.c.h.b16 %v63
  %v192 = vunpack.c.l.b16 %v64
  %v193 = vunpack.c.h.b16 %v64
  %v194 = vunpack.c.l.b16 %v65
  %v195 = vunpack.c.h.b16 %v65
  %v196 = vunpack.c.l.b16 %v66
  %v197 = vunpack.c.h.b16 %v66
  %v198 = vunpack.c.l.b16 %v67
  %v199 = vunpack.c.h.b16 %v67
  %v200 = vunpack.c.l.b16 %v68
  %v201 = vunpack.c.h.b16 %v68
  %v202 = vunpack.c.l.b16 %v69
  %v203 = vunpack.c.h.b16 %v69
  %v204 = vunpack.c.l.b16 %v70
  %v205 = vunpack.c.h.b16 %v70
  %v206 = vunpack.c.l.b16 %v71
  %v207 = vunpack.c.h.b16 %v71
  %v208 = vunpack.c.l.b16 %v72
  %v209 = vunpack.c.h.b16 %v72
  %v210 = vunpack.c.l.b16 %v73
  %v211 = vunpack.c.h.b16 %v73
  %v212 = vunpack.c.l.b16 %v74
  %v213 = vunpack.c.h.b16 %v74
  %v214 = vunpack.c.l.b16 %v75
  %v215 = vunpack.c.h.b16 %v75
  %v216 = vunpack.c.l.b16 %v76
  %v217 = vunpack.c.h.b16 %v76
  %v218 = vunpack.c.l.b16 %v77
  %v219 = vunpack.c.h.b16 %v77
  %v220 = vunpack.c.l.b16 %v78
  %v221 = vunpack.c.h.b16 %v78
  %v222 = vunpack.c.l.b16 %v79
  %v223 = vunpack.c.h.b16 %v79
  %v224 = vunpack.c.l.b16 %v80
  %v225 = vunpack.c.h.b16 %v80
  %v226 = vunpack.c.l.b16 %v81
  %v227 = vunpack.c.h.b16 %v81
  %v228 = vunpack.c.l.b16 %v82
  %v229 = vunpack.c.h.b16 %v82
  %v230 = vunpack.c.l.b16 %v83
  %v231 = vunpack.c.h.b16 %v83
  %v232 = vunpack.c.l.b16 %v84
  %v233 = vunpack.c.h.b16 %v84
  %v234 = vunpack.c.l.b16 %v85
  %v235 = vunpack.c.h.b16 %v85
  %v236 = vpack.c.b16 %v176, %v172
  %v237 = vpack.c.b16 %v177, %v173
  %v238 = vpack.c.b16 %v178, %v174
  %v239 = vpack.c.b16 %v179, %v175
  %v240 = vpack.c.b16 %v184, %v180
  %v241 = vpack.c.b16 %v185, %v181
  %v242 = vpack.c.b16 %v186, %v182
  %v243 = vpack.c.b16 %v187, %v183
  %v244 = vpack.c.b16 %v192, %v188
  %v245 = vpack.c.b16 %v193, %v189
  %v246 = vpack.c.b16 %v194, %v190
  %v247 = vpack.c.b16 %v195, %v191
  %v248 = vpack.c.b16 %v200, %v196
  %v249 = vpack.c.b16 %v201, %v197
  %v250 = vpack.c.b16 %v202, %v198
  %v251 = vpack.c.b16 %v203, %v199
  %v252 = vpack.c.b16 %v208, %v204
  %v253 = vpack.c.b16 %v209, %v205
  %v254 = vpack.c.b16 %v210, %v206
  %v255 = vpack.c.b16 %v211, %v207
  %v256 = vpack.c.b16 %v216, %v212
  %v257 = vpack.c.b16 %v217, %v213
  %v258 = vpack.c.b16 %v218, %v214
  %v259 = vpack.c.b16 %v219, %v215
  %v260 = vpack.c.b16 %v224, %v220
  %v261 = vpack.c.b16 %v225, %v221
  %v262 = vpack.c.b16 %v226, %v222
  %v263 = vpack.c.b16 %v227, %v223
  %v264 = vpack.c.b16 %v232, %v228
  %v265 = vpack.c.b16 %v233, %v229
  %v266 = vpack.c.b16 %v234, %v230
  %v267 = vpack.c.b16 %v235, %v231
  %v346 = vunpack.c.l.b16 %v86
  %v347 = vunpack.c.l.b16 %v87
  %v348 = vunpack.c.l.b16 %v88
  %v349 = vunpack.c.l.b16 %v89
  %v350 = vunpack.c.l.b16 %v90
  %v351 = vunpack.c.l.b16 %v91
  %v352 = vunpack.c.l.b16 %v92
  %v353 = vunpack.c.l.b16 %v93
  %v354 = vunpack.c.l.b16 %v94
  %v355 = vunpack.c.l.b16 %v95
  %v356 = vunpack.c.l.b16 %v96
  %v357 = vunpack.c.l.b16 %v97
  %v358 = vunpack.c.l.b16 %v98
  %v359 = vunpack.c.l.b16 %v99
  %v360 = vunpack.c.l.b16 %v100
  %v361 = vunpack.c.l.b16 %v101
  %v362 = vunpack.c.l.b16 %v102
  %v363 = vunpack.c.l.b16 %v103
  %v364 = vunpack.c.l.b16 %v104
  %v365 = vunpack.c.l.b16 %v105
  %v366 = vunpack.c.l.b16 %v106
  %v367 = vunpack.c.l.b16 %v107
  %v368 = vunpack.c.l.b16 %v108
  %v369 = vunpack.c.l.b16 %v109
  %v370 = vunpack.c.l.b16 %v110
  %v371 = vunpack.c.l.b16 %v111
  %v372 = vunpack.c.l.b16 %v112
  %v373 = vunpack.c.l.b16 %v113
  %v374 = vunpack.c.l.b16 %v114
  %v375 = vunpack.c.l.b16 %v115
  %v376 = vunpack.c.l.b16 %v116
  %v377 = vunpack.c.l.b16 %v117
  %v378 = vunpack.c.l.b16 %v118
  %v379 = vunpack.c.l.b16 %v119
  %v380 = vunpack.c.l.b16 %v120
  %v381 = vunpack.c.l.b16 %v121
  %v382 = vunpack.c.l.b16 %v122
  %v383 = vunpack.c.l.b16 %v123
  %v384 = vunpack.c.l.b16 %v124
  %v385 = vunpack.c.l.b16 %v125
  %v386 = vunpack.c.l.b16 %v126
  %v387 = vunpack.c.l.b16 %v127
  %v388 = vunpack.c.l.b16 %v128
  %v389 = vunpack.c.l.b16 %v129
  %v390 = vunpack.c.l.b16 %v130
  %v391 = vunpack.c.l.b16 %v131
  %v392 = vunpack.c.l.b16 %v132
  %v393 = vunpack.c.l.b16 %v133
  %v394 = vunpack.c.l.b16 %v134
  %v395 = vunpack.c.l.b16 %v135
  %v396 = vunpack.c.l.b16 %v136
  %v397 = vunpack.c.l.b16 %v137
  %v398 = vunpack.c.l.b16 %v138
  %v399 = vunpack.c.l.b16 %v139
  %v400 = vpack.c.b16 %v347, %v346
  %v401 = vpack.c.b16 %v349, %v348
  %v402 = vpack.c.b16 %v351, %v350
  %v403 = vpack.c.b16 %v353, %v352
  %v404 = vpack.c.b16 %v355, %v354
  %v405 = vpack.c.b16 %v357, %v356
  %v406 = vpack.c.b16 %v359, %v358
  %v407 = vpack.c.b16 %v361, %v360
  %v408 = vpack.c.b16 %v363, %v362
  %v409 = vpack.c.b16 %v365, %v364
  %v410 = vpack.c.b16 %v367, %v366
  %v411 = vpack.c.b16 %v369, %v368
  %v412 = vpack.c.b16 %v371, %v370
  %v413 = vpack.c.b16 %v373, %v372
  %v414 = vpack.c.b16 %v375, %v374
  %v415 = vpack.c.b16 %v377, %v376
  %v416 = vpack.c.b16 %v379, %v378
  %v417 = vpack.c.b16 %v381, %v380
  %v418 = vpack.c.b16 %v383, %v382
  %v419 = vpack.c.b16 %v385, %v384
  %v420 = vpack.c.b16 %v387, %v386
  %v421 = vpack.c.b16 %v389, %v388
  %v422 = vpack.c.b16 %v391, %v390
  %v423 = vpack.c.b16 %v393, %v392
  %v424 = vpack.c.b16 %v395, %v394
  %v425 = vpack.c.b16 %v397, %v396
  %v426 = vpack.c.b16 %v399, %v398
  %vm454 = vcmask 392192
  %v456 = vsel %vm454, %v239, 0
  %v459 = vsel %vm454, %v243, 0
  %v462 = vsel %vm454, %v247, 0
  %v465 = vsel %vm454, %v251, 0
  %v468 = vsel %vm454, %v255, 0
  %v471 = vsel %vm454, %v259, 0
  %v474 = vsel %vm454, %v263, 0
  %v477 = vsel %vm454, %v267, 0
  %479 = vmatprep.subr.bf16.mxu0 0
  %480 = vmatpush1.bf16.msra.mxu0 %v407
  %481 = vmatprep.subr.bf16.mxu0 0
  %482 = vmatpush1.bf16.msra.mxu0 %v406
  %483 = vmatprep.subr.bf16.mxu0 0
  %484 = vmatpush1.bf16.msra.mxu0 %v405
  %485 = vmatprep.subr.bf16.mxu0 0
  %486 = vmatpush1.bf16.msra.mxu0 %v404
  %487 = vmatprep.subr.bf16.mxu0 0
  %488 = vmatpush1.bf16.msra.mxu0 %v403
  %489 = vmatprep.subr.bf16.mxu0 0
  %490 = vmatpush1.bf16.msra.mxu0 %v402
  %491 = vmatprep.subr.bf16.mxu0 0
  %492 = vmatpush1.bf16.msra.mxu0 %v401
  %493 = vmatprep.subr.bf16.mxu0 0
  %494 = vmatpush1.bf16.msra.mxu0 %v400
  %495 = vmatprep.subr.bf16.mxu0 0
  %496 = vmatpush2.bf16.msra.mxu0 %v415
  %497 = vmatprep.subr.bf16.mxu0 0
  %498 = vmatpush2.bf16.msra.mxu0 %v414
  %499 = vmatprep.subr.bf16.mxu0 0
  %500 = vmatpush2.bf16.msra.mxu0 %v413
  %501 = vmatprep.subr.bf16.mxu0 0
  %502 = vmatpush2.bf16.msra.mxu0 %v412
  %503 = vmatprep.subr.bf16.mxu0 0
  %504 = vmatpush2.bf16.msra.mxu0 %v411
  %505 = vmatprep.subr.bf16.mxu0 0
  %506 = vmatpush2.bf16.msra.mxu0 %v410
  %507 = vmatprep.subr.bf16.mxu0 0
  %508 = vmatpush2.bf16.msra.mxu0 %v409
  %509 = vmatprep.subr.bf16.mxu0 0
  %510 = vmatpush2.bf16.msra.mxu0 %v408
  %511 = vmatprep.mubr.bf16.mxu0 %v237
  %512 = vmatmul.mubr.bf16.gmra.mxu0 %v236
  %v513 = vpop.f32.mrf.mxu0
  %v514 = vadd.f32 0.0, %v513
  %v515 = vpop.f32.mrf.mxu0
  %v516 = vpop.f32.mrf.mxu0
  %v517 = vadd.f32 0.0, %v516
  %v518 = vpop.f32.mrf.mxu0
  %519 = vmatprep.mubr.bf16.mxu0 %v241
  %520 = vmatmul.mubr.bf16.gmra.mxu0 %v240
  %v521 = vpop.f32.mrf.mxu0
  %v522 = vadd.f32 0.0, %v521
  %v523 = vpop.f32.mrf.mxu0
  %v524 = vpop.f32.mrf.mxu0
  %v525 = vadd.f32 0.0, %v524
  %v526 = vpop.f32.mrf.mxu0
  %527 = vmatprep.mubr.bf16.mxu0 %v245
  %528 = vmatmul.mubr.bf16.gmra.mxu0 %v244
  %v529 = vpop.f32.mrf.mxu0
  %v530 = vadd.f32 0.0, %v529
  %v531 = vpop.f32.mrf.mxu0
  %v532 = vpop.f32.mrf.mxu0
  %v533 = vadd.f32 0.0, %v532
  %v534 = vpop.f32.mrf.mxu0
  %535 = vmatprep.mubr.bf16.mxu0 %v249
  %536 = vmatmul.mubr.bf16.gmra.mxu0 %v248
  %v537 = vpop.f32.mrf.mxu0
  %v538 = vadd.f32 0.0, %v537
  %v539 = vpop.f32.mrf.mxu0
  %v540 = vpop.f32.mrf.mxu0
  %v541 = vadd.f32 0.0, %v540
  %v542 = vpop.f32.mrf.mxu0
  %543 = vmatprep.mubr.bf16.mxu0 %v253
  %544 = vmatmul.mubr.bf16.gmra.mxu0 %v252
  %v545 = vpop.f32.mrf.mxu0
  %v546 = vadd.f32 0.0, %v545
  %v547 = vpop.f32.mrf.mxu0
  %v548 = vpop.f32.mrf.mxu0
  %v549 = vadd.f32 0.0, %v548
  %v550 = vpop.f32.mrf.mxu0
  %551 = vmatprep.mubr.bf16.mxu0 %v257
  %552 = vmatmul.mubr.bf16.gmra.mxu0 %v256
  %v553 = vpop.f32.mrf.mxu0
  %v554 = vadd.f32 0.0, %v553
  %v555 = vpop.f32.mrf.mxu0
  %v556 = vpop.f32.mrf.mxu0
  %v557 = vadd.f32 0.0, %v556
  %v558 = vpop.f32.mrf.mxu0
  %559 = vmatprep.mubr.bf16.mxu0 %v261
  %560 = vmatmul.mubr.bf16.gmra.mxu0 %v260
  %v561 = vpop.f32.mrf.mxu0
  %v562 = vadd.f32 0.0, %v561
  %v563 = vpop.f32.mrf.mxu0
  %v564 = vpop.f32.mrf.mxu0
  %v565 = vadd.f32 0.0, %v564
  %v566 = vpop.f32.mrf.mxu0
  %567 = vmatprep.mubr.bf16.mxu0 %v265
  %568 = vmatmul.mubr.bf16.gmra.mxu0 %v264
  %v569 = vpop.f32.mrf.mxu0
  %v570 = vadd.f32 0.0, %v569
  %v571 = vpop.f32.mrf.mxu0
  %v572 = vpop.f32.mrf.mxu0
  %v573 = vadd.f32 0.0, %v572
  %v574 = vpop.f32.mrf.mxu0
  %575 = vdwg.mxu0
  %576 = vmatprep.subr.bf16.mxu0 0
  %577 = vmatpush1.bf16.msra.mxu0 %v423
  %578 = vmatprep.subr.bf16.mxu0 0
  %579 = vmatpush1.bf16.msra.mxu0 %v422
  %580 = vmatprep.subr.bf16.mxu0 0
  %581 = vmatpush1.bf16.msra.mxu0 %v421
  %582 = vmatprep.subr.bf16.mxu0 0
  %583 = vmatpush1.bf16.msra.mxu0 %v420
  %584 = vmatprep.subr.bf16.mxu0 0
  %585 = vmatpush1.bf16.msra.mxu0 %v419
  %586 = vmatprep.subr.bf16.mxu0 0
  %587 = vmatpush1.bf16.msra.mxu0 %v418
  %588 = vmatprep.subr.bf16.mxu0 0
  %589 = vmatpush1.bf16.msra.mxu0 %v417
  %590 = vmatprep.subr.bf16.mxu0 0
  %591 = vmatpush1.bf16.msra.mxu0 %v416
  %592 = vmatprep.subr.bf16.mxu0 0
  %593 = vmatpush2.bf16.msra.mxu0 0
  %594 = vmatprep.subr.bf16.mxu0 0
  %595 = vmatpush2.bf16.msra.mxu0 0
  %596 = vmatprep.subr.bf16.mxu0 0
  %597 = vmatpush2.bf16.msra.mxu0 0
  %598 = vmatprep.subr.bf16.mxu0 0
  %599 = vmatpush2.bf16.msra.mxu0 0
  %600 = vmatprep.subr.bf16.mxu0 0
  %601 = vmatpush2.bf16.msra.mxu0 0
  %602 = vmatprep.subr.bf16.mxu0 0
  %603 = vmatpush2.bf16.msra.mxu0 %v426
  %604 = vmatprep.subr.bf16.mxu0 0
  %605 = vmatpush2.bf16.msra.mxu0 %v425
  %606 = vmatprep.subr.bf16.mxu0 0
  %607 = vmatpush2.bf16.msra.mxu0 %v424
  %608 = vmatprep.mubr.bf16.mxu0 %v456
  %609 = vmatmul.mubr.bf16.gmra.mxu0 %v238
  %v610 = vpop.f32.mrf.mxu0
  %v611 = vadd.f32 %v514, %v610
  %v612 = vpop.f32.mrf.mxu0
  %v613 = vpop.f32.mrf.mxu0
  %v614 = vadd.f32 %v517, %v613
  %v615 = vpop.f32.mrf.mxu0
  %616 = vmatprep.mubr.bf16.mxu0 %v459
  %617 = vmatmul.mubr.bf16.gmra.mxu0 %v242
  %v618 = vpop.f32.mrf.mxu0
  %v619 = vadd.f32 %v522, %v618
  %v620 = vpop.f32.mrf.mxu0
  %v621 = vpop.f32.mrf.mxu0
  %v622 = vadd.f32 %v525, %v621
  %v623 = vpop.f32.mrf.mxu0
  %624 = vmatprep.mubr.bf16.mxu0 %v462
  %625 = vmatmul.mubr.bf16.gmra.mxu0 %v246
  %v626 = vpop.f32.mrf.mxu0
  %v627 = vadd.f32 %v530, %v626
  %v628 = vpop.f32.mrf.mxu0
  %v629 = vpop.f32.mrf.mxu0
  %v630 = vadd.f32 %v533, %v629
  %v631 = vpop.f32.mrf.mxu0
  %632 = vmatprep.mubr.bf16.mxu0 %v465
  %633 = vmatmul.mubr.bf16.gmra.mxu0 %v250
  %v634 = vpop.f32.mrf.mxu0
  %v635 = vadd.f32 %v538, %v634
  %v636 = vpop.f32.mrf.mxu0
  %v637 = vpop.f32.mrf.mxu0
  %v638 = vadd.f32 %v541, %v637
  %v639 = vpop.f32.mrf.mxu0
  %640 = vmatprep.mubr.bf16.mxu0 %v468
  %641 = vmatmul.mubr.bf16.gmra.mxu0 %v254
  %v642 = vpop.f32.mrf.mxu0
  %v643 = vadd.f32 %v546, %v642
  %v644 = vpop.f32.mrf.mxu0
  %v645 = vpop.f32.mrf.mxu0
  %v646 = vadd.f32 %v549, %v645
  %v647 = vpop.f32.mrf.mxu0
  %648 = vmatprep.mubr.bf16.mxu0 %v471
  %649 = vmatmul.mubr.bf16.gmra.mxu0 %v258
  %v650 = vpop.f32.mrf.mxu0
  %v651 = vadd.f32 %v554, %v650
  %v652 = vpop.f32.mrf.mxu0
  %v653 = vpop.f32.mrf.mxu0
  %v654 = vadd.f32 %v557, %v653
  %v655 = vpop.f32.mrf.mxu0
  %656 = vmatprep.mubr.bf16.mxu0 %v474
  %657 = vmatmul.mubr.bf16.gmra.mxu0 %v262
  %v658 = vpop.f32.mrf.mxu0
  %v659 = vadd.f32 %v562, %v658
  %v660 = vpop.f32.mrf.mxu0
  %v661 = vpop.f32.mrf.mxu0
  %v662 = vadd.f32 %v565, %v661
  %v663 = vpop.f32.mrf.mxu0
  %664 = vmatprep.mubr.bf16.mxu0 %v477
  %665 = vmatmul.mubr.bf16.gmra.mxu0 %v266
  %v666 = vpop.f32.mrf.mxu0
  %v667 = vadd.f32 %v570, %v666
  %v668 = vpop.f32.mrf.mxu0
  %v669 = vpop.f32.mrf.mxu0
  %v670 = vadd.f32 %v573, %v669
  %v671 = vpop.f32.mrf.mxu0
  %672 = vdwg.mxu0
  %v673 = vadd.f32 %v38, %v611
  %v674 = vadd.f32 %v39, %v614
  %v675 = vadd.f32 %v40, %v619
  %v676 = vadd.f32 %v41, %v622
  %v677 = vadd.f32 %v42, %v627
  %v678 = vadd.f32 %v43, %v630
  %v679 = vadd.f32 %v44, %v635
  %v680 = vadd.f32 %v45, %v638
  %v681 = vadd.f32 %v46, %v643
  %v682 = vadd.f32 %v47, %v646
  %v683 = vadd.f32 %v48, %v651
  %v684 = vadd.f32 %v49, %v654
  %v685 = vadd.f32 %v50, %v659
  %v686 = vadd.f32 %v51, %v662
  %v687 = vadd.f32 %v52, %v667
  %v688 = vadd.f32 %v53, %v670
  %vm689 = vcmask 130048
  %690 = vst.msk [vmem:[#allocation2] sm:$0xff] %vm689, %v673
  %691 = vst.msk [vmem:[#allocation2 + $0x8] sm:$0xff] %vm689, %v674
  %692 = vst.msk [vmem:[#allocation2 + $0x10] sm:$0xff] %vm689, %v675
  %693 = vst.msk [vmem:[#allocation2 + $0x18] sm:$0xff] %vm689, %v676
  %694 = vst.msk [vmem:[#allocation2 + $0x20] sm:$0xff] %vm689, %v677
  %695 = vst.msk [vmem:[#allocation2 + $0x28] sm:$0xff] %vm689, %v678
  %696 = vst.msk [vmem:[#allocation2 + $0x30] sm:$0xff] %vm689, %v679
  %697 = vst.msk [vmem:[#allocation2 + $0x38] sm:$0xff] %vm689, %v680
  %698 = vst.msk [vmem:[#allocation2 + $0x40] sm:$0xff] %vm689, %v681
  %699 = vst.msk [vmem:[#allocation2 + $0x48] sm:$0xff] %vm689, %v682
  %700 = vst.msk [vmem:[#allocation2 + $0x50] sm:$0xff] %vm689, %v683
  %701 = vst.msk [vmem:[#allocation2 + $0x58] sm:$0xff] %vm689, %v684
  %702 = vst.msk [vmem:[#allocation2 + $0x60] sm:$0xff] %vm689, %v685
  %703 = vst.msk [vmem:[#allocation2 + $0x68] sm:$0xff] %vm689, %v686
  %704 = vst.msk [vmem:[#allocation2 + $0x70] sm:$0xff] %vm689, %v687
  %705 = vst.msk [vmem:[#allocation2 + $0x78] sm:$0xff] %vm689, %v688
  // Predicated region
  $region18: #{self_transformer_layer.16} parent=0 // pred_check
    %p706 = pneg %p17
  $region19: #{self_transformer_layer.16} parent=0 // pred_check_branch
    %708 = sbr.rel (%p706) target = $region21
  $region20: #{self_transformer_layer.16} parent=0 // pred_region
    %v709 = vld [vmem:[#allocation2] sm:$0xff]
    %v710 = vld [vmem:[#allocation2 + $0x8] sm:$0xff]
    %v711 = vld [vmem:[#allocation2 + $0x10] sm:$0xff]
    %v712 = vld [vmem:[#allocation2 + $0x18] sm:$0xff]
    %v713 = vld [vmem:[#allocation2 + $0x20] sm:$0xff]
    %v714 = vld [vmem:[#allocation2 + $0x28] sm:$0xff]
    %v715 = vld [vmem:[#allocation2 + $0x30] sm:$0xff]
    %v716 = vld [vmem:[#allocation2 + $0x38] sm:$0xff]
    %v717 = vld [vmem:[#allocation2 + $0x40] sm:$0xff]
    %v718 = vld [vmem:[#allocation2 + $0x48] sm:$0xff]
    %v719 = vld [vmem:[#allocation2 + $0x50] sm:$0xff]
    %v720 = vld [vmem:[#allocation2 + $0x58] sm:$0xff]
    %v721 = vld [vmem:[#allocation2 + $0x60] sm:$0xff]
    %v722 = vld [vmem:[#allocation2 + $0x68] sm:$0xff]
    %v723 = vld [vmem:[#allocation2 + $0x70] sm:$0xff]
    %v724 = vld [vmem:[#allocation2 + $0x78] sm:$0xff]
    %v725 = vld [vmem:[%s2] sm:$0xff]
    %v726 = vld [vmem:[%s2 + $0x8] sm:$0xff]
    %v727 = vld [vmem:[%s2 + $0x10] sm:$0xff]
    %v728 = vld [vmem:[%s2 + $0x18] sm:$0xff]
    %v729 = vld [vmem:[%s2 + $0x20] sm:$0xff]
    %v730 = vld [vmem:[%s2 + $0x28] sm:$0xff]
    %v731 = vld [vmem:[%s2 + $0x30] sm:$0xff]
    %v732 = vld [vmem:[%s2 + $0x38] sm:$0xff]
    %v733 = vld [vmem:[%s2 + $0x40] sm:$0xff]
    %v734 = vld [vmem:[%s2 + $0x48] sm:$0xff]
    %v735 = vld [vmem:[%s2 + $0x50] sm:$0xff]
    %v736 = vld [vmem:[%s2 + $0x58] sm:$0xff]
    %v737 = vld [vmem:[%s2 + $0x60] sm:$0xff]
    %v738 = vld [vmem:[%s2 + $0x68] sm:$0xff]
    %v739 = vld [vmem:[%s2 + $0x70] sm:$0xff]
    %v740 = vld [vmem:[%s2 + $0x78] sm:$0xff]
    %v741 = vadd.f32 %v709, %v725
    %v742 = vadd.f32 %v710, %v726
    %v743 = vadd.f32 %v711, %v727
    %v744 = vadd.f32 %v712, %v728
    %v745 = vadd.f32 %v713, %v729
    %v746 = vadd.f32 %v714, %v730
    %v747 = vadd.f32 %v715, %v731
    %v748 = vadd.f32 %v716, %v732
    %v749 = vadd.f32 %v717, %v733
    %v750 = vadd.f32 %v718, %v734
    %v751 = vadd.f32 %v719, %v735
    %v752 = vadd.f32 %v720, %v736
    %v753 = vadd.f32 %v721, %v737
    %v754 = vadd.f32 %v722, %v738
    %v755 = vadd.f32 %v723, %v739
    %v756 = vadd.f32 %v724, %v740
    %757 = vst.msk [vmem:[%s3] sm:$0xff] %vm689, %v741
    %758 = vst.msk [vmem:[%s3 + $0x8] sm:$0xff] %vm689, %v742
    %759 = vst.msk [vmem:[%s3 + $0x10] sm:$0xff] %vm689, %v743
    %760 = vst.msk [vmem:[%s3 + $0x18] sm:$0xff] %vm689, %v744
    %761 = vst.msk [vmem:[%s3 + $0x20] sm:$0xff] %vm689, %v745
    %762 = vst.msk [vmem:[%s3 + $0x28] sm:$0xff] %vm689, %v746
    %763 = vst.msk [vmem:[%s3 + $0x30] sm:$0xff] %vm689, %v747
    %764 = vst.msk [vmem:[%s3 + $0x38] sm:$0xff] %vm689, %v748
    %765 = vst.msk [vmem:[%s3 + $0x40] sm:$0xff] %vm689, %v749
    %766 = vst.msk [vmem:[%s3 + $0x48] sm:$0xff] %vm689, %v750
    %767 = vst.msk [vmem:[%s3 + $0x50] sm:$0xff] %vm689, %v751
    %768 = vst.msk [vmem:[%s3 + $0x58] sm:$0xff] %vm689, %v752
    %769 = vst.msk [vmem:[%s3 + $0x60] sm:$0xff] %vm689, %v753
    %770 = vst.msk [vmem:[%s3 + $0x68] sm:$0xff] %vm689, %v754
    %771 = vst.msk [vmem:[%s3 + $0x70] sm:$0xff] %vm689, %v755
    %772 = vst.msk [vmem:[%s3 + $0x78] sm:$0xff] %vm689, %v756
    %v773 = vsel %vm689, %v741, 0.0
    %v774 = vsel %vm689, %v742, 0.0
    %v775 = vadd.f32 %v773, %v774
    %v776 = vsel %vm689, %v743, 0.0
    %v777 = vadd.f32 %v775, %v776
    %v778 = vsel %vm689, %v744, 0.0
    %v779 = vadd.f32 %v777, %v778
    %v780 = vsel %vm689, %v745, 0.0
    %v781 = vadd.f32 %v779, %v780
    %v782 = vsel %vm689, %v746, 0.0
    %v783 = vadd.f32 %v781, %v782
    %v784 = vsel %vm689, %v747, 0.0
    %v785 = vadd.f32 %v783, %v784
    %v786 = vsel %vm689, %v748, 0.0
    %v787 = vadd.f32 %v785, %v786
    %v788 = vsel %vm689, %v749, 0.0
    %v789 = vadd.f32 %v787, %v788
    %v790 = vsel %vm689, %v750, 0.0
    %v791 = vadd.f32 %v789, %v790
    %v792 = vsel %vm689, %v751, 0.0
    %v793 = vadd.f32 %v791, %v792
    %v794 = vsel %vm689, %v752, 0.0
    %v795 = vadd.f32 %v793, %v794
    %v796 = vsel %vm689, %v753, 0.0
    %v797 = vadd.f32 %v795, %v796
    %v798 = vsel %vm689, %v754, 0.0
    %v799 = vadd.f32 %v797, %v798
    %v800 = vsel %vm689, %v755, 0.0
    %v801 = vadd.f32 %v799, %v800
    %v802 = vsel %vm689, %v756, 0.0
    %v803 = vadd.f32 %v801, %v802
    %v804 = vrot.slane %v803, 4
    %v805 = vadd.f32 %v803, %v804
    %v806 = vrot.slane %v805, 2
    %v807 = vadd.f32 %v805, %v806
    %v808 = vrot.slane %v807, 1
    %v809 = vadd.f32 %v807, %v808
    %v810 = vmul.f32 %v741, %v741
    %v811 = vmul.f32 %v742, %v742
    %v812 = vmul.f32 %v743, %v743
    %v813 = vmul.f32 %v744, %v744
    %v814 = vmul.f32 %v745, %v745
    %v815 = vmul.f32 %v746, %v746
    %v816 = vmul.f32 %v747, %v747
    %v817 = vmul.f32 %v748, %v748
    %v818 = vmul.f32 %v749, %v749
    %v819 = vmul.f32 %v750, %v750
    %v820 = vmul.f32 %v751, %v751
    %v821 = vmul.f32 %v752, %v752
    %v822 = vmul.f32 %v753, %v753
    %v823 = vmul.f32 %v754, %v754
    %v824 = vmul.f32 %v755, %v755
    %v825 = vmul.f32 %v756, %v756
    %v826 = vsel %vm689, %v810, 0.0
    %v827 = vsel %vm689, %v811, 0.0
    %v828 = vadd.f32 %v826, %v827
    %v829 = vsel %vm689, %v812, 0.0
    %v830 = vadd.f32 %v828, %v829
    %v831 = vsel %vm689, %v813, 0.0
    %v832 = vadd.f32 %v830, %v831
    %v833 = vsel %vm689, %v814, 0.0
    %v834 = vadd.f32 %v832, %v833
    %v835 = vsel %vm689, %v815, 0.0
    %v836 = vadd.f32 %v834, %v835
    %v837 = vsel %vm689, %v816, 0.0
    %v838 = vadd.f32 %v836, %v837
    %v839 = vsel %vm689, %v817, 0.0
    %v840 = vadd.f32 %v838, %v839
    %v841 = vsel %vm689, %v818, 0.0
    %v842 = vadd.f32 %v840, %v841
    %v843 = vsel %vm689, %v819, 0.0
    %v844 = vadd.f32 %v842, %v843
    %v845 = vsel %vm689, %v820, 0.0
    %v846 = vadd.f32 %v844, %v845
    %v847 = vsel %vm689, %v821, 0.0
    %v848 = vadd.f32 %v846, %v847
    %v849 = vsel %vm689, %v822, 0.0
    %v850 = vadd.f32 %v848, %v849
    %v851 = vsel %vm689, %v823, 0.0
    %v852 = vadd.f32 %v850, %v851
    %v853 = vsel %vm689, %v824, 0.0
    %v854 = vadd.f32 %v852, %v853
    %v855 = vsel %vm689, %v825, 0.0
    %v856 = vadd.f32 %v854, %v855
    %v857 = vrot.slane %v856, 4
    %v858 = vadd.f32 %v856, %v857
    %v859 = vrot.slane %v858, 2
    %v860 = vadd.f32 %v858, %v859
    %v861 = vrot.slane %v860, 1
    %v862 = vadd.f32 %v860, %v861
    %vm863 = vcmask 1040384
    %v864 = vsel %vm863, %v809, %v862
    %vm865 = vcmask 123904
    %866 = vst.msk [vmem:[%s4] sm:$0x3] %vm865, %v864
  $region21: #{self_transformer_layer.16} parent=0 // pred_fallthru
    _
  // Predicated region
  $region22: #{self_transformer_layer.16} parent=0 // pred_check
    _
  $region23: #{self_transformer_layer.16} parent=0 // pred_check_branch
    %868 = sbr.rel (0) target = $region25
  $region24: #{self_transformer_layer.16} parent=0 // pred_region
    _
  $region25: #{self_transformer_layer.16} parent=0 // pred_fallthru
    _
  // Predicated region
  $region26: #{self_transformer_layer.16} parent=0 // pred_check
    _
  $region27: #{self_transformer_layer.16} parent=0 // pred_check_branch
    %870 = sbr.rel (0) target = $region29
  $region28: #{self_transformer_layer.16} parent=0 // pred_region
    _
  $region29: #{self_transformer_layer.16} parent=0 // pred_fallthru
    _
  // Predicated region
  $region30: #{self_transformer_layer.16} parent=0 // pred_check
    _
  $region31: #{self_transformer_layer.16} parent=0 // pred_check_branch
    %872 = sbr.rel (0) target = $region33
  $region32: #{self_transformer_layer.16} parent=0 // pred_region
    _
  $region33: #{self_transformer_layer.16} parent=0 // pred_fallthru
    _
  // Predicated region
  $region34: #{self_transformer_layer.16} parent=0 // pred_check
    _
  $region35: #{self_transformer_layer.16} parent=0 // pred_check_branch
    %874 = sbr.rel (0) target = $region37
  $region36: #{self_transformer_layer.16} parent=0 // pred_region
    _
  $region37: #{self_transformer_layer.16} parent=0 // pred_fallthru
    _

</llo_original>
